<compile_context>
chip_gen: v7x
topology: tpu7x:2x2x1
jax: 0.10.0
libtpu: 0.0.40
codegen_flags: <defaults>
</compile_context>

<pallas_src>
import math

import jax
import jax.numpy as jnp
from jax.experimental import pallas as pl
from jax.experimental.pallas import tpu as pltpu

# ---- hyperparameters (derived exactly as in the PyTorch source) ----
MAX_SEQ_LEN = 100
EXPAND_FACTOR = 2
MODEL_SCALE = 1.0
NUM_BLOCKS = round(8 * math.log2(1.0 + MODEL_SCALE))                    # 8
QK_DIM_DIV = 8
_to_nearest_64 = lambda x: round(x / 64) * 64
RESIDUAL_DEPTH = _to_nearest_64(384 * math.log2(1.0 + MODEL_SCALE))     # 384
N_TOKS = 100
QK_DIM = RESIDUAL_DEPTH // QK_DIM_DIV                                   # 48
EXPAND_DIM = RESIDUAL_DEPTH * EXPAND_FACTOR                             # 768
LN_EPS = 1e-5                                                           # torch LayerNorm default

# ---- TPU-friendly zero-padded sizes (padding never changes the math) ----
QK_PAD = 128                                    # q/k width 48 -> 128 (zero weight cols)
N_TOKS_PAD = 128                                # vocab 100 -> 128 (lane-dense rows/cols)
FUSED_EXPAND_DIM = 2 * EXPAND_DIM + 2 * QK_PAD  # 1792 = [lin | pre | q_pad | k_pad]
NEG_INF = -1e30


# ----------------------------- in-kernel helpers -----------------------------
def _erf_approx(x):
    # Abramowitz & Stegun 7.1.26, abs err ~1.5e-7.
    # TODO(synk): PyTorch F.gelu uses exact erf; polynomial approx used since
    # lax.erf is not guaranteed to lower in Mosaic.
    a1, a2, a3, a4, a5 = 0.254829592, -0.284496736, 1.421413741, -1.453152027, 1.061405429
    p = 0.3275911
    sgn = jnp.where(x < 0.0, -1.0, 1.0)
    ax = jnp.abs(x)
    t = 1.0 / (1.0 + p * ax)
    poly = ((((a5 * t + a4) * t + a3) * t + a2) * t + a1) * t
    return sgn * (1.0 - poly * jnp.exp(-ax * ax))


def _gelu_erf(x):
    return 0.5 * x * (1.0 + _erf_approx(x * 0.7071067811865476))


def _layernorm(x, gamma):
    # LayerNorm(bias=False): (x - mean) / sqrt(var + eps) * gamma   (f32 math)
    mean = jnp.mean(x, axis=-1, keepdims=True)
    cent = x - mean
    var = jnp.mean(cent * cent, axis=-1, keepdims=True)
    return cent * jax.lax.rsqrt(var + LN_EPS) * gamma


# ------------------------------- block-grid kernel ---------------------------
def _latent_block_kernel(pos_sp_ref,                    # SMEM (NUM_BLOCKS,) f32: softplus(mult)
                         ids_ref, emb_ref, gamma_ref, blk_gamma_ref,
                         pos_allowed_ref, neg_mask_ref,
                         w_expand_ref, w_pl_ref, w_pa_ref, w_out_ref,
                         o_ref, x_scratch):
    b = pl.program_id(0)
    BT, D = x_scratch.shape
    scale = 1.0 / math.sqrt(QK_DIM)            # SDPA default: 1/sqrt(true qk dim)

    # ---- first grid step only: embedding gather + post-embedding LayerNorm ----
    @pl.when(b == 0)
    def _():
        ids = ids_ref[...]                                                    # (BT, 1) i32
        tok_iota = jax.lax.broadcasted_iota(jnp.int32, (BT, N_TOKS_PAD), 1)
        onehot = jnp.where(tok_iota == ids, 1.0, 0.0).astype(jnp.bfloat16)    # exact 0/1
        x0 = jnp.dot(onehot, emb_ref[...], preferred_element_type=jnp.float32)
        x_scratch[...] = _layernorm(x0, gamma_ref[...])

    x = x_scratch[...]                                                        # residual (f32)

    # ---- block b: LayerNorm + fused expand matmul ----
    g = blk_gamma_ref[pl.ds(b, 1), :]                                         # (1, D)
    xn = _layernorm(x, g).astype(jnp.bfloat16)

    # cols = [linear(768) | pre_gelu(768) | q(48 pad 128) | k(48 pad 128)]
    fused = jnp.dot(xn, w_expand_ref[0], preferred_element_type=jnp.float32)  # (BT, 1792)
    lin = fused[:, :EXPAND_DIM]
    pre = fused[:, EXPAND_DIM:2 * EXPAND_DIM]
    q = fused[:, 2 * EXPAND_DIM:2 * EXPAND_DIM + QK_PAD]                      # (BT, 128)
    k = fused[:, 2 * EXPAND_DIM + QK_PAD:]                                    # (BT, 128)

    geglu = lin * _gelu_erf(pre)                                              # (BT, 768)
    geglu_local = geglu[:, :EXPAND_DIM - D].astype(jnp.bfloat16)              # (BT, 384)
    v = geglu[:, EXPAND_DIM - D:]                                             # (BT, 384) f32

    # ---- attention: one flat (BT, BT) matmul, block-diagonal causal mask ----
    # TODO(synk): valid while BT stays small (<= ~256); for larger batches
    # revert to per-batch / flash-style tiling with a 'parallel' row-tile axis
    # (256 rows v6e/v7x, 128 rows v5e) to amortize the weight stream and, on
    # v7x, engage the second TensorCore.
    sp = pos_sp_ref[b]                                                        # scalar f32
    bias = sp * pos_allowed_ref[...] + neg_mask_ref[...]                      # (BT, BT)

    s = jax.lax.dot_general(q, k, (((1,), (1,)), ((), ())),
                            preferred_element_type=jnp.float32) * scale
    s = s + bias
    m = jnp.max(s, axis=-1, keepdims=True)
    p = jnp.exp(s - m)
    p = p * pl.reciprocal(jnp.sum(p, axis=-1, keepdims=True), approx=True)
    attn = jnp.dot(p, v, preferred_element_type=jnp.float32).astype(jnp.bfloat16)

    # ---- projection: two split dots (no concat), residual add ----
    out = (jnp.dot(geglu_local, w_pl_ref[0], preferred_element_type=jnp.float32)
           + jnp.dot(attn, w_pa_ref[0], preferred_element_type=jnp.float32))
    x_new = x + out
    x_scratch[...] = x_new

    # ---- last grid step only: shared LayerNorm + padded output projection ----
    @pl.when(b == NUM_BLOCKS - 1)
    def _():
        xh = _layernorm(x_new, gamma_ref[...]).astype(jnp.bfloat16)
        o_ref[...] = jnp.dot(xh, w_out_ref[...], preferred_element_type=jnp.float32)


# ------------------------------ pallas wrapper --------------------------------
def fused_forward_pallas(params, ids):
    B, T = ids.shape
    BT = B * T
    D = RESIDUAL_DEPTH
    ids2 = ids.reshape(BT, 1).astype(jnp.int32)

    # Stable softplus of the learned positional multiplier, one scalar per block
    # (removes all per-(T,T) transcendentals from the kernel).
    pos_sp = jax.nn.softplus(params['pos_mult']).astype(jnp.float32)          # (8,)

    # Flat-batch causal / positional mask pieces (block independent, tiny).
    # TODO(synk): `position_bias_base` / `negative_infinity_matrix_base` are
    # undefined globals in the source; reconstructed per upstream hlb-gpt:
    # allowed (j <= i, same sequence) positions get softplus(mult) * (j - i),
    # everything else gets -inf.
    tpos = jnp.arange(BT, dtype=jnp.int32) % T
    bidx = jnp.arange(BT, dtype=jnp.int32) // T
    allowed = (bidx[:, None] == bidx[None, :]) & (tpos[None, :] <= tpos[:, None])
    pos_allowed = jnp.where(allowed, (tpos[None, :] - tpos[:, None]).astype(jnp.float32), 0.0)
    neg_mask = jnp.where(allowed, jnp.float32(0.0), jnp.float32(NEG_INF))

    const2 = lambda b: (0, 0)
    blk3 = lambda b: (b, 0, 0)

    logits_pad = pl.pallas_call(
        _latent_block_kernel,
        out_shape=jax.ShapeDtypeStruct((BT, N_TOKS_PAD), jnp.float32),
        grid=(NUM_BLOCKS,),
        in_specs=[
            pl.BlockSpec(memory_space=pltpu.MemorySpace.SMEM),                 # pos_sp
            pl.BlockSpec((BT, 1), const2),                                     # ids
            pl.BlockSpec((N_TOKS_PAD, D), const2),                             # emb (bf16)
            pl.BlockSpec((1, D), const2),                                      # shared norm gamma
            pl.BlockSpec((NUM_BLOCKS, D), const2),                             # per-block gammas
            pl.BlockSpec((BT, BT), const2),                                    # pos_allowed
            pl.BlockSpec((BT, BT), const2),                                    # neg_mask
            pl.BlockSpec((1, D, FUSED_EXPAND_DIM), blk3),                      # fused expand (b)
            pl.BlockSpec((1, D, D), blk3),                                     # project, local half
            pl.BlockSpec((1, D, D), blk3),                                     # project, attn half
            pl.BlockSpec((D, N_TOKS_PAD), const2),                             # out proj
        ],
        out_specs=pl.BlockSpec((BT, N_TOKS_PAD), const2),
        scratch_shapes=[pltpu.VMEM((BT, D), jnp.float32)],                     # residual carry
        compiler_params=pltpu.CompilerParams(dimension_semantics=("arbitrary",)),
    )(pos_sp, ids2, params['emb_pad'], params['norm_gamma'], params['blk_gamma'],
      pos_allowed, neg_mask, params['w_expand'], params['w_proj_local'],
      params['w_proj_attn'], params['w_out_pad'])

    return logits_pad[:, :N_TOKS].reshape(B, T, N_TOKS)


def model_forward(params, ids):
    # TODO(synk): this forward is HBM-bound (~15 MiB of weights vs ~0.25 GFLOP
    # at BT=16); if called repeatedly, batch more sequences per pallas_call and
    # add a leading 'parallel' row-tile grid axis so the weight stream is
    # amortized (and sharded across both v7x TensorCores).
    return fused_forward_pallas(params, ids)


# ------------------------------ parameter setup -------------------------------
def init_params(key):
    """PyTorch-equivalent init, packed ONCE into kernel-ready (padded/transposed/
    bf16) layouts so the jitted forward does no weight reshaping at all."""
    k_emb, k_out, k_blocks = jax.random.split(key, 3)

    # nn.Embedding default init: N(0, 1); pad vocab rows 100 -> 128 with zeros.
    emb = jax.random.normal(k_emb, (N_TOKS, RESIDUAL_DEPTH), jnp.float32)
    emb_pad = (jnp.zeros((N_TOKS_PAD, RESIDUAL_DEPTH), jnp.float32)
               .at[:N_TOKS].set(emb)).astype(jnp.bfloat16)

    # nn.Linear(D, n_toks, bias=False) default (kaiming_uniform); stored transposed + padded.
    bound = 1.0 / math.sqrt(RESIDUAL_DEPTH)
    w_out = jax.random.uniform(k_out, (N_TOKS, RESIDUAL_DEPTH), jnp.float32, -bound, bound)
    w_out_pad = (jnp.zeros((RESIDUAL_DEPTH, N_TOKS_PAD), jnp.float32)
                 .at[:, :N_TOKS].set(w_out.T)).astype(jnp.bfloat16)

    expand_scale = 0.5 / math.sqrt(RESIDUAL_DEPTH) / EXPAND_FACTOR
    project_scale = 1.0 / math.sqrt(RESIDUAL_DEPTH) / EXPAND_FACTOR / NUM_BLOCKS

    w_expand_list, w_pl_list, w_pa_list, gammas, mults = [], [], [], [], []
    qk_pad_cols = jnp.zeros((RESIDUAL_DEPTH, QK_PAD - QK_DIM), jnp.float32)
    for i in range(NUM_BLOCKS):
        ke, kp = jax.random.split(jax.random.fold_in(k_blocks, i))
        expand = expand_scale * jax.random.normal(
            ke, (2 * QK_DIM + 2 * EXPAND_DIM, RESIDUAL_DEPTH), jnp.float32)
        project = project_scale * jax.random.normal(
            kp, (RESIDUAL_DEPTH, EXPAND_DIM), jnp.float32)

        et = expand.T                                   # (D, 1632): [q | k | lin | pre]
        wq = et[:, :QK_DIM]
        wk = et[:, QK_DIM:2 * QK_DIM]
        wlin = et[:, 2 * QK_DIM:2 * QK_DIM + EXPAND_DIM]
        wpre = et[:, 2 * QK_DIM + EXPAND_DIM:]
        # fused layout: [lin(768) | pre(768) | q(48)+0pad(80) | k(48)+0pad(80)] = 1792 cols
        w_fused = jnp.concatenate([wlin, wpre, wq, qk_pad_cols, wk, qk_pad_cols], axis=1)
        w_expand_list.append(w_fused)

        pt = project.T                                  # (768, 384)
        w_pl_list.append(pt[:EXPAND_DIM - RESIDUAL_DEPTH])   # rows hit by geglu_local
        w_pa_list.append(pt[EXPAND_DIM - RESIDUAL_DEPTH:])   # rows hit by attention
        gammas.append(jnp.ones((RESIDUAL_DEPTH,), jnp.float32))
        mults.append(jnp.float32(1.0))

    return {
        'emb_pad': emb_pad,                                            # (128, 384) bf16
        'norm_gamma': jnp.ones((1, RESIDUAL_DEPTH), jnp.float32),      # shared Model.norm
        'blk_gamma': jnp.stack(gammas),                                # (8, 384) f32
        'pos_mult': jnp.stack(mults),                                  # (8,) f32
        'w_expand': jnp.stack(w_expand_list).astype(jnp.bfloat16),     # (8, 384, 1792) bf16
        'w_proj_local': jnp.stack(w_pl_list).astype(jnp.bfloat16),     # (8, 384, 384) bf16
        'w_proj_attn': jnp.stack(w_pa_list).astype(jnp.bfloat16),      # (8, 384, 384) bf16
        'w_out_pad': w_out_pad,                                        # (384, 128) bf16
    }


# ----------------------------------- main --------------------------------------
if __name__ == "__main__":
    key = jax.random.PRNGKey(0)
    k_params, k_ids = jax.random.split(key)
    params = init_params(k_params)

    B, T = 2, 8
    ids = jax.random.randint(k_ids, (B, T), 0, N_TOKS, dtype=jnp.int32)

    logits = jax.jit(model_forward)(params, ids)
    logits = jax.block_until_ready(logits)

    assert logits.shape == (B, T, N_TOKS), logits.shape
    assert bool(jnp.all(jnp.isfinite(logits)))
    print("KERNEL_OK")
</pallas_src>

<mosaic_0001>
module attributes {stable_mosaic.version = 11 : i64} {
  func.func @_latent_block_kernel(%arg0: i32, %arg1: memref<8xf32, #tpu.memory_space<smem>>, %arg2: memref<16x1xi32, #tpu.memory_space<vmem>>, %arg3: memref<128x384xbf16, #tpu.memory_space<vmem>>, %arg4: memref<1x384xf32, #tpu.memory_space<vmem>>, %arg5: memref<8x384xf32, #tpu.memory_space<vmem>>, %arg6: memref<16x16xf32, #tpu.memory_space<vmem>>, %arg7: memref<16x16xf32, #tpu.memory_space<vmem>>, %arg8: memref<1x384x1792xbf16, #tpu.memory_space<vmem>>, %arg9: memref<1x384x384xbf16, #tpu.memory_space<vmem>>, %arg10: memref<1x384x384xbf16, #tpu.memory_space<vmem>>, %arg11: memref<384x128xbf16, #tpu.memory_space<vmem>>, %arg12: memref<16x128xf32, #tpu.memory_space<vmem>>, %arg13: memref<16x384xf32, #tpu.memory_space<vmem>>) attributes {dimension_semantics = [#tpu.dimension_semantics<arbitrary>], iteration_bounds = array<i64: 8>, scalar_prefetch = 0 : i64, scratch_operands = 1 : i64, tpu.core_type = #tpu.core_type<tc>, window_params = [{transform_indices = @transform_0, window_bounds = array<i64: 8>}, {pipeline_mode = #tpu.pipeline_mode<synchronous>, transform_indices = @transform_1, window_bounds = array<i64: 16, 1>}, {pipeline_mode = #tpu.pipeline_mode<synchronous>, transform_indices = @transform_2, window_bounds = array<i64: 128, 384>}, {pipeline_mode = #tpu.pipeline_mode<synchronous>, transform_indices = @transform_3, window_bounds = array<i64: 1, 384>}, {pipeline_mode = #tpu.pipeline_mode<synchronous>, transform_indices = @transform_4, window_bounds = array<i64: 8, 384>}, {pipeline_mode = #tpu.pipeline_mode<synchronous>, transform_indices = @transform_5, window_bounds = array<i64: 16, 16>}, {pipeline_mode = #tpu.pipeline_mode<synchronous>, transform_indices = @transform_6, window_bounds = array<i64: 16, 16>}, {transform_indices = @transform_7, window_bounds = array<i64: 1, 384, 1792>}, {transform_indices = @transform_8, window_bounds = array<i64: 1, 384, 384>}, {transform_indices = @transform_9, window_bounds = array<i64: 1, 384, 384>}, {pipeline_mode = #tpu.pipeline_mode<synchronous>, transform_indices = @transform_10, window_bounds = array<i64: 384, 128>}, {pipeline_mode = #tpu.pipeline_mode<synchronous>, transform_indices = @transform_11, window_bounds = array<i64: 16, 128>}]} {
    %c0_i32 = arith.constant 0 : i32
    %0 = arith.cmpi eq, %arg0, %c0_i32 : i32
    %1 = arith.extui %0 : i1 to i32
    %c0_i32_0 = arith.constant 0 : i32
    %2 = arith.cmpi ne, %1, %c0_i32_0 : i32
    scf.if %2 {
      %c0_47 = arith.constant 0 : index
      %c0_48 = arith.constant 0 : index
      %112 = vector.load %arg2[%c0_47, %c0_48] : memref<16x1xi32, #tpu.memory_space<vmem>>, vector<16x1xi32>
      %113 = tpu.iota {dimensions = array<i32: 1>} : vector<16x128xi32>
      %114 = vector.broadcast %112 : vector<16x1xi32> to vector<16x128xi32>
      %115 = arith.cmpi eq, %113, %114 : vector<16x128xi32>
      %cst_49 = arith.constant 1.000000e+00 : f32
      %cst_50 = arith.constant 0.000000e+00 : f32
      %116 = vector.broadcast %cst_49 : f32 to vector<16x128xf32>
      %117 = vector.broadcast %cst_50 : f32 to vector<16x128xf32>
      %118 = arith.select %115, %116, %117 : vector<16x128xi1>, vector<16x128xf32>
      %119 = arith.truncf %118 : vector<16x128xf32> to vector<16x128xbf16>
      %c0_51 = arith.constant 0 : index
      %c0_52 = arith.constant 0 : index
      %120 = vector.load %arg3[%c0_51, %c0_52] : memref<128x384xbf16, #tpu.memory_space<vmem>>, vector<128x384xbf16>
      %cst_53 = arith.constant dense<0.000000e+00> : vector<16x384xf32>
      %121 = tpu.matmul %119, %120, %cst_53 {dimension_numbers = #tpu.dot_dimension_numbers<[1], [0], [0], [1], [0, 0, 1, 1], [], []>} : vector<16x128xbf16>, vector<128x384xbf16>, vector<16x384xf32> -> vector<16x384xf32>
      %c0_54 = arith.constant 0 : index
      %c0_55 = arith.constant 0 : index
      %122 = vector.load %arg4[%c0_54, %c0_55] : memref<1x384xf32, #tpu.memory_space<vmem>>, vector<1x384xf32>
      %cst_56 = arith.constant dense<0.000000e+00> : vector<16xf32>
      %123 = vector.multi_reduction <add>, %121, %cst_56 [1] : vector<16x384xf32> to vector<16xf32>
      %124 = vector.shape_cast %123 : vector<16xf32> to vector<16x1xf32>
      %cst_57 = arith.constant 3.840000e+02 : f32
      %125 = vector.broadcast %cst_57 : f32 to vector<16x1xf32>
      %126 = arith.divf %124, %125 : vector<16x1xf32>
      %127 = vector.broadcast %126 : vector<16x1xf32> to vector<16x384xf32>
      %128 = arith.subf %121, %127 : vector<16x384xf32>
      %129 = arith.mulf %128, %128 : vector<16x384xf32>
      %cst_58 = arith.constant dense<0.000000e+00> : vector<16xf32>
      %130 = vector.multi_reduction <add>, %129, %cst_58 [1] : vector<16x384xf32> to vector<16xf32>
      %131 = vector.shape_cast %130 : vector<16xf32> to vector<16x1xf32>
      %cst_59 = arith.constant 3.840000e+02 : f32
      %132 = vector.broadcast %cst_59 : f32 to vector<16x1xf32>
      %133 = arith.divf %131, %132 : vector<16x1xf32>
      %cst_60 = arith.constant 9.99999974E-6 : f32
      %134 = vector.broadcast %cst_60 : f32 to vector<16x1xf32>
      %135 = arith.addf %133, %134 : vector<16x1xf32>
      %136 = math.rsqrt %135 : vector<16x1xf32>
      %137 = vector.broadcast %136 : vector<16x1xf32> to vector<16x384xf32>
      %138 = arith.mulf %128, %137 : vector<16x384xf32>
      %139 = vector.broadcast %122 : vector<1x384xf32> to vector<16x384xf32>
      %140 = arith.mulf %138, %139 : vector<16x384xf32>
      %c0_61 = arith.constant 0 : index
      %c0_62 = arith.constant 0 : index
      %141 = vector.load %arg13[%c0_61, %c0_62] : memref<16x384xf32, #tpu.memory_space<vmem>>, vector<16x384xf32>
      tpu.vector_store %arg13[%c0_61, %c0_62], %140 {strides = array<i32>} : memref<16x384xf32, #tpu.memory_space<vmem>>, vector<16x384xf32>,
    } else {
    }
    %c0 = arith.constant 0 : index
    %c0_1 = arith.constant 0 : index
    %3 = vector.load %arg13[%c0, %c0_1] : memref<16x384xf32, #tpu.memory_space<vmem>>, vector<16x384xf32>
    %4 = arith.index_cast %arg0 : i32 to index
    %c0_2 = arith.constant 0 : index
    %5 = vector.load %arg5[%4, %c0_2] : memref<8x384xf32, #tpu.memory_space<vmem>>, vector<1x384xf32>
    %cst = arith.constant dense<0.000000e+00> : vector<16xf32>
    %6 = vector.multi_reduction <add>, %3, %cst [1] : vector<16x384xf32> to vector<16xf32>
    %7 = vector.shape_cast %6 : vector<16xf32> to vector<16x1xf32>
    %cst_3 = arith.constant 3.840000e+02 : f32
    %8 = vector.broadcast %cst_3 : f32 to vector<16x1xf32>
    %9 = arith.divf %7, %8 : vector<16x1xf32>
    %10 = vector.broadcast %9 : vector<16x1xf32> to vector<16x384xf32>
    %11 = arith.subf %3, %10 : vector<16x384xf32>
    %12 = arith.mulf %11, %11 : vector<16x384xf32>
    %cst_4 = arith.constant dense<0.000000e+00> : vector<16xf32>
    %13 = vector.multi_reduction <add>, %12, %cst_4 [1] : vector<16x384xf32> to vector<16xf32>
    %14 = vector.shape_cast %13 : vector<16xf32> to vector<16x1xf32>
    %cst_5 = arith.constant 3.840000e+02 : f32
    %15 = vector.broadcast %cst_5 : f32 to vector<16x1xf32>
    %16 = arith.divf %14, %15 : vector<16x1xf32>
    %cst_6 = arith.constant 9.99999974E-6 : f32
    %17 = vector.broadcast %cst_6 : f32 to vector<16x1xf32>
    %18 = arith.addf %16, %17 : vector<16x1xf32>
    %19 = math.rsqrt %18 : vector<16x1xf32>
    %20 = vector.broadcast %19 : vector<16x1xf32> to vector<16x384xf32>
    %21 = arith.mulf %11, %20 : vector<16x384xf32>
    %22 = vector.broadcast %5 : vector<1x384xf32> to vector<16x384xf32>
    %23 = arith.mulf %21, %22 : vector<16x384xf32>
    %24 = arith.truncf %23 : vector<16x384xf32> to vector<16x384xbf16>
    %c0_7 = arith.constant 0 : index
    %c0_8 = arith.constant 0 : index
    %c0_9 = arith.constant 0 : index
    %25 = vector.load %arg8[%c0_7, %c0_8, %c0_9] : memref<1x384x1792xbf16, #tpu.memory_space<vmem>>, vector<1x384x1792xbf16>
    %26 = vector.shape_cast %25 : vector<1x384x1792xbf16> to vector<384x1792xbf16>
    %cst_10 = arith.constant dense<0.000000e+00> : vector<16x1792xf32>
    %27 = tpu.matmul %24, %26, %cst_10 {dimension_numbers = #tpu.dot_dimension_numbers<[1], [0], [0], [1], [0, 0, 1, 1], [], []>} : vector<16x384xbf16>, vector<384x1792xbf16>, vector<16x1792xf32> -> vector<16x1792xf32>
    %28 = vector.extract_strided_slice %27 {offsets = [0, 0], sizes = [16, 768], strides = [1, 1]} : vector<16x1792xf32> to vector<16x768xf32>
    %29 = vector.extract_strided_slice %27 {offsets = [0, 768], sizes = [16, 768], strides = [1, 1]} : vector<16x1792xf32> to vector<16x768xf32>
    %30 = vector.extract_strided_slice %27 {offsets = [0, 1536], sizes = [16, 128], strides = [1, 1]} : vector<16x1792xf32> to vector<16x128xf32>
    %31 = vector.extract_strided_slice %27 {offsets = [0, 1664], sizes = [16, 128], strides = [1, 1]} : vector<16x1792xf32> to vector<16x128xf32>
    %cst_11 = arith.constant 5.000000e-01 : f32
    %32 = vector.broadcast %cst_11 : f32 to vector<16x768xf32>
    %33 = arith.mulf %32, %29 : vector<16x768xf32>
    %cst_12 = arith.constant 0.707106769 : f32
    %34 = vector.broadcast %cst_12 : f32 to vector<16x768xf32>
    %35 = arith.mulf %29, %34 : vector<16x768xf32>
    %cst_13 = arith.constant 0.000000e+00 : f32
    %36 = vector.broadcast %cst_13 : f32 to vector<16x768xf32>
    %37 = arith.cmpf olt, %35, %36 : vector<16x768xf32>
    %cst_14 = arith.constant -1.000000e+00 : f32
    %cst_15 = arith.constant 1.000000e+00 : f32
    %38 = vector.broadcast %cst_14 : f32 to vector<16x768xf32>
    %39 = vector.broadcast %cst_15 : f32 to vector<16x768xf32>
    %40 = arith.select %37, %38, %39 : vector<16x768xi1>, vector<16x768xf32>
    %41 = math.absf %35 : vector<16x768xf32>
    %cst_16 = arith.constant 0.327591091 : f32
    %42 = vector.broadcast %cst_16 : f32 to vector<16x768xf32>
    %43 = arith.mulf %42, %41 : vector<16x768xf32>
    %cst_17 = arith.constant 1.000000e+00 : f32
    %44 = vector.broadcast %cst_17 : f32 to vector<16x768xf32>
    %45 = arith.addf %44, %43 : vector<16x768xf32>
    %cst_18 = arith.constant 1.000000e+00 : f32
    %46 = vector.broadcast %cst_18 : f32 to vector<16x768xf32>
    %47 = arith.divf %46, %45 : vector<16x768xf32>
    %cst_19 = arith.constant 1.06140542 : f32
    %48 = vector.broadcast %cst_19 : f32 to vector<16x768xf32>
    %49 = arith.mulf %48, %47 : vector<16x768xf32>
    %cst_20 = arith.constant -1.45315206 : f32
    %50 = vector.broadcast %cst_20 : f32 to vector<16x768xf32>
    %51 = arith.addf %49, %50 : vector<16x768xf32>
    %52 = arith.mulf %51, %47 : vector<16x768xf32>
    %cst_21 = arith.constant 1.42141378 : f32
    %53 = vector.broadcast %cst_21 : f32 to vector<16x768xf32>
    %54 = arith.addf %52, %53 : vector<16x768xf32>
    %55 = arith.mulf %54, %47 : vector<16x768xf32>
    %cst_22 = arith.constant -0.284496725 : f32
    %56 = vector.broadcast %cst_22 : f32 to vector<16x768xf32>
    %57 = arith.addf %55, %56 : vector<16x768xf32>
    %58 = arith.mulf %57, %47 : vector<16x768xf32>
    %cst_23 = arith.constant 0.254829586 : f32
    %59 = vector.broadcast %cst_23 : f32 to vector<16x768xf32>
    %60 = arith.addf %58, %59 : vector<16x768xf32>
    %61 = arith.mulf %60, %47 : vector<16x768xf32>
    %cst_24 = arith.constant 0.000000e+00 : f32
    %62 = vector.broadcast %cst_24 : f32 to vector<16x768xf32>
    %63 = arith.subf %62, %41 : vector<16x768xf32>
    %64 = arith.mulf %63, %41 : vector<16x768xf32>
    %65 = math.exp %64 : vector<16x768xf32>
    %66 = arith.mulf %61, %65 : vector<16x768xf32>
    %cst_25 = arith.constant 1.000000e+00 : f32
    %67 = vector.broadcast %cst_25 : f32 to vector<16x768xf32>
    %68 = arith.subf %67, %66 : vector<16x768xf32>
    %69 = arith.mulf %40, %68 : vector<16x768xf32>
    %cst_26 = arith.constant 1.000000e+00 : f32
    %70 = vector.broadcast %cst_26 : f32 to vector<16x768xf32>
    %71 = arith.addf %70, %69 : vector<16x768xf32>
    %72 = arith.mulf %33, %71 : vector<16x768xf32>
    %73 = arith.mulf %28, %72 : vector<16x768xf32>
    %74 = vector.extract_strided_slice %73 {offsets = [0, 0], sizes = [16, 384], strides = [1, 1]} : vector<16x768xf32> to vector<16x384xf32>
    %75 = arith.truncf %74 : vector<16x384xf32> to vector<16x384xbf16>
    %76 = vector.extract_strided_slice %73 {offsets = [0, 384], sizes = [16, 384], strides = [1, 1]} : vector<16x768xf32> to vector<16x384xf32>
    %77 = arith.index_cast %arg0 : i32 to index
    %78 = memref.load %arg1[%77] : memref<8xf32, #tpu.memory_space<smem>>
    %c0_27 = arith.constant 0 : index
    %c0_28 = arith.constant 0 : index
    %79 = vector.load %arg6[%c0_27, %c0_28] : memref<16x16xf32, #tpu.memory_space<vmem>>, vector<16x16xf32>
    %80 = vector.broadcast %78 : f32 to vector<16x16xf32>
    %81 = arith.mulf %80, %79 : vector<16x16xf32>
    %c0_29 = arith.constant 0 : index
    %c0_30 = arith.constant 0 : index
    %82 = vector.load %arg7[%c0_29, %c0_30] : memref<16x16xf32, #tpu.memory_space<vmem>>, vector<16x16xf32>
    %83 = arith.addf %81, %82 : vector<16x16xf32>
    %cst_31 = arith.constant dense<0.000000e+00> : vector<16x16xf32>
    %84 = tpu.matmul %30, %31, %cst_31 {dimension_numbers = #tpu.dot_dimension_numbers<[1], [1], [0], [0], [0, 0, 1, 0], [], []>} : vector<16x128xf32>, vector<16x128xf32>, vector<16x16xf32> -> vector<16x16xf32>
    %cst_32 = arith.constant 0.144337565 : f32
    %85 = vector.broadcast %cst_32 : f32 to vector<16x16xf32>
    %86 = arith.mulf %84, %85 : vector<16x16xf32>
    %87 = arith.addf %86, %83 : vector<16x16xf32>
    %cst_33 = arith.constant dense<0xFF800000> : vector<16xf32>
    %88 = vector.multi_reduction <maximumf>, %87, %cst_33 [1] : vector<16x16xf32> to vector<16xf32>
    %89 = vector.shape_cast %88 : vector<16xf32> to vector<16x1xf32>
    %90 = vector.broadcast %89 : vector<16x1xf32> to vector<16x16xf32>
    %91 = arith.subf %87, %90 : vector<16x16xf32>
    %92 = math.exp %91 : vector<16x16xf32>
    %cst_34 = arith.constant dense<0.000000e+00> : vector<16xf32>
    %93 = vector.multi_reduction <add>, %92, %cst_34 [1] : vector<16x16xf32> to vector<16xf32>
    %94 = vector.shape_cast %93 : vector<16xf32> to vector<16x1xf32>
    %95 = tpu.reciprocal %94 {approx = true} : vector<16x1xf32> -> vector<16x1xf32>
    %96 = vector.broadcast %95 : vector<16x1xf32> to vector<16x16xf32>
    %97 = arith.mulf %92, %96 : vector<16x16xf32>
    %cst_35 = arith.constant dense<0.000000e+00> : vector<16x384xf32>
    %98 = tpu.matmul %97, %76, %cst_35 {dimension_numbers = #tpu.dot_dimension_numbers<[1], [0], [0], [1], [0, 0, 1, 1], [], []>} : vector<16x16xf32>, vector<16x384xf32>, vector<16x384xf32> -> vector<16x384xf32>
    %99 = arith.truncf %98 : vector<16x384xf32> to vector<16x384xbf16>
    %c0_36 = arith.constant 0 : index
    %c0_37 = arith.constant 0 : index
    %c0_38 = arith.constant 0 : index
    %100 = vector.load %arg9[%c0_36, %c0_37, %c0_38] : memref<1x384x384xbf16, #tpu.memory_space<vmem>>, vector<1x384x384xbf16>
    %101 = vector.shape_cast %100 : vector<1x384x384xbf16> to vector<384x384xbf16>
    %cst_39 = arith.constant dense<0.000000e+00> : vector<16x384xf32>
    %102 = tpu.matmul %75, %101, %cst_39 {dimension_numbers = #tpu.dot_dimension_numbers<[1], [0], [0], [1], [0, 0, 1, 1], [], []>} : vector<16x384xbf16>, vector<384x384xbf16>, vector<16x384xf32> -> vector<16x384xf32>
    %c0_40 = arith.constant 0 : index
    %c0_41 = arith.constant 0 : index
    %c0_42 = arith.constant 0 : index
    %103 = vector.load %arg10[%c0_40, %c0_41, %c0_42] : memref<1x384x384xbf16, #tpu.memory_space<vmem>>, vector<1x384x384xbf16>
    %104 = vector.shape_cast %103 : vector<1x384x384xbf16> to vector<384x384xbf16>
    %cst_43 = arith.constant dense<0.000000e+00> : vector<16x384xf32>
    %105 = tpu.matmul %99, %104, %cst_43 {dimension_numbers = #tpu.dot_dimension_numbers<[1], [0], [0], [1], [0, 0, 1, 1], [], []>} : vector<16x384xbf16>, vector<384x384xbf16>, vector<16x384xf32> -> vector<16x384xf32>
    %106 = arith.addf %102, %105 : vector<16x384xf32>
    %107 = arith.addf %3, %106 : vector<16x384xf32>
    %c0_44 = arith.constant 0 : index
    %c0_45 = arith.constant 0 : index
    %108 = vector.load %arg13[%c0_44, %c0_45] : memref<16x384xf32, #tpu.memory_space<vmem>>, vector<16x384xf32>
    tpu.vector_store %arg13[%c0_44, %c0_45], %107 {strides = array<i32>} : memref<16x384xf32, #tpu.memory_space<vmem>>, vector<16x384xf32>,
    %c7_i32 = arith.constant 7 : i32
    %109 = arith.cmpi eq, %arg0, %c7_i32 : i32
    %110 = arith.extui %109 : i1 to i32
    %c0_i32_46 = arith.constant 0 : i32
    %111 = arith.cmpi ne, %110, %c0_i32_46 : i32
    scf.if %111 {
      %c0_47 = arith.constant 0 : index
      %c0_48 = arith.constant 0 : index
      %112 = vector.load %arg4[%c0_47, %c0_48] : memref<1x384xf32, #tpu.memory_space<vmem>>, vector<1x384xf32>
      %cst_49 = arith.constant dense<0.000000e+00> : vector<16xf32>
      %113 = vector.multi_reduction <add>, %107, %cst_49 [1] : vector<16x384xf32> to vector<16xf32>
      %114 = vector.shape_cast %113 : vector<16xf32> to vector<16x1xf32>
      %cst_50 = arith.constant 3.840000e+02 : f32
      %115 = vector.broadcast %cst_50 : f32 to vector<16x1xf32>
      %116 = arith.divf %114, %115 : vector<16x1xf32>
      %117 = vector.broadcast %116 : vector<16x1xf32> to vector<16x384xf32>
      %118 = arith.subf %107, %117 : vector<16x384xf32>
      %119 = arith.mulf %118, %118 : vector<16x384xf32>
      %cst_51 = arith.constant dense<0.000000e+00> : vector<16xf32>
      %120 = vector.multi_reduction <add>, %119, %cst_51 [1] : vector<16x384xf32> to vector<16xf32>
      %121 = vector.shape_cast %120 : vector<16xf32> to vector<16x1xf32>
      %cst_52 = arith.constant 3.840000e+02 : f32
      %122 = vector.broadcast %cst_52 : f32 to vector<16x1xf32>
      %123 = arith.divf %121, %122 : vector<16x1xf32>
      %cst_53 = arith.constant 9.99999974E-6 : f32
      %124 = vector.broadcast %cst_53 : f32 to vector<16x1xf32>
      %125 = arith.addf %123, %124 : vector<16x1xf32>
      %126 = math.rsqrt %125 : vector<16x1xf32>
      %127 = vector.broadcast %126 : vector<16x1xf32> to vector<16x384xf32>
      %128 = arith.mulf %118, %127 : vector<16x384xf32>
      %129 = vector.broadcast %112 : vector<1x384xf32> to vector<16x384xf32>
      %130 = arith.mulf %128, %129 : vector<16x384xf32>
      %131 = arith.truncf %130 : vector<16x384xf32> to vector<16x384xbf16>
      %c0_54 = arith.constant 0 : index
      %c0_55 = arith.constant 0 : index
      %132 = vector.load %arg11[%c0_54, %c0_55] : memref<384x128xbf16, #tpu.memory_space<vmem>>, vector<384x128xbf16>
      %cst_56 = arith.constant dense<0.000000e+00> : vector<16x128xf32>
      %133 = tpu.matmul %131, %132, %cst_56 {dimension_numbers = #tpu.dot_dimension_numbers<[1], [0], [0], [1], [0, 0, 1, 1], [], []>} : vector<16x384xbf16>, vector<384x128xbf16>, vector<16x128xf32> -> vector<16x128xf32>
      %c0_57 = arith.constant 0 : index
      %c0_58 = arith.constant 0 : index
      %134 = vector.load %arg12[%c0_57, %c0_58] : memref<16x128xf32, #tpu.memory_space<vmem>>, vector<16x128xf32>
      tpu.vector_store %arg12[%c0_57, %c0_58], %133 {strides = array<i32>} : memref<16x128xf32, #tpu.memory_space<vmem>>, vector<16x128xf32>,
    } else {
    }
    return
  }
  func.func @transform_0(%arg0: i32) -> i32 {
    %c0_i32 = arith.constant 0 : i32
    %c0_i32_0 = arith.constant 0 : i32
    return %c0_i32 : i32
  }
  func.func @transform_1(%arg0: i32) -> (i32, i32) {
    %c0_i32 = arith.constant 0 : i32
    %c0_i32_0 = arith.constant 0 : i32
    %c0_i32_1 = arith.constant 0 : i32
    return %c0_i32, %c0_i32_0 : i32, i32
  }
  func.func @transform_2(%arg0: i32) -> (i32, i32) {
    %c0_i32 = arith.constant 0 : i32
    %c0_i32_0 = arith.constant 0 : i32
    %c0_i32_1 = arith.constant 0 : i32
    return %c0_i32, %c0_i32_0 : i32, i32
  }
  func.func @transform_3(%arg0: i32) -> (i32, i32) {
    %c0_i32 = arith.constant 0 : i32
    %c0_i32_0 = arith.constant 0 : i32
    %c0_i32_1 = arith.constant 0 : i32
    return %c0_i32, %c0_i32_0 : i32, i32
  }
  func.func @transform_4(%arg0: i32) -> (i32, i32) {
    %c0_i32 = arith.constant 0 : i32
    %c0_i32_0 = arith.constant 0 : i32
    %c0_i32_1 = arith.constant 0 : i32
    return %c0_i32, %c0_i32_0 : i32, i32
  }
  func.func @transform_5(%arg0: i32) -> (i32, i32) {
    %c0_i32 = arith.constant 0 : i32
    %c0_i32_0 = arith.constant 0 : i32
    %c0_i32_1 = arith.constant 0 : i32
    return %c0_i32, %c0_i32_0 : i32, i32
  }
  func.func @transform_6(%arg0: i32) -> (i32, i32) {
    %c0_i32 = arith.constant 0 : i32
    %c0_i32_0 = arith.constant 0 : i32
    %c0_i32_1 = arith.constant 0 : i32
    return %c0_i32, %c0_i32_0 : i32, i32
  }
  func.func @transform_7(%arg0: i32) -> (i32, i32, i32) {
    %c0_i32 = arith.constant 0 : i32
    %c0_i32_0 = arith.constant 0 : i32
    %c0_i32_1 = arith.constant 0 : i32
    return %arg0, %c0_i32, %c0_i32_0 : i32, i32, i32
  }
  func.func @transform_8(%arg0: i32) -> (i32, i32, i32) {
    %c0_i32 = arith.constant 0 : i32
    %c0_i32_0 = arith.constant 0 : i32
    %c0_i32_1 = arith.constant 0 : i32
    return %arg0, %c0_i32, %c0_i32_0 : i32, i32, i32
  }
  func.func @transform_9(%arg0: i32) -> (i32, i32, i32) {
    %c0_i32 = arith.constant 0 : i32
    %c0_i32_0 = arith.constant 0 : i32
    %c0_i32_1 = arith.constant 0 : i32
    return %arg0, %c0_i32, %c0_i32_0 : i32, i32, i32
  }
  func.func @transform_10(%arg0: i32) -> (i32, i32) {
    %c0_i32 = arith.constant 0 : i32
    %c0_i32_0 = arith.constant 0 : i32
    %c0_i32_1 = arith.constant 0 : i32
    return %c0_i32, %c0_i32_0 : i32, i32
  }
  func.func @transform_11(%arg0: i32) -> (i32, i32) {
    %c0_i32 = arith.constant 0 : i32
    %c0_i32_0 = arith.constant 0 : i32
    %c0_i32_1 = arith.constant 0 : i32
    return %c0_i32, %c0_i32_0 : i32, i32
  }
}

</mosaic_0001>

<llo_original>
// kernel: model_forward.1
$region0: #{model_forward.1}
  #allocation0 [shape = 'u32[]', space=smem, size = 0x4, offset = 0x4, fixed_abs, tag = 'smem constant byte address 0x4 - core index']
  #allocation1 [shape = 'u32[144,128]{1,0:T(1,128)}', space=vmem, size = 0x12000, scoped, tag = 'internal scratch']
  #allocation2 [shape = 'f32[16,384]{1,0:T(8,128)}', space=vmem, size = 0x6000, scoped, tag = 'scratch operand']
  %s0 = inlined_call_operand.vmem [shape: f32[8], index: 0, kind: input, shape index: {}]
  %s1 = inlined_call_operand.vmem [shape: s32[16,1], index: 1, kind: input, shape index: {}]
  %s2 = inlined_call_operand.hbm [shape: bf16[128,384], index: 2, kind: input, shape index: {}]
  %s3 = inlined_call_operand.hbm [shape: f32[1,384], index: 3, kind: input, shape index: {}]
  %s4 = inlined_call_operand.hbm [shape: f32[8,384], index: 4, kind: input, shape index: {}]
  %s5 = inlined_call_operand.vmem [shape: f32[16,16], index: 5, kind: input, shape index: {}]
  %s6 = inlined_call_operand.vmem [shape: f32[16,16], index: 6, kind: input, shape index: {}]
  %s7 = inlined_call_operand.hbm [shape: bf16[8,384,1792], index: 7, kind: input, shape index: {}]
  %s8 = inlined_call_operand.hbm [shape: bf16[8,384,384], index: 8, kind: input, shape index: {}]
  %s9 = inlined_call_operand.hbm [shape: bf16[8,384,384], index: 9, kind: input, shape index: {}]
  %s10 = inlined_call_operand.hbm [shape: bf16[384,128], index: 10, kind: input, shape index: {}]
  %s11 = inlined_call_operand.vmem [shape: f32[16,128], index: 11, kind: output, shape index: {}]
  %s12 = sld [smem:[#allocation0]]
  $region117: #{model_forward.1} parent=0
    _
  %s14 = ssub.s32 1, %s12
  %s15 = scalar_select 0, %s14, %s12
  $region1: #{model_forward.1} parent=0
    #allocation3 [shape = 'u8[512]{0}', space=smem, size = 0x200, scoped, tag = 'input window, operand 0, single buffered']
    #allocation4 [shape = 's32[2]{0}', space=sflag, size = 0x8, scoped, tag = 'scoped memory for model_forward.1']
    #allocation5 [shape = 's32[2]{0}', space=sflag, size = 0x8, scoped, tag = 'scoped memory for model_forward.1']
    #allocation6 [shape = 'u8[98304]{0}', space=vmem, size = 0x18000, scoped, tag = 'input window, operand 2, single buffered']
    #allocation7 [shape = 'u8[1536]{0}', space=vmem, size = 0x800, scoped, tag = 'input window, operand 3, single buffered']
    #allocation8 [shape = 's32[1]{0}', space=sflag, size = 0x4, scoped, tag = 'scoped memory for model_forward.1']
    #allocation9 [shape = 'u8[12288]{0}', space=vmem, size = 0x3000, scoped, tag = 'input window, operand 4, single buffered']
    #allocation10 [shape = 'u8[2752512]{0}', space=vmem, size = 0x2a0000, scoped, tag = 'input window, operand 7']
    #allocation11 [shape = 's32[2]{0}', space=sflag, size = 0x8, scoped, tag = 'scoped memory for model_forward.1']
    #allocation12 [shape = 'u8[589824]{0}', space=vmem, size = 0x90000, scoped, tag = 'input window, operand 8']
    #allocation13 [shape = 'u8[589824]{0}', space=vmem, size = 0x90000, scoped, tag = 'input window, operand 9']
    #allocation14 [shape = 's32[2]{0}', space=sflag, size = 0x8, scoped, tag = 'scoped memory for model_forward.1']
    #allocation15 [shape = 'u8[98304]{0}', space=vmem, size = 0x18000, scoped, tag = 'input window, operand 10, single buffered']
    %16 = vsyncpa [#allocation5], 0
    %17 = vsyncpa [#allocation4], 0
    %18 = vsyncpa [#allocation8], 0
    %19 = vsyncpa [#allocation11], 0
    %s20 = scalar_lea.sflag [#allocation11], 1
    %21 = vsyncpa %s20, 0
    %22 = vsyncpa [#allocation14], 0
    %s23 = scalar_lea.sflag [#allocation14], 1
    %24 = vsyncpa %s23, 0
    loop: start=0, step=1, limit=10
    $region2: #{model_forward.1} parent=1 // loop_pre_header
      _
    $region3: #{model_forward.1} parent=1 // loop_header
      %s26 = sphi 0, %s30
      %p27 = scmp.ge.s32.totalorder %s26, 10
      %s34 = sphi 0, %s34
      %s36 = sphi 0, %s34
      %s37 = sphi 0, %s36
      %s51 = sphi 0, %s37
      %s55 = sphi 0, %s55
      %s57 = sphi 0, %s55
      %s58 = sphi 0, %s57
      %s72 = sphi 0, %s58
      %s76 = sphi 0, %s76
      %s78 = sphi 0, %s76
      %s79 = sphi 0, %s78
      %s93 = sphi 0, %s79
      %s97 = sphi 0, %s97
      %s99 = sphi 0, %s97
      %s100 = sphi 0, %s99
      %s114 = sphi 0, %s100
      %s118 = sphi 0, %s118
      %s120 = sphi 0, %s118
      %s121 = sphi 0, %s120
      %s135 = sphi 0, %s121
      %s139 = sphi 0, %s139
      %s141 = sphi 0, %s139
      %s142 = sphi 0, %s141
      %s156 = sphi 0, %s142
      %s160 = sphi 0, %s160
      %s162 = sphi 0, %s160
      %s163 = sphi 0, %s162
      %s177 = sphi 0, %s163
      %s183 = sphi 0, %s185
      %s186 = sphi 0, %s183
      %s187 = sphi 0, %s186
      %s203 = sphi 0, %s187
      %s209 = sphi 0, %s211
      %s212 = sphi 0, %s209
      %s213 = sphi 0, %s212
      %s229 = sphi 0, %s213
      %s235 = sphi 0, %s237
      %s238 = sphi 0, %s235
      %s239 = sphi 0, %s238
      %s255 = sphi 0, %s239
      %s259 = sphi 0, %s259
      %s261 = sphi 0, %s259
      %s262 = sphi 0, %s261
      %s276 = sphi 0, %s262
      %s280 = sphi 0, %s280
      %s282 = sphi 0, %s280
      %s283 = sphi 0, %s282
      %s297 = sphi 0, %s283
    $region4: #{model_forward.1} parent=1 // loop_header_branch
      %29 = sbr.rel (%p27) target = $region8
    $region5: #{model_forward.1} parent=1 // loop_body
      %s31 = ssub.s32 %s26, 1
      %s32 = ssub.s32 %s26, 2
      %s33 = sadd.s32 %s26, 1
      %s35 = sadd.s32 %s34, 1
      %p38 = scmp.eq.s32.totalorder %s26, 7
      %p39 = scmp.ne.s32.totalorder %s34, %s36
      %p40 = scmp.eq.s32.totalorder %s26, 0
      %p41 = por %p39, %p40
      %p42 = scmp.ne.s32.totalorder %s34, %s36
      %p43 = scmp.eq.s32.totalorder %s31, 7
      %p44 = por %p42, %p43
      %p45 = scmp.ne.s32.totalorder %s36, %s37
      %p46 = scmp.eq.s32.totalorder %s31, 0
      %p47 = por %p45, %p46
      %p48 = scmp.ne.s32.totalorder %s36, %s37
      %p49 = scmp.eq.s32.totalorder %s32, 7
      %p50 = por %p48, %p49
      %p52 = scmp.ne.s32.totalorder %s37, %s51
      %p53 = scmp.eq.s32.totalorder %s32, 0
      %p54 = por %p52, %p53
      %s56 = sadd.s32 %s55, 1
      %p59 = scmp.eq.s32.totalorder %s26, 7
      %p60 = scmp.ne.s32.totalorder %s55, %s57
      %p61 = scmp.eq.s32.totalorder %s26, 0
      %p62 = por %p60, %p61
      %p63 = scmp.ne.s32.totalorder %s55, %s57
      %p64 = scmp.eq.s32.totalorder %s31, 7
      %p65 = por %p63, %p64
      %p66 = scmp.ne.s32.totalorder %s57, %s58
      %p67 = scmp.eq.s32.totalorder %s31, 0
      %p68 = por %p66, %p67
      %p69 = scmp.ne.s32.totalorder %s57, %s58
      %p70 = scmp.eq.s32.totalorder %s32, 7
      %p71 = por %p69, %p70
      %p73 = scmp.ne.s32.totalorder %s58, %s72
      %p74 = scmp.eq.s32.totalorder %s32, 0
      %p75 = por %p73, %p74
      %s77 = sadd.s32 %s76, 1
      %p80 = scmp.eq.s32.totalorder %s26, 7
      %p81 = scmp.ne.s32.totalorder %s76, %s78
      %p82 = scmp.eq.s32.totalorder %s26, 0
      %p83 = por %p81, %p82
      %p84 = scmp.ne.s32.totalorder %s76, %s78
      %p85 = scmp.eq.s32.totalorder %s31, 7
      %p86 = por %p84, %p85
      %p87 = scmp.ne.s32.totalorder %s78, %s79
      %p88 = scmp.eq.s32.totalorder %s31, 0
      %p89 = por %p87, %p88
      %p90 = scmp.ne.s32.totalorder %s78, %s79
      %p91 = scmp.eq.s32.totalorder %s32, 7
      %p92 = por %p90, %p91
      %p94 = scmp.ne.s32.totalorder %s79, %s93
      %p95 = scmp.eq.s32.totalorder %s32, 0
      %p96 = por %p94, %p95
      %s98 = sadd.s32 %s97, 1
      %p101 = scmp.eq.s32.totalorder %s26, 7
      %p102 = scmp.ne.s32.totalorder %s97, %s99
      %p103 = scmp.eq.s32.totalorder %s26, 0
      %p104 = por %p102, %p103
      %p105 = scmp.ne.s32.totalorder %s97, %s99
      %p106 = scmp.eq.s32.totalorder %s31, 7
      %p107 = por %p105, %p106
      %p108 = scmp.ne.s32.totalorder %s99, %s100
      %p109 = scmp.eq.s32.totalorder %s31, 0
      %p110 = por %p108, %p109
      %p111 = scmp.ne.s32.totalorder %s99, %s100
      %p112 = scmp.eq.s32.totalorder %s32, 7
      %p113 = por %p111, %p112
      %p115 = scmp.ne.s32.totalorder %s100, %s114
      %p116 = scmp.eq.s32.totalorder %s32, 0
      %p117 = por %p115, %p116
      %s119 = sadd.s32 %s118, 1
      %p122 = scmp.eq.s32.totalorder %s26, 7
      %p123 = scmp.ne.s32.totalorder %s118, %s120
      %p124 = scmp.eq.s32.totalorder %s26, 0
      %p125 = por %p123, %p124
      %p126 = scmp.ne.s32.totalorder %s118, %s120
      %p127 = scmp.eq.s32.totalorder %s31, 7
      %p128 = por %p126, %p127
      %p129 = scmp.ne.s32.totalorder %s120, %s121
      %p130 = scmp.eq.s32.totalorder %s31, 0
      %p131 = por %p129, %p130
      %p132 = scmp.ne.s32.totalorder %s120, %s121
      %p133 = scmp.eq.s32.totalorder %s32, 7
      %p134 = por %p132, %p133
      %p136 = scmp.ne.s32.totalorder %s121, %s135
      %p137 = scmp.eq.s32.totalorder %s32, 0
      %p138 = por %p136, %p137
      %s140 = sadd.s32 %s139, 1
      %p143 = scmp.eq.s32.totalorder %s26, 7
      %p144 = scmp.ne.s32.totalorder %s139, %s141
      %p145 = scmp.eq.s32.totalorder %s26, 0
      %p146 = por %p144, %p145
      %p147 = scmp.ne.s32.totalorder %s139, %s141
      %p148 = scmp.eq.s32.totalorder %s31, 7
      %p149 = por %p147, %p148
      %p150 = scmp.ne.s32.totalorder %s141, %s142
      %p151 = scmp.eq.s32.totalorder %s31, 0
      %p152 = por %p150, %p151
      %p153 = scmp.ne.s32.totalorder %s141, %s142
      %p154 = scmp.eq.s32.totalorder %s32, 7
      %p155 = por %p153, %p154
      %p157 = scmp.ne.s32.totalorder %s142, %s156
      %p158 = scmp.eq.s32.totalorder %s32, 0
      %p159 = por %p157, %p158
      %s161 = sadd.s32 %s160, 1
      %p164 = scmp.eq.s32.totalorder %s26, 7
      %p165 = scmp.ne.s32.totalorder %s160, %s162
      %p166 = scmp.eq.s32.totalorder %s26, 0
      %p167 = por %p165, %p166
      %p168 = scmp.ne.s32.totalorder %s160, %s162
      %p169 = scmp.eq.s32.totalorder %s31, 7
      %p170 = por %p168, %p169
      %p171 = scmp.ne.s32.totalorder %s162, %s163
      %p172 = scmp.eq.s32.totalorder %s31, 0
      %p173 = por %p171, %p172
      %p174 = scmp.ne.s32.totalorder %s162, %s163
      %p175 = scmp.eq.s32.totalorder %s32, 7
      %p176 = por %p174, %p175
      %p178 = scmp.ne.s32.totalorder %s163, %s177
      %p179 = scmp.eq.s32.totalorder %s32, 0
      %p180 = por %p178, %p179
      %s181 = ssub.s32 %s26, %s33
      %p182 = scmp.eq.s32.totalorder %s181, 0
      %s184 = sadd.s32 %s183, 1
      %s185 = scalar_select %p182, %s183, %s184
      %p188 = pneg %p182
      %p189 = scmp.eq.s32.totalorder %s26, 7
      %p190 = por %p188, %p189
      %p191 = scmp.ne.s32.totalorder %s183, %s186
      %p192 = scmp.eq.s32.totalorder %s26, 0
      %p193 = por %p191, %p192
      %p194 = scmp.ne.s32.totalorder %s183, %s186
      %p195 = scmp.eq.s32.totalorder %s31, 7
      %p196 = por %p194, %p195
      %p197 = scmp.ne.s32.totalorder %s186, %s187
      %p198 = scmp.eq.s32.totalorder %s31, 0
      %p199 = por %p197, %p198
      %p200 = scmp.ne.s32.totalorder %s186, %s187
      %p201 = scmp.eq.s32.totalorder %s32, 7
      %p202 = por %p200, %p201
      %p204 = scmp.ne.s32.totalorder %s187, %s203
      %p205 = scmp.eq.s32.totalorder %s32, 0
      %p206 = por %p204, %p205
      %s207 = ssub.s32 %s26, %s33
      %p208 = scmp.eq.s32.totalorder %s207, 0
      %s210 = sadd.s32 %s209, 1
      %s211 = scalar_select %p208, %s209, %s210
      %p214 = pneg %p208
      %p215 = scmp.eq.s32.totalorder %s26, 7
      %p216 = por %p214, %p215
      %p217 = scmp.ne.s32.totalorder %s209, %s212
      %p218 = scmp.eq.s32.totalorder %s26, 0
      %p219 = por %p217, %p218
      %p220 = scmp.ne.s32.totalorder %s209, %s212
      %p221 = scmp.eq.s32.totalorder %s31, 7
      %p222 = por %p220, %p221
      %p223 = scmp.ne.s32.totalorder %s212, %s213
      %p224 = scmp.eq.s32.totalorder %s31, 0
      %p225 = por %p223, %p224
      %p226 = scmp.ne.s32.totalorder %s212, %s213
      %p227 = scmp.eq.s32.totalorder %s32, 7
      %p228 = por %p226, %p227
      %p230 = scmp.ne.s32.totalorder %s213, %s229
      %p231 = scmp.eq.s32.totalorder %s32, 0
      %p232 = por %p230, %p231
      %s233 = ssub.s32 %s26, %s33
      %p234 = scmp.eq.s32.totalorder %s233, 0
      %s236 = sadd.s32 %s235, 1
      %s237 = scalar_select %p234, %s235, %s236
      %p240 = pneg %p234
      %p241 = scmp.eq.s32.totalorder %s26, 7
      %p242 = por %p240, %p241
      %p243 = scmp.ne.s32.totalorder %s235, %s238
      %p244 = scmp.eq.s32.totalorder %s26, 0
      %p245 = por %p243, %p244
      %p246 = scmp.ne.s32.totalorder %s235, %s238
      %p247 = scmp.eq.s32.totalorder %s31, 7
      %p248 = por %p246, %p247
      %p249 = scmp.ne.s32.totalorder %s238, %s239
      %p250 = scmp.eq.s32.totalorder %s31, 0
      %p251 = por %p249, %p250
      %p252 = scmp.ne.s32.totalorder %s238, %s239
      %p253 = scmp.eq.s32.totalorder %s32, 7
      %p254 = por %p252, %p253
      %p256 = scmp.ne.s32.totalorder %s239, %s255
      %p257 = scmp.eq.s32.totalorder %s32, 0
      %p258 = por %p256, %p257
      %s260 = sadd.s32 %s259, 1
      %p263 = scmp.eq.s32.totalorder %s26, 7
      %p264 = scmp.ne.s32.totalorder %s259, %s261
      %p265 = scmp.eq.s32.totalorder %s26, 0
      %p266 = por %p264, %p265
      %p267 = scmp.ne.s32.totalorder %s259, %s261
      %p268 = scmp.eq.s32.totalorder %s31, 7
      %p269 = por %p267, %p268
      %p270 = scmp.ne.s32.totalorder %s261, %s262
      %p271 = scmp.eq.s32.totalorder %s31, 0
      %p272 = por %p270, %p271
      %p273 = scmp.ne.s32.totalorder %s261, %s262
      %p274 = scmp.eq.s32.totalorder %s32, 7
      %p275 = por %p273, %p274
      %p277 = scmp.ne.s32.totalorder %s262, %s276
      %p278 = scmp.eq.s32.totalorder %s32, 0
      %p279 = por %p277, %p278
      %s281 = sadd.s32 %s280, 1
      %p284 = scmp.eq.s32.totalorder %s26, 7
      %p285 = scmp.ne.s32.totalorder %s280, %s282
      %p286 = scmp.eq.s32.totalorder %s26, 0
      %p287 = por %p285, %p286
      %p288 = scmp.ne.s32.totalorder %s280, %s282
      %p289 = scmp.eq.s32.totalorder %s31, 7
      %p290 = por %p288, %p289
      %p291 = scmp.ne.s32.totalorder %s282, %s283
      %p292 = scmp.eq.s32.totalorder %s31, 0
      %p293 = por %p291, %p292
      %p294 = scmp.ne.s32.totalorder %s282, %s283
      %p295 = scmp.eq.s32.totalorder %s32, 7
      %p296 = por %p294, %p295
      %p298 = scmp.ne.s32.totalorder %s283, %s297
      %p299 = scmp.eq.s32.totalorder %s32, 0
      %p300 = por %p298, %p299
      %p301 = scmp.le.s32.totalorder 1, %s26
      %p302 = scmp.lt.s32.totalorder %s26, 9
      %p303 = pnand %p301, %p302
      %p304 = pneg %p303
      // Predicated region
      $region9: #{model_forward.1} parent=5 // pred_check
        _
      $region10: #{model_forward.1} parent=5 // pred_check_branch
        %306 = sbr.rel (%p303) target = $region12
      $region11: #{model_forward.1} parent=5 // pred_region
        %s307 = ssub.s32 %s26, 1
        // Predicated region
        $region13: #{model_forward.1} parent=11 // pred_check
          %p308 = pneg %p47
        $region14: #{model_forward.1} parent=11 // pred_check_branch
          %310 = sbr.rel (%p308) target = $region16
        $region15: #{model_forward.1} parent=11 // pred_region
          %s312 = ssub.s32 16, 16
          %313 = vsyncadd [#allocation5], %s312
          %s315 = sshll.u32 %s0, 4
          %s316 = int_to_ptr.vmem [resolvable:$true] %s315
          %318 = dma.vmem_to_smem %s316, 16, [#allocation3], [#allocation5]
        $region16: #{model_forward.1} parent=11 // pred_fallthru
          _
        // Predicated region
        $region17: #{model_forward.1} parent=11 // pred_check
          %p319 = pneg %p68
        $region18: #{model_forward.1} parent=11 // pred_check_branch
          %321 = sbr.rel (%p319) target = $region20
        $region19: #{model_forward.1} parent=11 // pred_region
          _
        $region20: #{model_forward.1} parent=11 // pred_fallthru
          _
        // Predicated region
        $region21: #{model_forward.1} parent=11 // pred_check
          %p322 = pneg %p89
        $region22: #{model_forward.1} parent=11 // pred_check_branch
          %324 = sbr.rel (%p322) target = $region24
        $region23: #{model_forward.1} parent=11 // pred_region
          %s326 = ssub.s32 3072, 3072
          %327 = vsyncadd [#allocation4], %s326
          %s328 = sshll.u32 [#allocation6], 4
          %s329 = int_to_ptr.vmem [resolvable:$true] %s328
          %334 = dma.hbm_to_vmem [thread:$0]  %s2, 3072, %s329, [#allocation4], 192, 192, 12
        $region24: #{model_forward.1} parent=11 // pred_fallthru
          _
        // Predicated region
        $region25: #{model_forward.1} parent=11 // pred_check
          %p335 = pneg %p110
        $region26: #{model_forward.1} parent=11 // pred_check_branch
          %337 = sbr.rel (%p335) target = $region28
        $region27: #{model_forward.1} parent=11 // pred_region
          %s339 = ssub.s32 48, 48
          %340 = vsyncadd [#allocation8], %s339
          %s342 = sshll.u32 [#allocation7], 4
          %s343 = int_to_ptr.vmem [resolvable:$true] %s342
          %345 = dma.hbm_to_vmem [thread:$0]  %s3, 48, %s343, [#allocation8]
        $region28: #{model_forward.1} parent=11 // pred_fallthru
          _
        // Predicated region
        $region29: #{model_forward.1} parent=11 // pred_check
          %p346 = pneg %p131
        $region30: #{model_forward.1} parent=11 // pred_check_branch
          %348 = sbr.rel (%p346) target = $region32
        $region31: #{model_forward.1} parent=11 // pred_region
          %s350 = ssub.s32 384, 384
          %351 = vsyncadd [#allocation8], %s350
          %s353 = sshll.u32 [#allocation9], 4
          %s354 = int_to_ptr.vmem [resolvable:$true] %s353
          %356 = dma.hbm_to_vmem [thread:$0]  %s4, 384, %s354, [#allocation8]
        $region32: #{model_forward.1} parent=11 // pred_fallthru
          _
        // Predicated region
        $region33: #{model_forward.1} parent=11 // pred_check
          %p357 = pneg %p152
        $region34: #{model_forward.1} parent=11 // pred_check_branch
          %359 = sbr.rel (%p357) target = $region36
        $region35: #{model_forward.1} parent=11 // pred_region
          _
        $region36: #{model_forward.1} parent=11 // pred_fallthru
          _
        // Predicated region
        $region37: #{model_forward.1} parent=11 // pred_check
          %p360 = pneg %p173
        $region38: #{model_forward.1} parent=11 // pred_check_branch
          %362 = sbr.rel (%p360) target = $region40
        $region39: #{model_forward.1} parent=11 // pred_region
          _
        $region40: #{model_forward.1} parent=11 // pred_fallthru
          _
        // Predicated region
        $region41: #{model_forward.1} parent=11 // pred_check
          %p363 = pneg %p272
        $region42: #{model_forward.1} parent=11 // pred_check_branch
          %365 = sbr.rel (%p363) target = $region44
        $region43: #{model_forward.1} parent=11 // pred_region
          %s367 = ssub.s32 3072, 3072
          %368 = vsyncadd [#allocation14], %s367
          %s369 = sshll.u32 [#allocation15], 4
          %s370 = int_to_ptr.vmem [resolvable:$true] %s369
          %375 = dma.hbm_to_vmem [thread:$0]  %s10, 3072, %s370, [#allocation14], 64, 64, 4
        $region44: #{model_forward.1} parent=11 // pred_fallthru
          _
      $region12: #{model_forward.1} parent=5 // pred_fallthru
        _
      %p376 = scmp.lt.s32.totalorder %s26, 8
      // Predicated region
      $region45: #{model_forward.1} parent=5 // pred_check
        %p377 = pneg %p376
      $region46: #{model_forward.1} parent=5 // pred_check_branch
        %379 = sbr.rel (%p377) target = $region48
      $region47: #{model_forward.1} parent=5 // pred_region
        // Predicated region
        $region49: #{model_forward.1} parent=47 // pred_check
          %p380 = pneg %p193
        $region50: #{model_forward.1} parent=47 // pred_check_branch
          %382 = sbr.rel (%p380) target = $region52
        $region51: #{model_forward.1} parent=47 // pred_region
          %s383 = sand.u32 %s26, 1
          %s384 = scalar_lea.sflag [#allocation11], %s383
          %s385 = sand.u32 %s183, 1
          %s386 = smul.addr %s385, 2688
          %s387 = scalar_lea.vmem [#allocation10], %s386
          %s389 = ssub.s32 43008, 43008
          %390 = vsyncadd %s384, %s389
          %s391 = smul.addr %s26, 672
          %s392 = smul.addr %s391, 64
          %s393 = scalar_lea.hbm %s7, %s392
          %s394 = sshll.u32 %s387, 4
          %s395 = int_to_ptr.vmem [resolvable:$true] %s394
          %400 = dma.hbm_to_vmem [thread:$0]  %s393, 43008, %s395, %s384, 896, 896, 56
        $region52: #{model_forward.1} parent=47 // pred_fallthru
          _
        // Predicated region
        $region53: #{model_forward.1} parent=47 // pred_check
          %p401 = pneg %p219
        $region54: #{model_forward.1} parent=47 // pred_check_branch
          %403 = sbr.rel (%p401) target = $region56
        $region55: #{model_forward.1} parent=47 // pred_region
          %s404 = sand.u32 %s26, 1
          %s405 = scalar_lea.sflag [#allocation11], %s404
          %s406 = sand.u32 %s209, 1
          %s407 = smul.addr %s406, 576
          %s408 = scalar_lea.vmem [#allocation12], %s407
          %s410 = ssub.s32 9216, 9216
          %411 = vsyncadd %s405, %s410
          %s412 = smul.addr %s26, 144
          %s413 = smul.addr %s412, 64
          %s414 = scalar_lea.hbm %s8, %s413
          %s415 = sshll.u32 %s408, 4
          %s416 = int_to_ptr.vmem [resolvable:$true] %s415
          %421 = dma.hbm_to_vmem [thread:$0]  %s414, 9216, %s416, %s405, 192, 192, 12
        $region56: #{model_forward.1} parent=47 // pred_fallthru
          _
        // Predicated region
        $region57: #{model_forward.1} parent=47 // pred_check
          %p422 = pneg %p245
        $region58: #{model_forward.1} parent=47 // pred_check_branch
          %424 = sbr.rel (%p422) target = $region60
        $region59: #{model_forward.1} parent=47 // pred_region
          %s425 = sand.u32 %s26, 1
          %s426 = scalar_lea.sflag [#allocation14], %s425
          %s427 = sand.u32 %s235, 1
          %s428 = smul.addr %s427, 576
          %s429 = scalar_lea.vmem [#allocation13], %s428
          %s431 = ssub.s32 9216, 9216
          %432 = vsyncadd %s426, %s431
          %s433 = smul.addr %s26, 144
          %s434 = smul.addr %s433, 64
          %s435 = scalar_lea.hbm %s9, %s434
          %s436 = sshll.u32 %s429, 4
          %s437 = int_to_ptr.vmem [resolvable:$true] %s436
          %442 = dma.hbm_to_vmem [thread:$0]  %s435, 9216, %s437, %s426, 192, 192, 12
        $region60: #{model_forward.1} parent=47 // pred_fallthru
          _
      $region48: #{model_forward.1} parent=5 // pred_fallthru
        _
      %p443 = scmp.le.s32.totalorder 1, %s26
      %p444 = scmp.lt.s32.totalorder %s26, 9
      %p445 = pnand %p443, %p444
      %p446 = pneg %p445
      // Predicated region
      $region61: #{model_forward.1} parent=5 // pred_check
        _
      $region62: #{model_forward.1} parent=5 // pred_check_branch
        %448 = sbr.rel (%p445) target = $region64
      $region63: #{model_forward.1} parent=5 // pred_region
        %s449 = ssub.s32 %s26, 1
        // Predicated region
        $region65: #{model_forward.1} parent=63 // pred_check
          %p450 = pneg %p47
        $region66: #{model_forward.1} parent=63 // pred_check_branch
          %452 = sbr.rel (%p450) target = $region68
        $region67: #{model_forward.1} parent=63 // pred_region
          %453 = dma.done [#allocation5], 16
        $region68: #{model_forward.1} parent=63 // pred_fallthru
          _
        // Predicated region
        $region69: #{model_forward.1} parent=63 // pred_check
          %p454 = pneg %p89
        $region70: #{model_forward.1} parent=63 // pred_check_branch
          %456 = sbr.rel (%p454) target = $region72
        $region71: #{model_forward.1} parent=63 // pred_region
          %457 = dma.done [#allocation4], 3072
        $region72: #{model_forward.1} parent=63 // pred_fallthru
          _
        // Predicated region
        $region73: #{model_forward.1} parent=63 // pred_check
          %p458 = pneg %p110
        $region74: #{model_forward.1} parent=63 // pred_check_branch
          %460 = sbr.rel (%p458) target = $region76
        $region75: #{model_forward.1} parent=63 // pred_region
          %461 = dma.done [#allocation8], 48
        $region76: #{model_forward.1} parent=63 // pred_fallthru
          _
        // Predicated region
        $region77: #{model_forward.1} parent=63 // pred_check
          %p462 = pneg %p131
        $region78: #{model_forward.1} parent=63 // pred_check_branch
          %464 = sbr.rel (%p462) target = $region80
        $region79: #{model_forward.1} parent=63 // pred_region
          %465 = dma.done [#allocation8], 384
        $region80: #{model_forward.1} parent=63 // pred_fallthru
          _
        %s466 = sand.u32 %s31, 1
        %s467 = scalar_lea.sflag [#allocation11], %s466
        %s468 = sand.u32 %s186, 1
        %s469 = smul.addr %s468, 2688
        %s470 = scalar_lea.vmem [#allocation10], %s469
        // Predicated region
        $region81: #{model_forward.1} parent=63 // pred_check
          %p471 = pneg %p199
        $region82: #{model_forward.1} parent=63 // pred_check_branch
          %473 = sbr.rel (%p471) target = $region84
        $region83: #{model_forward.1} parent=63 // pred_region
          %474 = dma.done %s467, 43008
        $region84: #{model_forward.1} parent=63 // pred_fallthru
          _
        %s475 = sand.u32 %s31, 1
        %s476 = scalar_lea.sflag [#allocation11], %s475
        %s477 = sand.u32 %s212, 1
        %s478 = smul.addr %s477, 576
        %s479 = scalar_lea.vmem [#allocation12], %s478
        // Predicated region
        $region85: #{model_forward.1} parent=63 // pred_check
          %p480 = pneg %p225
        $region86: #{model_forward.1} parent=63 // pred_check_branch
          %482 = sbr.rel (%p480) target = $region88
        $region87: #{model_forward.1} parent=63 // pred_region
          %483 = dma.done %s476, 9216
        $region88: #{model_forward.1} parent=63 // pred_fallthru
          _
        %s484 = sand.u32 %s31, 1
        %s485 = scalar_lea.sflag [#allocation14], %s484
        %s486 = sand.u32 %s238, 1
        %s487 = smul.addr %s486, 576
        %s488 = scalar_lea.vmem [#allocation13], %s487
        // Predicated region
        $region89: #{model_forward.1} parent=63 // pred_check
          %p489 = pneg %p251
        $region90: #{model_forward.1} parent=63 // pred_check_branch
          %491 = sbr.rel (%p489) target = $region92
        $region91: #{model_forward.1} parent=63 // pred_region
          %492 = dma.done %s485, 9216
        $region92: #{model_forward.1} parent=63 // pred_fallthru
          _
        // Predicated region
        $region93: #{model_forward.1} parent=63 // pred_check
          %p493 = pneg %p272
        $region94: #{model_forward.1} parent=63 // pred_check_branch
          %495 = sbr.rel (%p493) target = $region96
        $region95: #{model_forward.1} parent=63 // pred_region
          %496 = dma.done [#allocation14], 3072
        $region96: #{model_forward.1} parent=63 // pred_fallthru
          _
        %497 = sfence
        %p498 = pneg %p47
        %p499 = pneg %p44
        %p500 = pneg %p68
        %p501 = pneg %p65
        %p502 = pneg %p89
        %p503 = pneg %p86
        %p504 = pneg %p110
        %p505 = pneg %p107
        %p506 = pneg %p131
        %p507 = pneg %p128
        %p508 = pneg %p152
        %p509 = pneg %p149
        %p510 = pneg %p173
        %p511 = pneg %p170
        %s512 = sand.u32 %s31, 1
        %s513 = scalar_lea.sflag [#allocation11], %s512
        %s514 = sand.u32 %s186, 1
        %s515 = smul.addr %s514, 2688
        %s516 = scalar_lea.vmem [#allocation10], %s515
        %p517 = pneg %p199
        %p518 = pneg %p196
        %s519 = sand.u32 %s31, 1
        %s520 = scalar_lea.sflag [#allocation11], %s519
        %s521 = sand.u32 %s212, 1
        %s522 = smul.addr %s521, 576
        %s523 = scalar_lea.vmem [#allocation12], %s522
        %p524 = pneg %p225
        %p525 = pneg %p222
        %s526 = sand.u32 %s31, 1
        %s527 = scalar_lea.sflag [#allocation14], %s526
        %s528 = sand.u32 %s238, 1
        %s529 = smul.addr %s528, 576
        %s530 = scalar_lea.vmem [#allocation13], %s529
        %p531 = pneg %p251
        %p532 = pneg %p248
        %p533 = pneg %p272
        %p534 = pneg %p269
        %p535 = pneg %p293
        %p536 = pneg %p290
        %p538 = scmp.eq.s32.totalorder %s31, 0
        // Predicated region
        $region97: #{model_forward.1} parent=63 // pred_check
          %p539 = pneg %p538
        $region98: #{model_forward.1} parent=63 // pred_check_branch
          %541 = sbr.rel (%p539) target = $region100
        $region99: #{model_forward.1} parent=63 // pred_region
          %v542 = vld [vmem:[%s1] sm:$0xff]
          %v543 = vld [vmem:[%s1 + $0x8] sm:$0xff]
          %v544 = vlaneseq
          %v545 = vand.u32 %v544, 127
          %546 = vset.pattern.permute.xlu0 0
          %547 = vperm.xlu0 %546, %v542
          %v548 = vpop.permute.xlu0 %547
          %549 = vset.pattern.permute.xlu0 0
          %550 = vperm.xlu0 %549, %v543
          %v551 = vpop.permute.xlu0 %550
          %vm552 = vcmp.eq.s32.totalorder %v545, %v548
          %vm553 = vcmp.eq.s32.totalorder %v545, %v551
          %v554 = vsel %vm552, 1.0, 0.0
          %v555 = vsel %vm553, 1.0, 0.0
          %v556 = vpack.c.bf16 %v555, %v554
          %v557 = vld [vmem:[#allocation6] sm:$0xff]
          %v558 = vld [vmem:[#allocation6 + $0x8] sm:$0xf]
          %v559 = vld [vmem:[#allocation6 + $0xc] sm:$0xff]
          %v560 = vld [vmem:[#allocation6 + $0x14] sm:$0xf]
          %v561 = vld [vmem:[#allocation6 + $0x18] sm:$0xff]
          %v562 = vld [vmem:[#allocation6 + $0x20] sm:$0xf]
          %v563 = vld [vmem:[#allocation6 + $0x24] sm:$0xff]
          %v564 = vld [vmem:[#allocation6 + $0x2c] sm:$0xf]
          %v565 = vld [vmem:[#allocation6 + $0x30] sm:$0xff]
          %v566 = vld [vmem:[#allocation6 + $0x38] sm:$0xf]
          %v567 = vld [vmem:[#allocation6 + $0x3c] sm:$0xff]
          %v568 = vld [vmem:[#allocation6 + $0x44] sm:$0xf]
          %v569 = vld [vmem:[#allocation6 + $0x48] sm:$0xff]
          %v570 = vld [vmem:[#allocation6 + $0x50] sm:$0xf]
          %v571 = vld [vmem:[#allocation6 + $0x54] sm:$0xff]
          %v572 = vld [vmem:[#allocation6 + $0x5c] sm:$0xf]
          %v573 = vld [vmem:[#allocation6 + $0x60] sm:$0xff]
          %v574 = vld [vmem:[#allocation6 + $0x68] sm:$0xf]
          %v575 = vld [vmem:[#allocation6 + $0x6c] sm:$0xff]
          %v576 = vld [vmem:[#allocation6 + $0x74] sm:$0xf]
          %v577 = vld [vmem:[#allocation6 + $0x78] sm:$0xff]
          %v578 = vld [vmem:[#allocation6 + $0x80] sm:$0xf]
          %v579 = vld [vmem:[#allocation6 + $0x84] sm:$0xff]
          %v580 = vld [vmem:[#allocation6 + $0x8c] sm:$0xf]
          %v581 = vld [vmem:[#allocation6 + $0x90] sm:$0xff]
          %v582 = vld [vmem:[#allocation6 + $0x98] sm:$0xf]
          %v583 = vld [vmem:[#allocation6 + $0x9c] sm:$0xff]
          %v584 = vld [vmem:[#allocation6 + $0xa4] sm:$0xf]
          %v585 = vld [vmem:[#allocation6 + $0xa8] sm:$0xff]
          %v586 = vld [vmem:[#allocation6 + $0xb0] sm:$0xf]
          %v587 = vld [vmem:[#allocation6 + $0xb4] sm:$0xff]
          %v588 = vld [vmem:[#allocation6 + $0xbc] sm:$0xf]
          %v621 = vunpack.c.l.b16 %v557
          %v622 = vunpack.c.h.b16 %v557
          %v623 = vunpack.c.l.b16 %v558
          %v624 = vunpack.c.l.b16 %v559
          %v625 = vunpack.c.h.b16 %v559
          %v626 = vunpack.c.l.b16 %v560
          %v627 = vunpack.c.l.b16 %v561
          %v628 = vunpack.c.h.b16 %v561
          %v629 = vunpack.c.l.b16 %v562
          %v630 = vunpack.c.l.b16 %v563
          %v631 = vunpack.c.h.b16 %v563
          %v632 = vunpack.c.l.b16 %v564
          %v633 = vunpack.c.l.b16 %v565
          %v634 = vunpack.c.h.b16 %v565
          %v635 = vunpack.c.l.b16 %v566
          %v636 = vunpack.c.l.b16 %v567
          %v637 = vunpack.c.h.b16 %v567
          %v638 = vunpack.c.l.b16 %v568
          %v639 = vunpack.c.l.b16 %v569
          %v640 = vunpack.c.h.b16 %v569
          %v641 = vunpack.c.l.b16 %v570
          %v642 = vunpack.c.l.b16 %v571
          %v643 = vunpack.c.h.b16 %v571
          %v644 = vunpack.c.l.b16 %v572
          %v645 = vunpack.c.l.b16 %v573
          %v646 = vunpack.c.h.b16 %v573
          %v647 = vunpack.c.l.b16 %v574
          %v648 = vunpack.c.l.b16 %v575
          %v649 = vunpack.c.h.b16 %v575
          %v650 = vunpack.c.l.b16 %v576
          %v651 = vunpack.c.l.b16 %v577
          %v652 = vunpack.c.h.b16 %v577
          %v653 = vunpack.c.l.b16 %v578
          %v654 = vunpack.c.l.b16 %v579
          %v655 = vunpack.c.h.b16 %v579
          %v656 = vunpack.c.l.b16 %v580
          %v657 = vunpack.c.l.b16 %v581
          %v658 = vunpack.c.h.b16 %v581
          %v659 = vunpack.c.l.b16 %v582
          %v660 = vunpack.c.l.b16 %v583
          %v661 = vunpack.c.h.b16 %v583
          %v662 = vunpack.c.l.b16 %v584
          %v663 = vunpack.c.l.b16 %v585
          %v664 = vunpack.c.h.b16 %v585
          %v665 = vunpack.c.l.b16 %v586
          %v666 = vunpack.c.l.b16 %v587
          %v667 = vunpack.c.h.b16 %v587
          %v668 = vunpack.c.l.b16 %v588
          %v669 = vpack.c.b16 %v624, %v621
          %v670 = vpack.c.b16 %v625, %v622
          %v671 = vpack.c.b16 %v626, %v623
          %v672 = vpack.c.b16 %v630, %v627
          %v673 = vpack.c.b16 %v631, %v628
          %v674 = vpack.c.b16 %v632, %v629
          %v675 = vpack.c.b16 %v636, %v633
          %v676 = vpack.c.b16 %v637, %v634
          %v677 = vpack.c.b16 %v638, %v635
          %v678 = vpack.c.b16 %v642, %v639
          %v679 = vpack.c.b16 %v643, %v640
          %v680 = vpack.c.b16 %v644, %v641
          %v681 = vpack.c.b16 %v648, %v645
          %v682 = vpack.c.b16 %v649, %v646
          %v683 = vpack.c.b16 %v650, %v647
          %v684 = vpack.c.b16 %v654, %v651
          %v685 = vpack.c.b16 %v655, %v652
          %v686 = vpack.c.b16 %v656, %v653
          %v687 = vpack.c.b16 %v660, %v657
          %v688 = vpack.c.b16 %v661, %v658
          %v689 = vpack.c.b16 %v662, %v659
          %v690 = vpack.c.b16 %v666, %v663
          %v691 = vpack.c.b16 %v667, %v664
          %v692 = vpack.c.b16 %v668, %v665
          %717 = vmatprep.subr.bf16.mxu0 %v670
          %718 = vmatpush1.bf16.msra.mxu0 %v669
          %719 = vmatprep.subr.bf16.mxu0 %v673
          %720 = vmatpush1.bf16.msra.mxu0 %v672
          %721 = vmatprep.subr.bf16.mxu0 %v676
          %722 = vmatpush1.bf16.msra.mxu0 %v675
          %723 = vmatprep.subr.bf16.mxu0 %v679
          %724 = vmatpush1.bf16.msra.mxu0 %v678
          %725 = vmatprep.subr.bf16.mxu0 %v682
          %726 = vmatpush1.bf16.msra.mxu0 %v681
          %727 = vmatprep.subr.bf16.mxu0 %v685
          %728 = vmatpush1.bf16.msra.mxu0 %v684
          %729 = vmatprep.subr.bf16.mxu0 %v688
          %730 = vmatpush1.bf16.msra.mxu0 %v687
          %731 = vmatprep.subr.bf16.mxu0 %v691
          %732 = vmatpush1.bf16.msra.mxu0 %v690
          %733 = vmatprep.subr.bf16.mxu0 0
          %734 = vmatpush1.bf16.msra.mxu0 0
          %735 = vmatprep.subr.bf16.mxu0 0
          %736 = vmatpush1.bf16.msra.mxu0 0
          %737 = vmatprep.subr.bf16.mxu0 0
          %738 = vmatpush1.bf16.msra.mxu0 0
          %739 = vmatprep.subr.bf16.mxu0 0
          %740 = vmatpush1.bf16.msra.mxu0 0
          %741 = vmatprep.subr.bf16.mxu0 0
          %742 = vmatpush1.bf16.msra.mxu0 0
          %743 = vmatprep.subr.bf16.mxu0 0
          %744 = vmatpush1.bf16.msra.mxu0 0
          %745 = vmatprep.subr.bf16.mxu0 0
          %746 = vmatpush1.bf16.msra.mxu0 0
          %747 = vmatprep.subr.bf16.mxu0 0
          %748 = vmatpush1.bf16.msra.mxu0 0
          %749 = vmatprep.mubr.bf16.mxu0 0
          %750 = vmatmul.mubr.bf16.gmra.mrb[0].mxu0 %v556
          %v751 = vpop.f32.mrb[0].mxu0
          %v752 = vadd.f32 0.0, %v751
          %v753 = vpop.f32.mrb[0].mxu0
          %v754 = vadd.f32 0.0, %v753
          %v755 = vpop.f32.mrb[0].mxu0
          %v756 = vadd.f32 0.0, %v755
          %v757 = vpop.f32.mrb[0].mxu0
          %v758 = vadd.f32 0.0, %v757
          %759 = vdwg.mxu0
          %760 = vmatprep.subr.bf16.mxu0 0
          %761 = vmatpush1.bf16.msra.mxu0 %v671
          %762 = vmatprep.subr.bf16.mxu0 0
          %763 = vmatpush1.bf16.msra.mxu0 %v674
          %764 = vmatprep.subr.bf16.mxu0 0
          %765 = vmatpush1.bf16.msra.mxu0 %v677
          %766 = vmatprep.subr.bf16.mxu0 0
          %767 = vmatpush1.bf16.msra.mxu0 %v680
          %768 = vmatprep.subr.bf16.mxu0 0
          %769 = vmatpush1.bf16.msra.mxu0 %v683
          %770 = vmatprep.subr.bf16.mxu0 0
          %771 = vmatpush1.bf16.msra.mxu0 %v686
          %772 = vmatprep.subr.bf16.mxu0 0
          %773 = vmatpush1.bf16.msra.mxu0 %v689
          %774 = vmatprep.subr.bf16.mxu0 0
          %775 = vmatpush1.bf16.msra.mxu0 %v692
          %776 = vmatprep.subr.bf16.mxu0 0
          %777 = vmatpush1.bf16.msra.mxu0 0
          %778 = vmatprep.subr.bf16.mxu0 0
          %779 = vmatpush1.bf16.msra.mxu0 0
          %780 = vmatprep.subr.bf16.mxu0 0
          %781 = vmatpush1.bf16.msra.mxu0 0
          %782 = vmatprep.subr.bf16.mxu0 0
          %783 = vmatpush1.bf16.msra.mxu0 0
          %784 = vmatprep.subr.bf16.mxu0 0
          %785 = vmatpush1.bf16.msra.mxu0 0
          %786 = vmatprep.subr.bf16.mxu0 0
          %787 = vmatpush1.bf16.msra.mxu0 0
          %788 = vmatprep.subr.bf16.mxu0 0
          %789 = vmatpush1.bf16.msra.mxu0 0
          %790 = vmatprep.subr.bf16.mxu0 0
          %791 = vmatpush1.bf16.msra.mxu0 0
          %792 = vmatprep.mubr.bf16.mxu0 0
          %793 = vmatmul.mubr.bf16.gmra.mrb[0].mxu0 %v556
          %v794 = vpop.f32.mrb[0].mxu0
          %v795 = vadd.f32 0.0, %v794
          %v796 = vpop.f32.mrb[0].mxu0
          %v797 = vpop.f32.mrb[0].mxu0
          %v798 = vadd.f32 0.0, %v797
          %v799 = vpop.f32.mrb[0].mxu0
          %800 = vdwg.mxu0
          %v801 = vld [vmem:[#allocation7] sm:$0x7]
          %v802 = vadd.f32 %v752, %v754
          %v803 = vadd.f32 %v802, %v795
          %804 = vadd.xlane.f32.xlu0 %v803
          %v805 = vpop.xlane.xlu0 %804
          %v806 = vadd.f32 %v756, %v758
          %v807 = vadd.f32 %v806, %v798
          %808 = vadd.xlane.f32.xlu0 %v807
          %v809 = vpop.xlane.xlu0 %808
          %v810 = vrcp.pop 384.0
          %v811 = vmul.f32 %v805, %v810
          %v812 = vmul.f32 %v809, %v810
          %v813 = vsub.f32 %v752, %v811
          %v814 = vsub.f32 %v754, %v811
          %v815 = vsub.f32 %v795, %v811
          %v816 = vsub.f32 %v756, %v812
          %v817 = vsub.f32 %v758, %v812
          %v818 = vsub.f32 %v798, %v812
          %v819 = vmul.f32 %v813, %v813
          %v820 = vmul.f32 %v814, %v814
          %v821 = vmul.f32 %v815, %v815
          %v822 = vmul.f32 %v816, %v816
          %v823 = vmul.f32 %v817, %v817
          %v824 = vmul.f32 %v818, %v818
          %v825 = vadd.f32 %v819, %v820
          %v826 = vadd.f32 %v825, %v821
          %827 = vadd.xlane.f32.xlu0 %v826
          %v828 = vpop.xlane.xlu0 %827
          %v829 = vadd.f32 %v822, %v823
          %v830 = vadd.f32 %v829, %v824
          %831 = vadd.xlane.f32.xlu0 %v830
          %v832 = vpop.xlane.xlu0 %831
          %v833 = vmul.f32 %v828, %v810
          %v834 = vmul.f32 %v832, %v810
          %v835 = vadd.f32 %v833, 1e-05
          %v836 = vadd.f32 %v834, 1e-05
          %v837 = vrsqrt.pop %v835
          %v838 = vrsqrt.pop %v836
          %v839 = vmul.f32 %v813, %v837
          %v840 = vmul.f32 %v814, %v837
          %v841 = vmul.f32 %v815, %v837
          %v842 = vmul.f32 %v816, %v838
          %v843 = vmul.f32 %v817, %v838
          %v844 = vmul.f32 %v818, %v838
          %v846 = vlaneseq
          %v847 = vshrl.u32 %v846, 7
          %v848 = vsub.s32 0, %v847
          %v849 = vrot.slane %v801, %v848
          %v850 = vlaneseq
          %v851 = vshrl.u32 %v850, 7
          %v852 = vsub.s32 1, %v851
          %v853 = vrot.slane %v801, %v852
          %v854 = vlaneseq
          %v855 = vshrl.u32 %v854, 7
          %v856 = vsub.s32 2, %v855
          %v857 = vrot.slane %v801, %v856
          %v861 = vmul.f32 %v839, %v849
          %v862 = vmul.f32 %v840, %v853
          %v863 = vmul.f32 %v841, %v857
          %v864 = vmul.f32 %v842, %v849
          %v865 = vmul.f32 %v843, %v853
          %v866 = vmul.f32 %v844, %v857
          %867 = vst [vmem:[#allocation2] sm:$0xff] %v861
          %868 = vst [vmem:[#allocation2 + $0x8] sm:$0xff] %v862
          %869 = vst [vmem:[#allocation2 + $0x10] sm:$0xff] %v863
          %870 = vst [vmem:[#allocation2 + $0x18] sm:$0xff] %v864
          %871 = vst [vmem:[#allocation2 + $0x20] sm:$0xff] %v865
          %872 = vst [vmem:[#allocation2 + $0x28] sm:$0xff] %v866
        $region100: #{model_forward.1} parent=63 // pred_fallthru
          _
        %v873 = vld [vmem:[#allocation2] sm:$0xff]
        %v874 = vld [vmem:[#allocation2 + $0x8] sm:$0xff]
        %v875 = vld [vmem:[#allocation2 + $0x10] sm:$0xff]
        %v876 = vld [vmem:[#allocation2 + $0x18] sm:$0xff]
        %v877 = vld [vmem:[#allocation2 + $0x20] sm:$0xff]
        %v878 = vld [vmem:[#allocation2 + $0x28] sm:$0xff]
        %s879 = sshra.s32 %s31, 3
        %s880 = sand.u32 %s31, 7
        %s881 = sshra.s32 %s31, 3
        %s882 = sand.u32 %s31, 7
        %s883 = smul.u32 %s879, 3
        %s884 = smul.u32 %s883, 8
        %s885 = sadd.s32 %s884, %s882
        %s886 = scalar_lea.vmem [#allocation9], %s885
        %v887 = vld [vmem:[%s886] ss:$8 sm:$0x7]
        %v888 = vadd.f32 %v873, %v874
        %v889 = vadd.f32 %v888, %v875
        %890 = vadd.xlane.f32.xlu0 %v889
        %v891 = vpop.xlane.xlu0 %890
        %v892 = vadd.f32 %v876, %v877
        %v893 = vadd.f32 %v892, %v878
        %894 = vadd.xlane.f32.xlu0 %v893
        %v895 = vpop.xlane.xlu0 %894
        %v896 = vrcp.pop 384.0
        %v897 = vmul.f32 %v891, %v896
        %v898 = vmul.f32 %v895, %v896
        %v899 = vsub.f32 %v873, %v897
        %v900 = vsub.f32 %v874, %v897
        %v901 = vsub.f32 %v875, %v897
        %v902 = vsub.f32 %v876, %v898
        %v903 = vsub.f32 %v877, %v898
        %v904 = vsub.f32 %v878, %v898
        %v905 = vmul.f32 %v899, %v899
        %v906 = vmul.f32 %v900, %v900
        %v907 = vmul.f32 %v901, %v901
        %v908 = vmul.f32 %v902, %v902
        %v909 = vmul.f32 %v903, %v903
        %v910 = vmul.f32 %v904, %v904
        %v911 = vadd.f32 %v905, %v906
        %v912 = vadd.f32 %v911, %v907
        %913 = vadd.xlane.f32.xlu0 %v912
        %v914 = vpop.xlane.xlu0 %913
        %v915 = vadd.f32 %v908, %v909
        %v916 = vadd.f32 %v915, %v910
        %917 = vadd.xlane.f32.xlu0 %v916
        %v918 = vpop.xlane.xlu0 %917
        %v919 = vmul.f32 %v914, %v896
        %v920 = vmul.f32 %v918, %v896
        %v921 = vadd.f32 %v919, 1e-05
        %v922 = vadd.f32 %v920, 1e-05
        %v923 = vrsqrt.pop %v921
        %v924 = vrsqrt.pop %v922
        %v925 = vmul.f32 %v899, %v923
        %v926 = vmul.f32 %v900, %v923
        %v927 = vmul.f32 %v901, %v923
        %v928 = vmul.f32 %v902, %v924
        %v929 = vmul.f32 %v903, %v924
        %v930 = vmul.f32 %v904, %v924
        %v932 = vlaneseq
        %v933 = vshrl.u32 %v932, 7
        %v934 = vsub.s32 0, %v933
        %v935 = vrot.slane %v887, %v934
        %v936 = vlaneseq
        %v937 = vshrl.u32 %v936, 7
        %v938 = vsub.s32 1, %v937
        %v939 = vrot.slane %v887, %v938
        %v940 = vlaneseq
        %v941 = vshrl.u32 %v940, 7
        %v942 = vsub.s32 2, %v941
        %v943 = vrot.slane %v887, %v942
        %v947 = vmul.f32 %v925, %v935
        %v948 = vmul.f32 %v926, %v939
        %v949 = vmul.f32 %v927, %v943
        %v950 = vmul.f32 %v928, %v935
        %v951 = vmul.f32 %v929, %v939
        %v952 = vmul.f32 %v930, %v943
        %v953 = vpack.c.bf16 %v950, %v947
        %v954 = vpack.c.bf16 %v951, %v948
        %v955 = vpack.c.bf16 %v952, %v949
        %v956 = vld [vmem:[%s470] sm:$0xff]
        %v957 = vld [vmem:[%s470 + $0x8] sm:$0xff]
        %v958 = vld [vmem:[%s470 + $0x10] sm:$0xff]
        %v959 = vld [vmem:[%s470 + $0x18] sm:$0xff]
        %v960 = vld [vmem:[%s470 + $0x20] sm:$0xff]
        %v961 = vld [vmem:[%s470 + $0x28] sm:$0xff]
        %v962 = vld [vmem:[%s470 + $0x30] sm:$0xff]
        %v963 = vld [vmem:[%s470 + $0x38] sm:$0xff]
        %v964 = vld [vmem:[%s470 + $0x40] sm:$0xff]
        %v965 = vld [vmem:[%s470 + $0x48] sm:$0xff]
        %v966 = vld [vmem:[%s470 + $0x50] sm:$0xff]
        %v967 = vld [vmem:[%s470 + $0x58] sm:$0xff]
        %v968 = vld [vmem:[%s470 + $0x60] sm:$0xff]
        %v969 = vld [vmem:[%s470 + $0x68] sm:$0xff]
        %v970 = vld [vmem:[%s470 + $0x70] sm:$0xff]
        %v971 = vld [vmem:[%s470 + $0x78] sm:$0xff]
        %v972 = vld [vmem:[%s470 + $0x80] sm:$0xff]
        %v973 = vld [vmem:[%s470 + $0x88] sm:$0xff]
        %v974 = vld [vmem:[%s470 + $0x90] sm:$0xff]
        %v975 = vld [vmem:[%s470 + $0x98] sm:$0xff]
        %v976 = vld [vmem:[%s470 + $0xa0] sm:$0xff]
        %v977 = vld [vmem:[%s470 + $0xa8] sm:$0xff]
        %v978 = vld [vmem:[%s470 + $0xb0] sm:$0xff]
        %v979 = vld [vmem:[%s470 + $0xb8] sm:$0xff]
        %v980 = vld [vmem:[%s470 + $0xc0] sm:$0xff]
        %v981 = vld [vmem:[%s470 + $0xc8] sm:$0xff]
        %v982 = vld [vmem:[%s470 + $0xd0] sm:$0xff]
        %v983 = vld [vmem:[%s470 + $0xd8] sm:$0xff]
        %v984 = vld [vmem:[%s470 + $0xe0] sm:$0xff]
        %v985 = vld [vmem:[%s470 + $0xe8] sm:$0xff]
        %v986 = vld [vmem:[%s470 + $0xf0] sm:$0xff]
        %v987 = vld [vmem:[%s470 + $0xf8] sm:$0xff]
        %v988 = vld [vmem:[%s470 + $0x100] sm:$0xff]
        %v989 = vld [vmem:[%s470 + $0x108] sm:$0xff]
        %v990 = vld [vmem:[%s470 + $0x110] sm:$0xff]
        %v991 = vld [vmem:[%s470 + $0x118] sm:$0xff]
        %v992 = vld [vmem:[%s470 + $0x120] sm:$0xff]
        %v993 = vld [vmem:[%s470 + $0x128] sm:$0xff]
        %v994 = vld [vmem:[%s470 + $0x130] sm:$0xff]
        %v995 = vld [vmem:[%s470 + $0x138] sm:$0xff]
        %v996 = vld [vmem:[%s470 + $0x140] sm:$0xff]
        %v997 = vld [vmem:[%s470 + $0x148] sm:$0xff]
        %v998 = vld [vmem:[%s470 + $0x150] sm:$0xff]
        %v999 = vld [vmem:[%s470 + $0x158] sm:$0xff]
        %v1000 = vld [vmem:[%s470 + $0x160] sm:$0xff]
        %v1001 = vld [vmem:[%s470 + $0x168] sm:$0xff]
        %v1002 = vld [vmem:[%s470 + $0x170] sm:$0xff]
        %v1003 = vld [vmem:[%s470 + $0x178] sm:$0xff]
        %v1004 = vld [vmem:[%s470 + $0x180] sm:$0xff]
        %v1005 = vld [vmem:[%s470 + $0x188] sm:$0xff]
        %v1006 = vld [vmem:[%s470 + $0x190] sm:$0xff]
        %v1007 = vld [vmem:[%s470 + $0x198] sm:$0xff]
        %v1008 = vld [vmem:[%s470 + $0x1a0] sm:$0xff]
        %v1009 = vld [vmem:[%s470 + $0x1a8] sm:$0xff]
        %v1010 = vld [vmem:[%s470 + $0x1b0] sm:$0xff]
        %v1011 = vld [vmem:[%s470 + $0x1b8] sm:$0xff]
        %v1012 = vld [vmem:[%s470 + $0x1c0] sm:$0xff]
        %v1013 = vld [vmem:[%s470 + $0x1c8] sm:$0xff]
        %v1014 = vld [vmem:[%s470 + $0x1d0] sm:$0xff]
        %v1015 = vld [vmem:[%s470 + $0x1d8] sm:$0xff]
        %v1016 = vld [vmem:[%s470 + $0x1e0] sm:$0xff]
        %v1017 = vld [vmem:[%s470 + $0x1e8] sm:$0xff]
        %v1018 = vld [vmem:[%s470 + $0x1f0] sm:$0xff]
        %v1019 = vld [vmem:[%s470 + $0x1f8] sm:$0xff]
        %v1020 = vld [vmem:[%s470 + $0x200] sm:$0xff]
        %v1021 = vld [vmem:[%s470 + $0x208] sm:$0xff]
        %v1022 = vld [vmem:[%s470 + $0x210] sm:$0xff]
        %v1023 = vld [vmem:[%s470 + $0x218] sm:$0xff]
        %v1024 = vld [vmem:[%s470 + $0x220] sm:$0xff]
        %v1025 = vld [vmem:[%s470 + $0x228] sm:$0xff]
        %v1026 = vld [vmem:[%s470 + $0x230] sm:$0xff]
        %v1027 = vld [vmem:[%s470 + $0x238] sm:$0xff]
        %v1028 = vld [vmem:[%s470 + $0x240] sm:$0xff]
        %v1029 = vld [vmem:[%s470 + $0x248] sm:$0xff]
        %v1030 = vld [vmem:[%s470 + $0x250] sm:$0xff]
        %v1031 = vld [vmem:[%s470 + $0x258] sm:$0xff]
        %v1032 = vld [vmem:[%s470 + $0x260] sm:$0xff]
        %v1033 = vld [vmem:[%s470 + $0x268] sm:$0xff]
        %v1034 = vld [vmem:[%s470 + $0x270] sm:$0xff]
        %v1035 = vld [vmem:[%s470 + $0x278] sm:$0xff]
        %v1036 = vld [vmem:[%s470 + $0x280] sm:$0xff]
        %v1037 = vld [vmem:[%s470 + $0x288] sm:$0xff]
        %v1038 = vld [vmem:[%s470 + $0x290] sm:$0xff]
        %v1039 = vld [vmem:[%s470 + $0x298] sm:$0xff]
        %v1040 = vld [vmem:[%s470 + $0x2a0] sm:$0xff]
        %v1041 = vld [vmem:[%s470 + $0x2a8] sm:$0xff]
        %v1042 = vld [vmem:[%s470 + $0x2b0] sm:$0xff]
        %v1043 = vld [vmem:[%s470 + $0x2b8] sm:$0xff]
        %v1044 = vld [vmem:[%s470 + $0x2c0] sm:$0xff]
        %v1045 = vld [vmem:[%s470 + $0x2c8] sm:$0xff]
        %v1046 = vld [vmem:[%s470 + $0x2d0] sm:$0xff]
        %v1047 = vld [vmem:[%s470 + $0x2d8] sm:$0xff]
        %v1048 = vld [vmem:[%s470 + $0x2e0] sm:$0xff]
        %v1049 = vld [vmem:[%s470 + $0x2e8] sm:$0xff]
        %v1050 = vld [vmem:[%s470 + $0x2f0] sm:$0xff]
        %v1051 = vld [vmem:[%s470 + $0x2f8] sm:$0xff]
        %v1052 = vld [vmem:[%s470 + $0x300] sm:$0xff]
        %v1053 = vld [vmem:[%s470 + $0x308] sm:$0xff]
        %v1054 = vld [vmem:[%s470 + $0x310] sm:$0xff]
        %v1055 = vld [vmem:[%s470 + $0x318] sm:$0xff]
        %v1056 = vld [vmem:[%s470 + $0x320] sm:$0xff]
        %v1057 = vld [vmem:[%s470 + $0x328] sm:$0xff]
        %v1058 = vld [vmem:[%s470 + $0x330] sm:$0xff]
        %v1059 = vld [vmem:[%s470 + $0x338] sm:$0xff]
        %v1060 = vld [vmem:[%s470 + $0x340] sm:$0xff]
        %v1061 = vld [vmem:[%s470 + $0x348] sm:$0xff]
        %v1062 = vld [vmem:[%s470 + $0x350] sm:$0xff]
        %v1063 = vld [vmem:[%s470 + $0x358] sm:$0xff]
        %v1064 = vld [vmem:[%s470 + $0x360] sm:$0xff]
        %v1065 = vld [vmem:[%s470 + $0x368] sm:$0xff]
        %v1066 = vld [vmem:[%s470 + $0x370] sm:$0xff]
        %v1067 = vld [vmem:[%s470 + $0x378] sm:$0xff]
        %v1068 = vld [vmem:[%s470 + $0x380] sm:$0xff]
        %v1069 = vld [vmem:[%s470 + $0x388] sm:$0xff]
        %v1070 = vld [vmem:[%s470 + $0x390] sm:$0xff]
        %v1071 = vld [vmem:[%s470 + $0x398] sm:$0xff]
        %v1072 = vld [vmem:[%s470 + $0x3a0] sm:$0xff]
        %v1073 = vld [vmem:[%s470 + $0x3a8] sm:$0xff]
        %v1074 = vld [vmem:[%s470 + $0x3b0] sm:$0xff]
        %v1075 = vld [vmem:[%s470 + $0x3b8] sm:$0xff]
        %v1076 = vld [vmem:[%s470 + $0x3c0] sm:$0xff]
        %v1077 = vld [vmem:[%s470 + $0x3c8] sm:$0xff]
        %v1078 = vld [vmem:[%s470 + $0x3d0] sm:$0xff]
        %v1079 = vld [vmem:[%s470 + $0x3d8] sm:$0xff]
        %v1080 = vld [vmem:[%s470 + $0x3e0] sm:$0xff]
        %v1081 = vld [vmem:[%s470 + $0x3e8] sm:$0xff]
        %v1082 = vld [vmem:[%s470 + $0x3f0] sm:$0xff]
        %v1083 = vld [vmem:[%s470 + $0x3f8] sm:$0xff]
        %v1084 = vld [vmem:[%s470 + $0x400] sm:$0xff]
        %v1085 = vld [vmem:[%s470 + $0x408] sm:$0xff]
        %v1086 = vld [vmem:[%s470 + $0x410] sm:$0xff]
        %v1087 = vld [vmem:[%s470 + $0x418] sm:$0xff]
        %v1088 = vld [vmem:[%s470 + $0x420] sm:$0xff]
        %v1089 = vld [vmem:[%s470 + $0x428] sm:$0xff]
        %v1090 = vld [vmem:[%s470 + $0x430] sm:$0xff]
        %v1091 = vld [vmem:[%s470 + $0x438] sm:$0xff]
        %v1092 = vld [vmem:[%s470 + $0x440] sm:$0xff]
        %v1093 = vld [vmem:[%s470 + $0x448] sm:$0xff]
        %v1094 = vld [vmem:[%s470 + $0x450] sm:$0xff]
        %v1095 = vld [vmem:[%s470 + $0x458] sm:$0xff]
        %v1096 = vld [vmem:[%s470 + $0x460] sm:$0xff]
        %v1097 = vld [vmem:[%s470 + $0x468] sm:$0xff]
        %v1098 = vld [vmem:[%s470 + $0x470] sm:$0xff]
        %v1099 = vld [vmem:[%s470 + $0x478] sm:$0xff]
        %v1100 = vld [vmem:[%s470 + $0x480] sm:$0xff]
        %v1101 = vld [vmem:[%s470 + $0x488] sm:$0xff]
        %v1102 = vld [vmem:[%s470 + $0x490] sm:$0xff]
        %v1103 = vld [vmem:[%s470 + $0x498] sm:$0xff]
        %v1104 = vld [vmem:[%s470 + $0x4a0] sm:$0xff]
        %v1105 = vld [vmem:[%s470 + $0x4a8] sm:$0xff]
        %v1106 = vld [vmem:[%s470 + $0x4b0] sm:$0xff]
        %v1107 = vld [vmem:[%s470 + $0x4b8] sm:$0xff]
        %v1108 = vld [vmem:[%s470 + $0x4c0] sm:$0xff]
        %v1109 = vld [vmem:[%s470 + $0x4c8] sm:$0xff]
        %v1110 = vld [vmem:[%s470 + $0x4d0] sm:$0xff]
        %v1111 = vld [vmem:[%s470 + $0x4d8] sm:$0xff]
        %v1112 = vld [vmem:[%s470 + $0x4e0] sm:$0xff]
        %v1113 = vld [vmem:[%s470 + $0x4e8] sm:$0xff]
        %v1114 = vld [vmem:[%s470 + $0x4f0] sm:$0xff]
        %v1115 = vld [vmem:[%s470 + $0x4f8] sm:$0xff]
        %v1116 = vld [vmem:[%s470 + $0x500] sm:$0xff]
        %v1117 = vld [vmem:[%s470 + $0x508] sm:$0xff]
        %v1118 = vld [vmem:[%s470 + $0x510] sm:$0xff]
        %v1119 = vld [vmem:[%s470 + $0x518] sm:$0xff]
        %v1120 = vld [vmem:[%s470 + $0x520] sm:$0xff]
        %v1121 = vld [vmem:[%s470 + $0x528] sm:$0xff]
        %v1122 = vld [vmem:[%s470 + $0x530] sm:$0xff]
        %v1123 = vld [vmem:[%s470 + $0x538] sm:$0xff]
        %v1124 = vld [vmem:[%s470 + $0x540] sm:$0xff]
        %v1125 = vld [vmem:[%s470 + $0x548] sm:$0xff]
        %v1126 = vld [vmem:[%s470 + $0x550] sm:$0xff]
        %v1127 = vld [vmem:[%s470 + $0x558] sm:$0xff]
        %v1128 = vld [vmem:[%s470 + $0x560] sm:$0xff]
        %v1129 = vld [vmem:[%s470 + $0x568] sm:$0xff]
        %v1130 = vld [vmem:[%s470 + $0x570] sm:$0xff]
        %v1131 = vld [vmem:[%s470 + $0x578] sm:$0xff]
        %v1132 = vld [vmem:[%s470 + $0x580] sm:$0xff]
        %v1133 = vld [vmem:[%s470 + $0x588] sm:$0xff]
        %v1134 = vld [vmem:[%s470 + $0x590] sm:$0xff]
        %v1135 = vld [vmem:[%s470 + $0x598] sm:$0xff]
        %v1136 = vld [vmem:[%s470 + $0x5a0] sm:$0xff]
        %v1137 = vld [vmem:[%s470 + $0x5a8] sm:$0xff]
        %v1138 = vld [vmem:[%s470 + $0x5b0] sm:$0xff]
        %v1139 = vld [vmem:[%s470 + $0x5b8] sm:$0xff]
        %v1140 = vld [vmem:[%s470 + $0x5c0] sm:$0xff]
        %v1141 = vld [vmem:[%s470 + $0x5c8] sm:$0xff]
        %v1142 = vld [vmem:[%s470 + $0x5d0] sm:$0xff]
        %v1143 = vld [vmem:[%s470 + $0x5d8] sm:$0xff]
        %v1144 = vld [vmem:[%s470 + $0x5e0] sm:$0xff]
        %v1145 = vld [vmem:[%s470 + $0x5e8] sm:$0xff]
        %v1146 = vld [vmem:[%s470 + $0x5f0] sm:$0xff]
        %v1147 = vld [vmem:[%s470 + $0x5f8] sm:$0xff]
        %v1148 = vld [vmem:[%s470 + $0x600] sm:$0xff]
        %v1149 = vld [vmem:[%s470 + $0x608] sm:$0xff]
        %v1150 = vld [vmem:[%s470 + $0x610] sm:$0xff]
        %v1151 = vld [vmem:[%s470 + $0x618] sm:$0xff]
        %v1152 = vld [vmem:[%s470 + $0x620] sm:$0xff]
        %v1153 = vld [vmem:[%s470 + $0x628] sm:$0xff]
        %v1154 = vld [vmem:[%s470 + $0x630] sm:$0xff]
        %v1155 = vld [vmem:[%s470 + $0x638] sm:$0xff]
        %v1156 = vld [vmem:[%s470 + $0x640] sm:$0xff]
        %v1157 = vld [vmem:[%s470 + $0x648] sm:$0xff]
        %v1158 = vld [vmem:[%s470 + $0x650] sm:$0xff]
        %v1159 = vld [vmem:[%s470 + $0x658] sm:$0xff]
        %v1160 = vld [vmem:[%s470 + $0x660] sm:$0xff]
        %v1161 = vld [vmem:[%s470 + $0x668] sm:$0xff]
        %v1162 = vld [vmem:[%s470 + $0x670] sm:$0xff]
        %v1163 = vld [vmem:[%s470 + $0x678] sm:$0xff]
        %v1164 = vld [vmem:[%s470 + $0x680] sm:$0xff]
        %v1165 = vld [vmem:[%s470 + $0x688] sm:$0xff]
        %v1166 = vld [vmem:[%s470 + $0x690] sm:$0xff]
        %v1167 = vld [vmem:[%s470 + $0x698] sm:$0xff]
        %v1168 = vld [vmem:[%s470 + $0x6a0] sm:$0xff]
        %v1169 = vld [vmem:[%s470 + $0x6a8] sm:$0xff]
        %v1170 = vld [vmem:[%s470 + $0x6b0] sm:$0xff]
        %v1171 = vld [vmem:[%s470 + $0x6b8] sm:$0xff]
        %v1172 = vld [vmem:[%s470 + $0x6c0] sm:$0xff]
        %v1173 = vld [vmem:[%s470 + $0x6c8] sm:$0xff]
        %v1174 = vld [vmem:[%s470 + $0x6d0] sm:$0xff]
        %v1175 = vld [vmem:[%s470 + $0x6d8] sm:$0xff]
        %v1176 = vld [vmem:[%s470 + $0x6e0] sm:$0xff]
        %v1177 = vld [vmem:[%s470 + $0x6e8] sm:$0xff]
        %v1178 = vld [vmem:[%s470 + $0x6f0] sm:$0xff]
        %v1179 = vld [vmem:[%s470 + $0x6f8] sm:$0xff]
        %v1180 = vld [vmem:[%s470 + $0x700] sm:$0xff]
        %v1181 = vld [vmem:[%s470 + $0x708] sm:$0xff]
        %v1182 = vld [vmem:[%s470 + $0x710] sm:$0xff]
        %v1183 = vld [vmem:[%s470 + $0x718] sm:$0xff]
        %v1184 = vld [vmem:[%s470 + $0x720] sm:$0xff]
        %v1185 = vld [vmem:[%s470 + $0x728] sm:$0xff]
        %v1186 = vld [vmem:[%s470 + $0x730] sm:$0xff]
        %v1187 = vld [vmem:[%s470 + $0x738] sm:$0xff]
        %v1188 = vld [vmem:[%s470 + $0x740] sm:$0xff]
        %v1189 = vld [vmem:[%s470 + $0x748] sm:$0xff]
        %v1190 = vld [vmem:[%s470 + $0x750] sm:$0xff]
        %v1191 = vld [vmem:[%s470 + $0x758] sm:$0xff]
        %v1192 = vld [vmem:[%s470 + $0x760] sm:$0xff]
        %v1193 = vld [vmem:[%s470 + $0x768] sm:$0xff]
        %v1194 = vld [vmem:[%s470 + $0x770] sm:$0xff]
        %v1195 = vld [vmem:[%s470 + $0x778] sm:$0xff]
        %v1196 = vld [vmem:[%s470 + $0x780] sm:$0xff]
        %v1197 = vld [vmem:[%s470 + $0x788] sm:$0xff]
        %v1198 = vld [vmem:[%s470 + $0x790] sm:$0xff]
        %v1199 = vld [vmem:[%s470 + $0x798] sm:$0xff]
        %v1200 = vld [vmem:[%s470 + $0x7a0] sm:$0xff]
        %v1201 = vld [vmem:[%s470 + $0x7a8] sm:$0xff]
        %v1202 = vld [vmem:[%s470 + $0x7b0] sm:$0xff]
        %v1203 = vld [vmem:[%s470 + $0x7b8] sm:$0xff]
        %v1204 = vld [vmem:[%s470 + $0x7c0] sm:$0xff]
        %v1205 = vld [vmem:[%s470 + $0x7c8] sm:$0xff]
        %v1206 = vld [vmem:[%s470 + $0x7d0] sm:$0xff]
        %v1207 = vld [vmem:[%s470 + $0x7d8] sm:$0xff]
        %v1208 = vld [vmem:[%s470 + $0x7e0] sm:$0xff]
        %v1209 = vld [vmem:[%s470 + $0x7e8] sm:$0xff]
        %v1210 = vld [vmem:[%s470 + $0x7f0] sm:$0xff]
        %v1211 = vld [vmem:[%s470 + $0x7f8] sm:$0xff]
        %v1212 = vld [vmem:[%s470 + $0x800] sm:$0xff]
        %v1213 = vld [vmem:[%s470 + $0x808] sm:$0xff]
        %v1214 = vld [vmem:[%s470 + $0x810] sm:$0xff]
        %v1215 = vld [vmem:[%s470 + $0x818] sm:$0xff]
        %v1216 = vld [vmem:[%s470 + $0x820] sm:$0xff]
        %v1217 = vld [vmem:[%s470 + $0x828] sm:$0xff]
        %v1218 = vld [vmem:[%s470 + $0x830] sm:$0xff]
        %v1219 = vld [vmem:[%s470 + $0x838] sm:$0xff]
        %v1220 = vld [vmem:[%s470 + $0x840] sm:$0xff]
        %v1221 = vld [vmem:[%s470 + $0x848] sm:$0xff]
        %v1222 = vld [vmem:[%s470 + $0x850] sm:$0xff]
        %v1223 = vld [vmem:[%s470 + $0x858] sm:$0xff]
        %v1224 = vld [vmem:[%s470 + $0x860] sm:$0xff]
        %v1225 = vld [vmem:[%s470 + $0x868] sm:$0xff]
        %v1226 = vld [vmem:[%s470 + $0x870] sm:$0xff]
        %v1227 = vld [vmem:[%s470 + $0x878] sm:$0xff]
        %v1228 = vld [vmem:[%s470 + $0x880] sm:$0xff]
        %v1229 = vld [vmem:[%s470 + $0x888] sm:$0xff]
        %v1230 = vld [vmem:[%s470 + $0x890] sm:$0xff]
        %v1231 = vld [vmem:[%s470 + $0x898] sm:$0xff]
        %v1232 = vld [vmem:[%s470 + $0x8a0] sm:$0xff]
        %v1233 = vld [vmem:[%s470 + $0x8a8] sm:$0xff]
        %v1234 = vld [vmem:[%s470 + $0x8b0] sm:$0xff]
        %v1235 = vld [vmem:[%s470 + $0x8b8] sm:$0xff]
        %v1236 = vld [vmem:[%s470 + $0x8c0] sm:$0xff]
        %v1237 = vld [vmem:[%s470 + $0x8c8] sm:$0xff]
        %v1238 = vld [vmem:[%s470 + $0x8d0] sm:$0xff]
        %v1239 = vld [vmem:[%s470 + $0x8d8] sm:$0xff]
        %v1240 = vld [vmem:[%s470 + $0x8e0] sm:$0xff]
        %v1241 = vld [vmem:[%s470 + $0x8e8] sm:$0xff]
        %v1242 = vld [vmem:[%s470 + $0x8f0] sm:$0xff]
        %v1243 = vld [vmem:[%s470 + $0x8f8] sm:$0xff]
        %v1244 = vld [vmem:[%s470 + $0x900] sm:$0xff]
        %v1245 = vld [vmem:[%s470 + $0x908] sm:$0xff]
        %v1246 = vld [vmem:[%s470 + $0x910] sm:$0xff]
        %v1247 = vld [vmem:[%s470 + $0x918] sm:$0xff]
        %v1248 = vld [vmem:[%s470 + $0x920] sm:$0xff]
        %v1249 = vld [vmem:[%s470 + $0x928] sm:$0xff]
        %v1250 = vld [vmem:[%s470 + $0x930] sm:$0xff]
        %v1251 = vld [vmem:[%s470 + $0x938] sm:$0xff]
        %v1252 = vld [vmem:[%s470 + $0x940] sm:$0xff]
        %v1253 = vld [vmem:[%s470 + $0x948] sm:$0xff]
        %v1254 = vld [vmem:[%s470 + $0x950] sm:$0xff]
        %v1255 = vld [vmem:[%s470 + $0x958] sm:$0xff]
        %v1256 = vld [vmem:[%s470 + $0x960] sm:$0xff]
        %v1257 = vld [vmem:[%s470 + $0x968] sm:$0xff]
        %v1258 = vld [vmem:[%s470 + $0x970] sm:$0xff]
        %v1259 = vld [vmem:[%s470 + $0x978] sm:$0xff]
        %v1260 = vld [vmem:[%s470 + $0x980] sm:$0xff]
        %v1261 = vld [vmem:[%s470 + $0x988] sm:$0xff]
        %v1262 = vld [vmem:[%s470 + $0x990] sm:$0xff]
        %v1263 = vld [vmem:[%s470 + $0x998] sm:$0xff]
        %v1264 = vld [vmem:[%s470 + $0x9a0] sm:$0xff]
        %v1265 = vld [vmem:[%s470 + $0x9a8] sm:$0xff]
        %v1266 = vld [vmem:[%s470 + $0x9b0] sm:$0xff]
        %v1267 = vld [vmem:[%s470 + $0x9b8] sm:$0xff]
        %v1268 = vld [vmem:[%s470 + $0x9c0] sm:$0xff]
        %v1269 = vld [vmem:[%s470 + $0x9c8] sm:$0xff]
        %v1270 = vld [vmem:[%s470 + $0x9d0] sm:$0xff]
        %v1271 = vld [vmem:[%s470 + $0x9d8] sm:$0xff]
        %v1272 = vld [vmem:[%s470 + $0x9e0] sm:$0xff]
        %v1273 = vld [vmem:[%s470 + $0x9e8] sm:$0xff]
        %v1274 = vld [vmem:[%s470 + $0x9f0] sm:$0xff]
        %v1275 = vld [vmem:[%s470 + $0x9f8] sm:$0xff]
        %v1276 = vld [vmem:[%s470 + $0xa00] sm:$0xff]
        %v1277 = vld [vmem:[%s470 + $0xa08] sm:$0xff]
        %v1278 = vld [vmem:[%s470 + $0xa10] sm:$0xff]
        %v1279 = vld [vmem:[%s470 + $0xa18] sm:$0xff]
        %v1280 = vld [vmem:[%s470 + $0xa20] sm:$0xff]
        %v1281 = vld [vmem:[%s470 + $0xa28] sm:$0xff]
        %v1282 = vld [vmem:[%s470 + $0xa30] sm:$0xff]
        %v1283 = vld [vmem:[%s470 + $0xa38] sm:$0xff]
        %v1284 = vld [vmem:[%s470 + $0xa40] sm:$0xff]
        %v1285 = vld [vmem:[%s470 + $0xa48] sm:$0xff]
        %v1286 = vld [vmem:[%s470 + $0xa50] sm:$0xff]
        %v1287 = vld [vmem:[%s470 + $0xa58] sm:$0xff]
        %v1288 = vld [vmem:[%s470 + $0xa60] sm:$0xff]
        %v1289 = vld [vmem:[%s470 + $0xa68] sm:$0xff]
        %v1290 = vld [vmem:[%s470 + $0xa70] sm:$0xff]
        %v1291 = vld [vmem:[%s470 + $0xa78] sm:$0xff]
        %v1628 = vunpack.c.l.b16 %v956
        %v1629 = vunpack.c.h.b16 %v956
        %v1630 = vunpack.c.l.b16 %v957
        %v1631 = vunpack.c.h.b16 %v957
        %v1632 = vunpack.c.l.b16 %v958
        %v1633 = vunpack.c.h.b16 %v958
        %v1634 = vunpack.c.l.b16 %v959
        %v1635 = vunpack.c.h.b16 %v959
        %v1636 = vunpack.c.l.b16 %v960
        %v1637 = vunpack.c.h.b16 %v960
        %v1638 = vunpack.c.l.b16 %v961
        %v1639 = vunpack.c.h.b16 %v961
        %v1640 = vunpack.c.l.b16 %v962
        %v1641 = vunpack.c.h.b16 %v962
        %v1642 = vunpack.c.l.b16 %v963
        %v1643 = vunpack.c.h.b16 %v963
        %v1644 = vunpack.c.l.b16 %v964
        %v1645 = vunpack.c.h.b16 %v964
        %v1646 = vunpack.c.l.b16 %v965
        %v1647 = vunpack.c.h.b16 %v965
        %v1648 = vunpack.c.l.b16 %v966
        %v1649 = vunpack.c.h.b16 %v966
        %v1650 = vunpack.c.l.b16 %v967
        %v1651 = vunpack.c.h.b16 %v967
        %v1652 = vunpack.c.l.b16 %v968
        %v1653 = vunpack.c.h.b16 %v968
        %v1654 = vunpack.c.l.b16 %v969
        %v1655 = vunpack.c.h.b16 %v969
        %v1656 = vunpack.c.l.b16 %v970
        %v1657 = vunpack.c.h.b16 %v970
        %v1658 = vunpack.c.l.b16 %v971
        %v1659 = vunpack.c.h.b16 %v971
        %v1660 = vunpack.c.l.b16 %v972
        %v1661 = vunpack.c.h.b16 %v972
        %v1662 = vunpack.c.l.b16 %v973
        %v1663 = vunpack.c.h.b16 %v973
        %v1664 = vunpack.c.l.b16 %v974
        %v1665 = vunpack.c.h.b16 %v974
        %v1666 = vunpack.c.l.b16 %v975
        %v1667 = vunpack.c.h.b16 %v975
        %v1668 = vunpack.c.l.b16 %v976
        %v1669 = vunpack.c.h.b16 %v976
        %v1670 = vunpack.c.l.b16 %v977
        %v1671 = vunpack.c.h.b16 %v977
        %v1672 = vunpack.c.l.b16 %v978
        %v1673 = vunpack.c.h.b16 %v978
        %v1674 = vunpack.c.l.b16 %v979
        %v1675 = vunpack.c.h.b16 %v979
        %v1676 = vunpack.c.l.b16 %v980
        %v1677 = vunpack.c.h.b16 %v980
        %v1678 = vunpack.c.l.b16 %v981
        %v1679 = vunpack.c.h.b16 %v981
        %v1680 = vunpack.c.l.b16 %v982
        %v1681 = vunpack.c.h.b16 %v982
        %v1682 = vunpack.c.l.b16 %v983
        %v1683 = vunpack.c.h.b16 %v983
        %v1684 = vunpack.c.l.b16 %v984
        %v1685 = vunpack.c.h.b16 %v984
        %v1686 = vunpack.c.l.b16 %v985
        %v1687 = vunpack.c.h.b16 %v985
        %v1688 = vunpack.c.l.b16 %v986
        %v1689 = vunpack.c.h.b16 %v986
        %v1690 = vunpack.c.l.b16 %v987
        %v1691 = vunpack.c.h.b16 %v987
        %v1692 = vunpack.c.l.b16 %v988
        %v1693 = vunpack.c.h.b16 %v988
        %v1694 = vunpack.c.l.b16 %v989
        %v1695 = vunpack.c.h.b16 %v989
        %v1696 = vunpack.c.l.b16 %v990
        %v1697 = vunpack.c.h.b16 %v990
        %v1698 = vunpack.c.l.b16 %v991
        %v1699 = vunpack.c.h.b16 %v991
        %v1700 = vunpack.c.l.b16 %v992
        %v1701 = vunpack.c.h.b16 %v992
        %v1702 = vunpack.c.l.b16 %v993
        %v1703 = vunpack.c.h.b16 %v993
        %v1704 = vunpack.c.l.b16 %v994
        %v1705 = vunpack.c.h.b16 %v994
        %v1706 = vunpack.c.l.b16 %v995
        %v1707 = vunpack.c.h.b16 %v995
        %v1708 = vunpack.c.l.b16 %v996
        %v1709 = vunpack.c.h.b16 %v996
        %v1710 = vunpack.c.l.b16 %v997
        %v1711 = vunpack.c.h.b16 %v997
        %v1712 = vunpack.c.l.b16 %v998
        %v1713 = vunpack.c.h.b16 %v998
        %v1714 = vunpack.c.l.b16 %v999
        %v1715 = vunpack.c.h.b16 %v999
        %v1716 = vunpack.c.l.b16 %v1000
        %v1717 = vunpack.c.h.b16 %v1000
        %v1718 = vunpack.c.l.b16 %v1001
        %v1719 = vunpack.c.h.b16 %v1001
        %v1720 = vunpack.c.l.b16 %v1002
        %v1721 = vunpack.c.h.b16 %v1002
        %v1722 = vunpack.c.l.b16 %v1003
        %v1723 = vunpack.c.h.b16 %v1003
        %v1724 = vunpack.c.l.b16 %v1004
        %v1725 = vunpack.c.h.b16 %v1004
        %v1726 = vunpack.c.l.b16 %v1005
        %v1727 = vunpack.c.h.b16 %v1005
        %v1728 = vunpack.c.l.b16 %v1006
        %v1729 = vunpack.c.h.b16 %v1006
        %v1730 = vunpack.c.l.b16 %v1007
        %v1731 = vunpack.c.h.b16 %v1007
        %v1732 = vunpack.c.l.b16 %v1008
        %v1733 = vunpack.c.h.b16 %v1008
        %v1734 = vunpack.c.l.b16 %v1009
        %v1735 = vunpack.c.h.b16 %v1009
        %v1736 = vunpack.c.l.b16 %v1010
        %v1737 = vunpack.c.h.b16 %v1010
        %v1738 = vunpack.c.l.b16 %v1011
        %v1739 = vunpack.c.h.b16 %v1011
        %v1740 = vunpack.c.l.b16 %v1012
        %v1741 = vunpack.c.h.b16 %v1012
        %v1742 = vunpack.c.l.b16 %v1013
        %v1743 = vunpack.c.h.b16 %v1013
        %v1744 = vunpack.c.l.b16 %v1014
        %v1745 = vunpack.c.h.b16 %v1014
        %v1746 = vunpack.c.l.b16 %v1015
        %v1747 = vunpack.c.h.b16 %v1015
        %v1748 = vunpack.c.l.b16 %v1016
        %v1749 = vunpack.c.h.b16 %v1016
        %v1750 = vunpack.c.l.b16 %v1017
        %v1751 = vunpack.c.h.b16 %v1017
        %v1752 = vunpack.c.l.b16 %v1018
        %v1753 = vunpack.c.h.b16 %v1018
        %v1754 = vunpack.c.l.b16 %v1019
        %v1755 = vunpack.c.h.b16 %v1019
        %v1756 = vunpack.c.l.b16 %v1020
        %v1757 = vunpack.c.h.b16 %v1020
        %v1758 = vunpack.c.l.b16 %v1021
        %v1759 = vunpack.c.h.b16 %v1021
        %v1760 = vunpack.c.l.b16 %v1022
        %v1761 = vunpack.c.h.b16 %v1022
        %v1762 = vunpack.c.l.b16 %v1023
        %v1763 = vunpack.c.h.b16 %v1023
        %v1764 = vunpack.c.l.b16 %v1024
        %v1765 = vunpack.c.h.b16 %v1024
        %v1766 = vunpack.c.l.b16 %v1025
        %v1767 = vunpack.c.h.b16 %v1025
        %v1768 = vunpack.c.l.b16 %v1026
        %v1769 = vunpack.c.h.b16 %v1026
        %v1770 = vunpack.c.l.b16 %v1027
        %v1771 = vunpack.c.h.b16 %v1027
        %v1772 = vunpack.c.l.b16 %v1028
        %v1773 = vunpack.c.h.b16 %v1028
        %v1774 = vunpack.c.l.b16 %v1029
        %v1775 = vunpack.c.h.b16 %v1029
        %v1776 = vunpack.c.l.b16 %v1030
        %v1777 = vunpack.c.h.b16 %v1030
        %v1778 = vunpack.c.l.b16 %v1031
        %v1779 = vunpack.c.h.b16 %v1031
        %v1780 = vunpack.c.l.b16 %v1032
        %v1781 = vunpack.c.h.b16 %v1032
        %v1782 = vunpack.c.l.b16 %v1033
        %v1783 = vunpack.c.h.b16 %v1033
        %v1784 = vunpack.c.l.b16 %v1034
        %v1785 = vunpack.c.h.b16 %v1034
        %v1786 = vunpack.c.l.b16 %v1035
        %v1787 = vunpack.c.h.b16 %v1035
        %v1788 = vunpack.c.l.b16 %v1036
        %v1789 = vunpack.c.h.b16 %v1036
        %v1790 = vunpack.c.l.b16 %v1037
        %v1791 = vunpack.c.h.b16 %v1037
        %v1792 = vunpack.c.l.b16 %v1038
        %v1793 = vunpack.c.h.b16 %v1038
        %v1794 = vunpack.c.l.b16 %v1039
        %v1795 = vunpack.c.h.b16 %v1039
        %v1796 = vunpack.c.l.b16 %v1040
        %v1797 = vunpack.c.h.b16 %v1040
        %v1798 = vunpack.c.l.b16 %v1041
        %v1799 = vunpack.c.h.b16 %v1041
        %v1800 = vunpack.c.l.b16 %v1042
        %v1801 = vunpack.c.h.b16 %v1042
        %v1802 = vunpack.c.l.b16 %v1043
        %v1803 = vunpack.c.h.b16 %v1043
        %v1804 = vunpack.c.l.b16 %v1044
        %v1805 = vunpack.c.h.b16 %v1044
        %v1806 = vunpack.c.l.b16 %v1045
        %v1807 = vunpack.c.h.b16 %v1045
        %v1808 = vunpack.c.l.b16 %v1046
        %v1809 = vunpack.c.h.b16 %v1046
        %v1810 = vunpack.c.l.b16 %v1047
        %v1811 = vunpack.c.h.b16 %v1047
        %v1812 = vunpack.c.l.b16 %v1048
        %v1813 = vunpack.c.h.b16 %v1048
        %v1814 = vunpack.c.l.b16 %v1049
        %v1815 = vunpack.c.h.b16 %v1049
        %v1816 = vunpack.c.l.b16 %v1050
        %v1817 = vunpack.c.h.b16 %v1050
        %v1818 = vunpack.c.l.b16 %v1051
        %v1819 = vunpack.c.h.b16 %v1051
        %v1820 = vunpack.c.l.b16 %v1052
        %v1821 = vunpack.c.h.b16 %v1052
        %v1822 = vunpack.c.l.b16 %v1053
        %v1823 = vunpack.c.h.b16 %v1053
        %v1824 = vunpack.c.l.b16 %v1054
        %v1825 = vunpack.c.h.b16 %v1054
        %v1826 = vunpack.c.l.b16 %v1055
        %v1827 = vunpack.c.h.b16 %v1055
        %v1828 = vunpack.c.l.b16 %v1056
        %v1829 = vunpack.c.h.b16 %v1056
        %v1830 = vunpack.c.l.b16 %v1057
        %v1831 = vunpack.c.h.b16 %v1057
        %v1832 = vunpack.c.l.b16 %v1058
        %v1833 = vunpack.c.h.b16 %v1058
        %v1834 = vunpack.c.l.b16 %v1059
        %v1835 = vunpack.c.h.b16 %v1059
        %v1836 = vunpack.c.l.b16 %v1060
        %v1837 = vunpack.c.h.b16 %v1060
        %v1838 = vunpack.c.l.b16 %v1061
        %v1839 = vunpack.c.h.b16 %v1061
        %v1840 = vunpack.c.l.b16 %v1062
        %v1841 = vunpack.c.h.b16 %v1062
        %v1842 = vunpack.c.l.b16 %v1063
        %v1843 = vunpack.c.h.b16 %v1063
        %v1844 = vunpack.c.l.b16 %v1064
        %v1845 = vunpack.c.h.b16 %v1064
        %v1846 = vunpack.c.l.b16 %v1065
        %v1847 = vunpack.c.h.b16 %v1065
        %v1848 = vunpack.c.l.b16 %v1066
        %v1849 = vunpack.c.h.b16 %v1066
        %v1850 = vunpack.c.l.b16 %v1067
        %v1851 = vunpack.c.h.b16 %v1067
        %v1852 = vunpack.c.l.b16 %v1068
        %v1853 = vunpack.c.h.b16 %v1068
        %v1854 = vunpack.c.l.b16 %v1069
        %v1855 = vunpack.c.h.b16 %v1069
        %v1856 = vunpack.c.l.b16 %v1070
        %v1857 = vunpack.c.h.b16 %v1070
        %v1858 = vunpack.c.l.b16 %v1071
        %v1859 = vunpack.c.h.b16 %v1071
        %v1860 = vunpack.c.l.b16 %v1072
        %v1861 = vunpack.c.h.b16 %v1072
        %v1862 = vunpack.c.l.b16 %v1073
        %v1863 = vunpack.c.h.b16 %v1073
        %v1864 = vunpack.c.l.b16 %v1074
        %v1865 = vunpack.c.h.b16 %v1074
        %v1866 = vunpack.c.l.b16 %v1075
        %v1867 = vunpack.c.h.b16 %v1075
        %v1868 = vunpack.c.l.b16 %v1076
        %v1869 = vunpack.c.h.b16 %v1076
        %v1870 = vunpack.c.l.b16 %v1077
        %v1871 = vunpack.c.h.b16 %v1077
        %v1872 = vunpack.c.l.b16 %v1078
        %v1873 = vunpack.c.h.b16 %v1078
        %v1874 = vunpack.c.l.b16 %v1079
        %v1875 = vunpack.c.h.b16 %v1079
        %v1876 = vunpack.c.l.b16 %v1080
        %v1877 = vunpack.c.h.b16 %v1080
        %v1878 = vunpack.c.l.b16 %v1081
        %v1879 = vunpack.c.h.b16 %v1081
        %v1880 = vunpack.c.l.b16 %v1082
        %v1881 = vunpack.c.h.b16 %v1082
        %v1882 = vunpack.c.l.b16 %v1083
        %v1883 = vunpack.c.h.b16 %v1083
        %v1884 = vunpack.c.l.b16 %v1084
        %v1885 = vunpack.c.h.b16 %v1084
        %v1886 = vunpack.c.l.b16 %v1085
        %v1887 = vunpack.c.h.b16 %v1085
        %v1888 = vunpack.c.l.b16 %v1086
        %v1889 = vunpack.c.h.b16 %v1086
        %v1890 = vunpack.c.l.b16 %v1087
        %v1891 = vunpack.c.h.b16 %v1087
        %v1892 = vunpack.c.l.b16 %v1088
        %v1893 = vunpack.c.h.b16 %v1088
        %v1894 = vunpack.c.l.b16 %v1089
        %v1895 = vunpack.c.h.b16 %v1089
        %v1896 = vunpack.c.l.b16 %v1090
        %v1897 = vunpack.c.h.b16 %v1090
        %v1898 = vunpack.c.l.b16 %v1091
        %v1899 = vunpack.c.h.b16 %v1091
        %v1900 = vunpack.c.l.b16 %v1092
        %v1901 = vunpack.c.h.b16 %v1092
        %v1902 = vunpack.c.l.b16 %v1093
        %v1903 = vunpack.c.h.b16 %v1093
        %v1904 = vunpack.c.l.b16 %v1094
        %v1905 = vunpack.c.h.b16 %v1094
        %v1906 = vunpack.c.l.b16 %v1095
        %v1907 = vunpack.c.h.b16 %v1095
        %v1908 = vunpack.c.l.b16 %v1096
        %v1909 = vunpack.c.h.b16 %v1096
        %v1910 = vunpack.c.l.b16 %v1097
        %v1911 = vunpack.c.h.b16 %v1097
        %v1912 = vunpack.c.l.b16 %v1098
        %v1913 = vunpack.c.h.b16 %v1098
        %v1914 = vunpack.c.l.b16 %v1099
        %v1915 = vunpack.c.h.b16 %v1099
        %v1916 = vunpack.c.l.b16 %v1100
        %v1917 = vunpack.c.h.b16 %v1100
        %v1918 = vunpack.c.l.b16 %v1101
        %v1919 = vunpack.c.h.b16 %v1101
        %v1920 = vunpack.c.l.b16 %v1102
        %v1921 = vunpack.c.h.b16 %v1102
        %v1922 = vunpack.c.l.b16 %v1103
        %v1923 = vunpack.c.h.b16 %v1103
        %v1924 = vunpack.c.l.b16 %v1104
        %v1925 = vunpack.c.h.b16 %v1104
        %v1926 = vunpack.c.l.b16 %v1105
        %v1927 = vunpack.c.h.b16 %v1105
        %v1928 = vunpack.c.l.b16 %v1106
        %v1929 = vunpack.c.h.b16 %v1106
        %v1930 = vunpack.c.l.b16 %v1107
        %v1931 = vunpack.c.h.b16 %v1107
        %v1932 = vunpack.c.l.b16 %v1108
        %v1933 = vunpack.c.h.b16 %v1108
        %v1934 = vunpack.c.l.b16 %v1109
        %v1935 = vunpack.c.h.b16 %v1109
        %v1936 = vunpack.c.l.b16 %v1110
        %v1937 = vunpack.c.h.b16 %v1110
        %v1938 = vunpack.c.l.b16 %v1111
        %v1939 = vunpack.c.h.b16 %v1111
        %v1940 = vunpack.c.l.b16 %v1112
        %v1941 = vunpack.c.h.b16 %v1112
        %v1942 = vunpack.c.l.b16 %v1113
        %v1943 = vunpack.c.h.b16 %v1113
        %v1944 = vunpack.c.l.b16 %v1114
        %v1945 = vunpack.c.h.b16 %v1114
        %v1946 = vunpack.c.l.b16 %v1115
        %v1947 = vunpack.c.h.b16 %v1115
        %v1948 = vunpack.c.l.b16 %v1116
        %v1949 = vunpack.c.h.b16 %v1116
        %v1950 = vunpack.c.l.b16 %v1117
        %v1951 = vunpack.c.h.b16 %v1117
        %v1952 = vunpack.c.l.b16 %v1118
        %v1953 = vunpack.c.h.b16 %v1118
        %v1954 = vunpack.c.l.b16 %v1119
        %v1955 = vunpack.c.h.b16 %v1119
        %v1956 = vunpack.c.l.b16 %v1120
        %v1957 = vunpack.c.h.b16 %v1120
        %v1958 = vunpack.c.l.b16 %v1121
        %v1959 = vunpack.c.h.b16 %v1121
        %v1960 = vunpack.c.l.b16 %v1122
        %v1961 = vunpack.c.h.b16 %v1122
        %v1962 = vunpack.c.l.b16 %v1123
        %v1963 = vunpack.c.h.b16 %v1123
        %v1964 = vunpack.c.l.b16 %v1124
        %v1965 = vunpack.c.h.b16 %v1124
        %v1966 = vunpack.c.l.b16 %v1125
        %v1967 = vunpack.c.h.b16 %v1125
        %v1968 = vunpack.c.l.b16 %v1126
        %v1969 = vunpack.c.h.b16 %v1126
        %v1970 = vunpack.c.l.b16 %v1127
        %v1971 = vunpack.c.h.b16 %v1127
        %v1972 = vunpack.c.l.b16 %v1128
        %v1973 = vunpack.c.h.b16 %v1128
        %v1974 = vunpack.c.l.b16 %v1129
        %v1975 = vunpack.c.h.b16 %v1129
        %v1976 = vunpack.c.l.b16 %v1130
        %v1977 = vunpack.c.h.b16 %v1130
        %v1978 = vunpack.c.l.b16 %v1131
        %v1979 = vunpack.c.h.b16 %v1131
        %v1980 = vunpack.c.l.b16 %v1132
        %v1981 = vunpack.c.h.b16 %v1132
        %v1982 = vunpack.c.l.b16 %v1133
        %v1983 = vunpack.c.h.b16 %v1133
        %v1984 = vunpack.c.l.b16 %v1134
        %v1985 = vunpack.c.h.b16 %v1134
        %v1986 = vunpack.c.l.b16 %v1135
        %v1987 = vunpack.c.h.b16 %v1135
        %v1988 = vunpack.c.l.b16 %v1136
        %v1989 = vunpack.c.h.b16 %v1136
        %v1990 = vunpack.c.l.b16 %v1137
        %v1991 = vunpack.c.h.b16 %v1137
        %v1992 = vunpack.c.l.b16 %v1138
        %v1993 = vunpack.c.h.b16 %v1138
        %v1994 = vunpack.c.l.b16 %v1139
        %v1995 = vunpack.c.h.b16 %v1139
        %v1996 = vunpack.c.l.b16 %v1140
        %v1997 = vunpack.c.h.b16 %v1140
        %v1998 = vunpack.c.l.b16 %v1141
        %v1999 = vunpack.c.h.b16 %v1141
        %v2000 = vunpack.c.l.b16 %v1142
        %v2001 = vunpack.c.h.b16 %v1142
        %v2002 = vunpack.c.l.b16 %v1143
        %v2003 = vunpack.c.h.b16 %v1143
        %v2004 = vunpack.c.l.b16 %v1144
        %v2005 = vunpack.c.h.b16 %v1144
        %v2006 = vunpack.c.l.b16 %v1145
        %v2007 = vunpack.c.h.b16 %v1145
        %v2008 = vunpack.c.l.b16 %v1146
        %v2009 = vunpack.c.h.b16 %v1146
        %v2010 = vunpack.c.l.b16 %v1147
        %v2011 = vunpack.c.h.b16 %v1147
        %v2012 = vunpack.c.l.b16 %v1148
        %v2013 = vunpack.c.h.b16 %v1148
        %v2014 = vunpack.c.l.b16 %v1149
        %v2015 = vunpack.c.h.b16 %v1149
        %v2016 = vunpack.c.l.b16 %v1150
        %v2017 = vunpack.c.h.b16 %v1150
        %v2018 = vunpack.c.l.b16 %v1151
        %v2019 = vunpack.c.h.b16 %v1151
        %v2020 = vunpack.c.l.b16 %v1152
        %v2021 = vunpack.c.h.b16 %v1152
        %v2022 = vunpack.c.l.b16 %v1153
        %v2023 = vunpack.c.h.b16 %v1153
        %v2024 = vunpack.c.l.b16 %v1154
        %v2025 = vunpack.c.h.b16 %v1154
        %v2026 = vunpack.c.l.b16 %v1155
        %v2027 = vunpack.c.h.b16 %v1155
        %v2028 = vunpack.c.l.b16 %v1156
        %v2029 = vunpack.c.h.b16 %v1156
        %v2030 = vunpack.c.l.b16 %v1157
        %v2031 = vunpack.c.h.b16 %v1157
        %v2032 = vunpack.c.l.b16 %v1158
        %v2033 = vunpack.c.h.b16 %v1158
        %v2034 = vunpack.c.l.b16 %v1159
        %v2035 = vunpack.c.h.b16 %v1159
        %v2036 = vunpack.c.l.b16 %v1160
        %v2037 = vunpack.c.h.b16 %v1160
        %v2038 = vunpack.c.l.b16 %v1161
        %v2039 = vunpack.c.h.b16 %v1161
        %v2040 = vunpack.c.l.b16 %v1162
        %v2041 = vunpack.c.h.b16 %v1162
        %v2042 = vunpack.c.l.b16 %v1163
        %v2043 = vunpack.c.h.b16 %v1163
        %v2044 = vunpack.c.l.b16 %v1164
        %v2045 = vunpack.c.h.b16 %v1164
        %v2046 = vunpack.c.l.b16 %v1165
        %v2047 = vunpack.c.h.b16 %v1165
        %v2048 = vunpack.c.l.b16 %v1166
        %v2049 = vunpack.c.h.b16 %v1166
        %v2050 = vunpack.c.l.b16 %v1167
        %v2051 = vunpack.c.h.b16 %v1167
        %v2052 = vunpack.c.l.b16 %v1168
        %v2053 = vunpack.c.h.b16 %v1168
        %v2054 = vunpack.c.l.b16 %v1169
        %v2055 = vunpack.c.h.b16 %v1169
        %v2056 = vunpack.c.l.b16 %v1170
        %v2057 = vunpack.c.h.b16 %v1170
        %v2058 = vunpack.c.l.b16 %v1171
        %v2059 = vunpack.c.h.b16 %v1171
        %v2060 = vunpack.c.l.b16 %v1172
        %v2061 = vunpack.c.h.b16 %v1172
        %v2062 = vunpack.c.l.b16 %v1173
        %v2063 = vunpack.c.h.b16 %v1173
        %v2064 = vunpack.c.l.b16 %v1174
        %v2065 = vunpack.c.h.b16 %v1174
        %v2066 = vunpack.c.l.b16 %v1175
        %v2067 = vunpack.c.h.b16 %v1175
        %v2068 = vunpack.c.l.b16 %v1176
        %v2069 = vunpack.c.h.b16 %v1176
        %v2070 = vunpack.c.l.b16 %v1177
        %v2071 = vunpack.c.h.b16 %v1177
        %v2072 = vunpack.c.l.b16 %v1178
        %v2073 = vunpack.c.h.b16 %v1178
        %v2074 = vunpack.c.l.b16 %v1179
        %v2075 = vunpack.c.h.b16 %v1179
        %v2076 = vunpack.c.l.b16 %v1180
        %v2077 = vunpack.c.h.b16 %v1180
        %v2078 = vunpack.c.l.b16 %v1181
        %v2079 = vunpack.c.h.b16 %v1181
        %v2080 = vunpack.c.l.b16 %v1182
        %v2081 = vunpack.c.h.b16 %v1182
        %v2082 = vunpack.c.l.b16 %v1183
        %v2083 = vunpack.c.h.b16 %v1183
        %v2084 = vunpack.c.l.b16 %v1184
        %v2085 = vunpack.c.h.b16 %v1184
        %v2086 = vunpack.c.l.b16 %v1185
        %v2087 = vunpack.c.h.b16 %v1185
        %v2088 = vunpack.c.l.b16 %v1186
        %v2089 = vunpack.c.h.b16 %v1186
        %v2090 = vunpack.c.l.b16 %v1187
        %v2091 = vunpack.c.h.b16 %v1187
        %v2092 = vunpack.c.l.b16 %v1188
        %v2093 = vunpack.c.h.b16 %v1188
        %v2094 = vunpack.c.l.b16 %v1189
        %v2095 = vunpack.c.h.b16 %v1189
        %v2096 = vunpack.c.l.b16 %v1190
        %v2097 = vunpack.c.h.b16 %v1190
        %v2098 = vunpack.c.l.b16 %v1191
        %v2099 = vunpack.c.h.b16 %v1191
        %v2100 = vunpack.c.l.b16 %v1192
        %v2101 = vunpack.c.h.b16 %v1192
        %v2102 = vunpack.c.l.b16 %v1193
        %v2103 = vunpack.c.h.b16 %v1193
        %v2104 = vunpack.c.l.b16 %v1194
        %v2105 = vunpack.c.h.b16 %v1194
        %v2106 = vunpack.c.l.b16 %v1195
        %v2107 = vunpack.c.h.b16 %v1195
        %v2108 = vunpack.c.l.b16 %v1196
        %v2109 = vunpack.c.h.b16 %v1196
        %v2110 = vunpack.c.l.b16 %v1197
        %v2111 = vunpack.c.h.b16 %v1197
        %v2112 = vunpack.c.l.b16 %v1198
        %v2113 = vunpack.c.h.b16 %v1198
        %v2114 = vunpack.c.l.b16 %v1199
        %v2115 = vunpack.c.h.b16 %v1199
        %v2116 = vunpack.c.l.b16 %v1200
        %v2117 = vunpack.c.h.b16 %v1200
        %v2118 = vunpack.c.l.b16 %v1201
        %v2119 = vunpack.c.h.b16 %v1201
        %v2120 = vunpack.c.l.b16 %v1202
        %v2121 = vunpack.c.h.b16 %v1202
        %v2122 = vunpack.c.l.b16 %v1203
        %v2123 = vunpack.c.h.b16 %v1203
        %v2124 = vunpack.c.l.b16 %v1204
        %v2125 = vunpack.c.h.b16 %v1204
        %v2126 = vunpack.c.l.b16 %v1205
        %v2127 = vunpack.c.h.b16 %v1205
        %v2128 = vunpack.c.l.b16 %v1206
        %v2129 = vunpack.c.h.b16 %v1206
        %v2130 = vunpack.c.l.b16 %v1207
        %v2131 = vunpack.c.h.b16 %v1207
        %v2132 = vunpack.c.l.b16 %v1208
        %v2133 = vunpack.c.h.b16 %v1208
        %v2134 = vunpack.c.l.b16 %v1209
        %v2135 = vunpack.c.h.b16 %v1209
        %v2136 = vunpack.c.l.b16 %v1210
        %v2137 = vunpack.c.h.b16 %v1210
        %v2138 = vunpack.c.l.b16 %v1211
        %v2139 = vunpack.c.h.b16 %v1211
        %v2140 = vunpack.c.l.b16 %v1212
        %v2141 = vunpack.c.h.b16 %v1212
        %v2142 = vunpack.c.l.b16 %v1213
        %v2143 = vunpack.c.h.b16 %v1213
        %v2144 = vunpack.c.l.b16 %v1214
        %v2145 = vunpack.c.h.b16 %v1214
        %v2146 = vunpack.c.l.b16 %v1215
        %v2147 = vunpack.c.h.b16 %v1215
        %v2148 = vunpack.c.l.b16 %v1216
        %v2149 = vunpack.c.h.b16 %v1216
        %v2150 = vunpack.c.l.b16 %v1217
        %v2151 = vunpack.c.h.b16 %v1217
        %v2152 = vunpack.c.l.b16 %v1218
        %v2153 = vunpack.c.h.b16 %v1218
        %v2154 = vunpack.c.l.b16 %v1219
        %v2155 = vunpack.c.h.b16 %v1219
        %v2156 = vunpack.c.l.b16 %v1220
        %v2157 = vunpack.c.h.b16 %v1220
        %v2158 = vunpack.c.l.b16 %v1221
        %v2159 = vunpack.c.h.b16 %v1221
        %v2160 = vunpack.c.l.b16 %v1222
        %v2161 = vunpack.c.h.b16 %v1222
        %v2162 = vunpack.c.l.b16 %v1223
        %v2163 = vunpack.c.h.b16 %v1223
        %v2164 = vunpack.c.l.b16 %v1224
        %v2165 = vunpack.c.h.b16 %v1224
        %v2166 = vunpack.c.l.b16 %v1225
        %v2167 = vunpack.c.h.b16 %v1225
        %v2168 = vunpack.c.l.b16 %v1226
        %v2169 = vunpack.c.h.b16 %v1226
        %v2170 = vunpack.c.l.b16 %v1227
        %v2171 = vunpack.c.h.b16 %v1227
        %v2172 = vunpack.c.l.b16 %v1228
        %v2173 = vunpack.c.h.b16 %v1228
        %v2174 = vunpack.c.l.b16 %v1229
        %v2175 = vunpack.c.h.b16 %v1229
        %v2176 = vunpack.c.l.b16 %v1230
        %v2177 = vunpack.c.h.b16 %v1230
        %v2178 = vunpack.c.l.b16 %v1231
        %v2179 = vunpack.c.h.b16 %v1231
        %v2180 = vunpack.c.l.b16 %v1232
        %v2181 = vunpack.c.h.b16 %v1232
        %v2182 = vunpack.c.l.b16 %v1233
        %v2183 = vunpack.c.h.b16 %v1233
        %v2184 = vunpack.c.l.b16 %v1234
        %v2185 = vunpack.c.h.b16 %v1234
        %v2186 = vunpack.c.l.b16 %v1235
        %v2187 = vunpack.c.h.b16 %v1235
        %v2188 = vunpack.c.l.b16 %v1236
        %v2189 = vunpack.c.h.b16 %v1236
        %v2190 = vunpack.c.l.b16 %v1237
        %v2191 = vunpack.c.h.b16 %v1237
        %v2192 = vunpack.c.l.b16 %v1238
        %v2193 = vunpack.c.h.b16 %v1238
        %v2194 = vunpack.c.l.b16 %v1239
        %v2195 = vunpack.c.h.b16 %v1239
        %v2196 = vunpack.c.l.b16 %v1240
        %v2197 = vunpack.c.h.b16 %v1240
        %v2198 = vunpack.c.l.b16 %v1241
        %v2199 = vunpack.c.h.b16 %v1241
        %v2200 = vunpack.c.l.b16 %v1242
        %v2201 = vunpack.c.h.b16 %v1242
        %v2202 = vunpack.c.l.b16 %v1243
        %v2203 = vunpack.c.h.b16 %v1243
        %v2204 = vunpack.c.l.b16 %v1244
        %v2205 = vunpack.c.h.b16 %v1244
        %v2206 = vunpack.c.l.b16 %v1245
        %v2207 = vunpack.c.h.b16 %v1245
        %v2208 = vunpack.c.l.b16 %v1246
        %v2209 = vunpack.c.h.b16 %v1246
        %v2210 = vunpack.c.l.b16 %v1247
        %v2211 = vunpack.c.h.b16 %v1247
        %v2212 = vunpack.c.l.b16 %v1248
        %v2213 = vunpack.c.h.b16 %v1248
        %v2214 = vunpack.c.l.b16 %v1249
        %v2215 = vunpack.c.h.b16 %v1249
        %v2216 = vunpack.c.l.b16 %v1250
        %v2217 = vunpack.c.h.b16 %v1250
        %v2218 = vunpack.c.l.b16 %v1251
        %v2219 = vunpack.c.h.b16 %v1251
        %v2220 = vunpack.c.l.b16 %v1252
        %v2221 = vunpack.c.h.b16 %v1252
        %v2222 = vunpack.c.l.b16 %v1253
        %v2223 = vunpack.c.h.b16 %v1253
        %v2224 = vunpack.c.l.b16 %v1254
        %v2225 = vunpack.c.h.b16 %v1254
        %v2226 = vunpack.c.l.b16 %v1255
        %v2227 = vunpack.c.h.b16 %v1255
        %v2228 = vunpack.c.l.b16 %v1256
        %v2229 = vunpack.c.h.b16 %v1256
        %v2230 = vunpack.c.l.b16 %v1257
        %v2231 = vunpack.c.h.b16 %v1257
        %v2232 = vunpack.c.l.b16 %v1258
        %v2233 = vunpack.c.h.b16 %v1258
        %v2234 = vunpack.c.l.b16 %v1259
        %v2235 = vunpack.c.h.b16 %v1259
        %v2236 = vunpack.c.l.b16 %v1260
        %v2237 = vunpack.c.h.b16 %v1260
        %v2238 = vunpack.c.l.b16 %v1261
        %v2239 = vunpack.c.h.b16 %v1261
        %v2240 = vunpack.c.l.b16 %v1262
        %v2241 = vunpack.c.h.b16 %v1262
        %v2242 = vunpack.c.l.b16 %v1263
        %v2243 = vunpack.c.h.b16 %v1263
        %v2244 = vunpack.c.l.b16 %v1264
        %v2245 = vunpack.c.h.b16 %v1264
        %v2246 = vunpack.c.l.b16 %v1265
        %v2247 = vunpack.c.h.b16 %v1265
        %v2248 = vunpack.c.l.b16 %v1266
        %v2249 = vunpack.c.h.b16 %v1266
        %v2250 = vunpack.c.l.b16 %v1267
        %v2251 = vunpack.c.h.b16 %v1267
        %v2252 = vunpack.c.l.b16 %v1268
        %v2253 = vunpack.c.h.b16 %v1268
        %v2254 = vunpack.c.l.b16 %v1269
        %v2255 = vunpack.c.h.b16 %v1269
        %v2256 = vunpack.c.l.b16 %v1270
        %v2257 = vunpack.c.h.b16 %v1270
        %v2258 = vunpack.c.l.b16 %v1271
        %v2259 = vunpack.c.h.b16 %v1271
        %v2260 = vunpack.c.l.b16 %v1272
        %v2261 = vunpack.c.h.b16 %v1272
        %v2262 = vunpack.c.l.b16 %v1273
        %v2263 = vunpack.c.h.b16 %v1273
        %v2264 = vunpack.c.l.b16 %v1274
        %v2265 = vunpack.c.h.b16 %v1274
        %v2266 = vunpack.c.l.b16 %v1275
        %v2267 = vunpack.c.h.b16 %v1275
        %v2268 = vunpack.c.l.b16 %v1276
        %v2269 = vunpack.c.h.b16 %v1276
        %v2270 = vunpack.c.l.b16 %v1277
        %v2271 = vunpack.c.h.b16 %v1277
        %v2272 = vunpack.c.l.b16 %v1278
        %v2273 = vunpack.c.h.b16 %v1278
        %v2274 = vunpack.c.l.b16 %v1279
        %v2275 = vunpack.c.h.b16 %v1279
        %v2276 = vunpack.c.l.b16 %v1280
        %v2277 = vunpack.c.h.b16 %v1280
        %v2278 = vunpack.c.l.b16 %v1281
        %v2279 = vunpack.c.h.b16 %v1281
        %v2280 = vunpack.c.l.b16 %v1282
        %v2281 = vunpack.c.h.b16 %v1282
        %v2282 = vunpack.c.l.b16 %v1283
        %v2283 = vunpack.c.h.b16 %v1283
        %v2284 = vunpack.c.l.b16 %v1284
        %v2285 = vunpack.c.h.b16 %v1284
        %v2286 = vunpack.c.l.b16 %v1285
        %v2287 = vunpack.c.h.b16 %v1285
        %v2288 = vunpack.c.l.b16 %v1286
        %v2289 = vunpack.c.h.b16 %v1286
        %v2290 = vunpack.c.l.b16 %v1287
        %v2291 = vunpack.c.h.b16 %v1287
        %v2292 = vunpack.c.l.b16 %v1288
        %v2293 = vunpack.c.h.b16 %v1288
        %v2294 = vunpack.c.l.b16 %v1289
        %v2295 = vunpack.c.h.b16 %v1289
        %v2296 = vunpack.c.l.b16 %v1290
        %v2297 = vunpack.c.h.b16 %v1290
        %v2298 = vunpack.c.l.b16 %v1291
        %v2299 = vunpack.c.h.b16 %v1291
        %v2300 = vpack.c.b16 %v1642, %v1628
        %v2301 = vpack.c.b16 %v1643, %v1629
        %v2302 = vpack.c.b16 %v1644, %v1630
        %v2303 = vpack.c.b16 %v1645, %v1631
        %v2304 = vpack.c.b16 %v1646, %v1632
        %v2305 = vpack.c.b16 %v1647, %v1633
        %v2306 = vpack.c.b16 %v1648, %v1634
        %v2307 = vpack.c.b16 %v1649, %v1635
        %v2308 = vpack.c.b16 %v1650, %v1636
        %v2309 = vpack.c.b16 %v1651, %v1637
        %v2310 = vpack.c.b16 %v1652, %v1638
        %v2311 = vpack.c.b16 %v1653, %v1639
        %v2312 = vpack.c.b16 %v1654, %v1640
        %v2313 = vpack.c.b16 %v1655, %v1641
        %v2314 = vpack.c.b16 %v1670, %v1656
        %v2315 = vpack.c.b16 %v1671, %v1657
        %v2316 = vpack.c.b16 %v1672, %v1658
        %v2317 = vpack.c.b16 %v1673, %v1659
        %v2318 = vpack.c.b16 %v1674, %v1660
        %v2319 = vpack.c.b16 %v1675, %v1661
        %v2320 = vpack.c.b16 %v1676, %v1662
        %v2321 = vpack.c.b16 %v1677, %v1663
        %v2322 = vpack.c.b16 %v1678, %v1664
        %v2323 = vpack.c.b16 %v1679, %v1665
        %v2324 = vpack.c.b16 %v1680, %v1666
        %v2325 = vpack.c.b16 %v1681, %v1667
        %v2326 = vpack.c.b16 %v1682, %v1668
        %v2327 = vpack.c.b16 %v1683, %v1669
        %v2328 = vpack.c.b16 %v1698, %v1684
        %v2329 = vpack.c.b16 %v1699, %v1685
        %v2330 = vpack.c.b16 %v1700, %v1686
        %v2331 = vpack.c.b16 %v1701, %v1687
        %v2332 = vpack.c.b16 %v1702, %v1688
        %v2333 = vpack.c.b16 %v1703, %v1689
        %v2334 = vpack.c.b16 %v1704, %v1690
        %v2335 = vpack.c.b16 %v1705, %v1691
        %v2336 = vpack.c.b16 %v1706, %v1692
        %v2337 = vpack.c.b16 %v1707, %v1693
        %v2338 = vpack.c.b16 %v1708, %v1694
        %v2339 = vpack.c.b16 %v1709, %v1695
        %v2340 = vpack.c.b16 %v1710, %v1696
        %v2341 = vpack.c.b16 %v1711, %v1697
        %v2342 = vpack.c.b16 %v1726, %v1712
        %v2343 = vpack.c.b16 %v1727, %v1713
        %v2344 = vpack.c.b16 %v1728, %v1714
        %v2345 = vpack.c.b16 %v1729, %v1715
        %v2346 = vpack.c.b16 %v1730, %v1716
        %v2347 = vpack.c.b16 %v1731, %v1717
        %v2348 = vpack.c.b16 %v1732, %v1718
        %v2349 = vpack.c.b16 %v1733, %v1719
        %v2350 = vpack.c.b16 %v1734, %v1720
        %v2351 = vpack.c.b16 %v1735, %v1721
        %v2352 = vpack.c.b16 %v1736, %v1722
        %v2353 = vpack.c.b16 %v1737, %v1723
        %v2354 = vpack.c.b16 %v1738, %v1724
        %v2355 = vpack.c.b16 %v1739, %v1725
        %v2356 = vpack.c.b16 %v1754, %v1740
        %v2357 = vpack.c.b16 %v1755, %v1741
        %v2358 = vpack.c.b16 %v1756, %v1742
        %v2359 = vpack.c.b16 %v1757, %v1743
        %v2360 = vpack.c.b16 %v1758, %v1744
        %v2361 = vpack.c.b16 %v1759, %v1745
        %v2362 = vpack.c.b16 %v1760, %v1746
        %v2363 = vpack.c.b16 %v1761, %v1747
        %v2364 = vpack.c.b16 %v1762, %v1748
        %v2365 = vpack.c.b16 %v1763, %v1749
        %v2366 = vpack.c.b16 %v1764, %v1750
        %v2367 = vpack.c.b16 %v1765, %v1751
        %v2368 = vpack.c.b16 %v1766, %v1752
        %v2369 = vpack.c.b16 %v1767, %v1753
        %v2370 = vpack.c.b16 %v1782, %v1768
        %v2371 = vpack.c.b16 %v1783, %v1769
        %v2372 = vpack.c.b16 %v1784, %v1770
        %v2373 = vpack.c.b16 %v1785, %v1771
        %v2374 = vpack.c.b16 %v1786, %v1772
        %v2375 = vpack.c.b16 %v1787, %v1773
        %v2376 = vpack.c.b16 %v1788, %v1774
        %v2377 = vpack.c.b16 %v1789, %v1775
        %v2378 = vpack.c.b16 %v1790, %v1776
        %v2379 = vpack.c.b16 %v1791, %v1777
        %v2380 = vpack.c.b16 %v1792, %v1778
        %v2381 = vpack.c.b16 %v1793, %v1779
        %v2382 = vpack.c.b16 %v1794, %v1780
        %v2383 = vpack.c.b16 %v1795, %v1781
        %v2384 = vpack.c.b16 %v1810, %v1796
        %v2385 = vpack.c.b16 %v1811, %v1797
        %v2386 = vpack.c.b16 %v1812, %v1798
        %v2387 = vpack.c.b16 %v1813, %v1799
        %v2388 = vpack.c.b16 %v1814, %v1800
        %v2389 = vpack.c.b16 %v1815, %v1801
        %v2390 = vpack.c.b16 %v1816, %v1802
        %v2391 = vpack.c.b16 %v1817, %v1803
        %v2392 = vpack.c.b16 %v1818, %v1804
        %v2393 = vpack.c.b16 %v1819, %v1805
        %v2394 = vpack.c.b16 %v1820, %v1806
        %v2395 = vpack.c.b16 %v1821, %v1807
        %v2396 = vpack.c.b16 %v1822, %v1808
        %v2397 = vpack.c.b16 %v1823, %v1809
        %v2398 = vpack.c.b16 %v1838, %v1824
        %v2399 = vpack.c.b16 %v1839, %v1825
        %v2400 = vpack.c.b16 %v1840, %v1826
        %v2401 = vpack.c.b16 %v1841, %v1827
        %v2402 = vpack.c.b16 %v1842, %v1828
        %v2403 = vpack.c.b16 %v1843, %v1829
        %v2404 = vpack.c.b16 %v1844, %v1830
        %v2405 = vpack.c.b16 %v1845, %v1831
        %v2406 = vpack.c.b16 %v1846, %v1832
        %v2407 = vpack.c.b16 %v1847, %v1833
        %v2408 = vpack.c.b16 %v1848, %v1834
        %v2409 = vpack.c.b16 %v1849, %v1835
        %v2410 = vpack.c.b16 %v1850, %v1836
        %v2411 = vpack.c.b16 %v1851, %v1837
        %v2412 = vpack.c.b16 %v1866, %v1852
        %v2413 = vpack.c.b16 %v1867, %v1853
        %v2414 = vpack.c.b16 %v1868, %v1854
        %v2415 = vpack.c.b16 %v1869, %v1855
        %v2416 = vpack.c.b16 %v1870, %v1856
        %v2417 = vpack.c.b16 %v1871, %v1857
        %v2418 = vpack.c.b16 %v1872, %v1858
        %v2419 = vpack.c.b16 %v1873, %v1859
        %v2420 = vpack.c.b16 %v1874, %v1860
        %v2421 = vpack.c.b16 %v1875, %v1861
        %v2422 = vpack.c.b16 %v1876, %v1862
        %v2423 = vpack.c.b16 %v1877, %v1863
        %v2424 = vpack.c.b16 %v1878, %v1864
        %v2425 = vpack.c.b16 %v1879, %v1865
        %v2426 = vpack.c.b16 %v1894, %v1880
        %v2427 = vpack.c.b16 %v1895, %v1881
        %v2428 = vpack.c.b16 %v1896, %v1882
        %v2429 = vpack.c.b16 %v1897, %v1883
        %v2430 = vpack.c.b16 %v1898, %v1884
        %v2431 = vpack.c.b16 %v1899, %v1885
        %v2432 = vpack.c.b16 %v1900, %v1886
        %v2433 = vpack.c.b16 %v1901, %v1887
        %v2434 = vpack.c.b16 %v1902, %v1888
        %v2435 = vpack.c.b16 %v1903, %v1889
        %v2436 = vpack.c.b16 %v1904, %v1890
        %v2437 = vpack.c.b16 %v1905, %v1891
        %v2438 = vpack.c.b16 %v1906, %v1892
        %v2439 = vpack.c.b16 %v1907, %v1893
        %v2440 = vpack.c.b16 %v1922, %v1908
        %v2441 = vpack.c.b16 %v1923, %v1909
        %v2442 = vpack.c.b16 %v1924, %v1910
        %v2443 = vpack.c.b16 %v1925, %v1911
        %v2444 = vpack.c.b16 %v1926, %v1912
        %v2445 = vpack.c.b16 %v1927, %v1913
        %v2446 = vpack.c.b16 %v1928, %v1914
        %v2447 = vpack.c.b16 %v1929, %v1915
        %v2448 = vpack.c.b16 %v1930, %v1916
        %v2449 = vpack.c.b16 %v1931, %v1917
        %v2450 = vpack.c.b16 %v1932, %v1918
        %v2451 = vpack.c.b16 %v1933, %v1919
        %v2452 = vpack.c.b16 %v1934, %v1920
        %v2453 = vpack.c.b16 %v1935, %v1921
        %v2454 = vpack.c.b16 %v1950, %v1936
        %v2455 = vpack.c.b16 %v1951, %v1937
        %v2456 = vpack.c.b16 %v1952, %v1938
        %v2457 = vpack.c.b16 %v1953, %v1939
        %v2458 = vpack.c.b16 %v1954, %v1940
        %v2459 = vpack.c.b16 %v1955, %v1941
        %v2460 = vpack.c.b16 %v1956, %v1942
        %v2461 = vpack.c.b16 %v1957, %v1943
        %v2462 = vpack.c.b16 %v1958, %v1944
        %v2463 = vpack.c.b16 %v1959, %v1945
        %v2464 = vpack.c.b16 %v1960, %v1946
        %v2465 = vpack.c.b16 %v1961, %v1947
        %v2466 = vpack.c.b16 %v1962, %v1948
        %v2467 = vpack.c.b16 %v1963, %v1949
        %v2468 = vpack.c.b16 %v1978, %v1964
        %v2469 = vpack.c.b16 %v1979, %v1965
        %v2470 = vpack.c.b16 %v1980, %v1966
        %v2471 = vpack.c.b16 %v1981, %v1967
        %v2472 = vpack.c.b16 %v1982, %v1968
        %v2473 = vpack.c.b16 %v1983, %v1969
        %v2474 = vpack.c.b16 %v1984, %v1970
        %v2475 = vpack.c.b16 %v1985, %v1971
        %v2476 = vpack.c.b16 %v1986, %v1972
        %v2477 = vpack.c.b16 %v1987, %v1973
        %v2478 = vpack.c.b16 %v1988, %v1974
        %v2479 = vpack.c.b16 %v1989, %v1975
        %v2480 = vpack.c.b16 %v1990, %v1976
        %v2481 = vpack.c.b16 %v1991, %v1977
        %v2482 = vpack.c.b16 %v2006, %v1992
        %v2483 = vpack.c.b16 %v2007, %v1993
        %v2484 = vpack.c.b16 %v2008, %v1994
        %v2485 = vpack.c.b16 %v2009, %v1995
        %v2486 = vpack.c.b16 %v2010, %v1996
        %v2487 = vpack.c.b16 %v2011, %v1997
        %v2488 = vpack.c.b16 %v2012, %v1998
        %v2489 = vpack.c.b16 %v2013, %v1999
        %v2490 = vpack.c.b16 %v2014, %v2000
        %v2491 = vpack.c.b16 %v2015, %v2001
        %v2492 = vpack.c.b16 %v2016, %v2002
        %v2493 = vpack.c.b16 %v2017, %v2003
        %v2494 = vpack.c.b16 %v2018, %v2004
        %v2495 = vpack.c.b16 %v2019, %v2005
        %v2496 = vpack.c.b16 %v2034, %v2020
        %v2497 = vpack.c.b16 %v2035, %v2021
        %v2498 = vpack.c.b16 %v2036, %v2022
        %v2499 = vpack.c.b16 %v2037, %v2023
        %v2500 = vpack.c.b16 %v2038, %v2024
        %v2501 = vpack.c.b16 %v2039, %v2025
        %v2502 = vpack.c.b16 %v2040, %v2026
        %v2503 = vpack.c.b16 %v2041, %v2027
        %v2504 = vpack.c.b16 %v2042, %v2028
        %v2505 = vpack.c.b16 %v2043, %v2029
        %v2506 = vpack.c.b16 %v2044, %v2030
        %v2507 = vpack.c.b16 %v2045, %v2031
        %v2508 = vpack.c.b16 %v2046, %v2032
        %v2509 = vpack.c.b16 %v2047, %v2033
        %v2510 = vpack.c.b16 %v2062, %v2048
        %v2511 = vpack.c.b16 %v2063, %v2049
        %v2512 = vpack.c.b16 %v2064, %v2050
        %v2513 = vpack.c.b16 %v2065, %v2051
        %v2514 = vpack.c.b16 %v2066, %v2052
        %v2515 = vpack.c.b16 %v2067, %v2053
        %v2516 = vpack.c.b16 %v2068, %v2054
        %v2517 = vpack.c.b16 %v2069, %v2055
        %v2518 = vpack.c.b16 %v2070, %v2056
        %v2519 = vpack.c.b16 %v2071, %v2057
        %v2520 = vpack.c.b16 %v2072, %v2058
        %v2521 = vpack.c.b16 %v2073, %v2059
        %v2522 = vpack.c.b16 %v2074, %v2060
        %v2523 = vpack.c.b16 %v2075, %v2061
        %v2524 = vpack.c.b16 %v2090, %v2076
        %v2525 = vpack.c.b16 %v2091, %v2077
        %v2526 = vpack.c.b16 %v2092, %v2078
        %v2527 = vpack.c.b16 %v2093, %v2079
        %v2528 = vpack.c.b16 %v2094, %v2080
        %v2529 = vpack.c.b16 %v2095, %v2081
        %v2530 = vpack.c.b16 %v2096, %v2082
        %v2531 = vpack.c.b16 %v2097, %v2083
        %v2532 = vpack.c.b16 %v2098, %v2084
        %v2533 = vpack.c.b16 %v2099, %v2085
        %v2534 = vpack.c.b16 %v2100, %v2086
        %v2535 = vpack.c.b16 %v2101, %v2087
        %v2536 = vpack.c.b16 %v2102, %v2088
        %v2537 = vpack.c.b16 %v2103, %v2089
        %v2538 = vpack.c.b16 %v2118, %v2104
        %v2539 = vpack.c.b16 %v2119, %v2105
        %v2540 = vpack.c.b16 %v2120, %v2106
        %v2541 = vpack.c.b16 %v2121, %v2107
        %v2542 = vpack.c.b16 %v2122, %v2108
        %v2543 = vpack.c.b16 %v2123, %v2109
        %v2544 = vpack.c.b16 %v2124, %v2110
        %v2545 = vpack.c.b16 %v2125, %v2111
        %v2546 = vpack.c.b16 %v2126, %v2112
        %v2547 = vpack.c.b16 %v2127, %v2113
        %v2548 = vpack.c.b16 %v2128, %v2114
        %v2549 = vpack.c.b16 %v2129, %v2115
        %v2550 = vpack.c.b16 %v2130, %v2116
        %v2551 = vpack.c.b16 %v2131, %v2117
        %v2552 = vpack.c.b16 %v2146, %v2132
        %v2553 = vpack.c.b16 %v2147, %v2133
        %v2554 = vpack.c.b16 %v2148, %v2134
        %v2555 = vpack.c.b16 %v2149, %v2135
        %v2556 = vpack.c.b16 %v2150, %v2136
        %v2557 = vpack.c.b16 %v2151, %v2137
        %v2558 = vpack.c.b16 %v2152, %v2138
        %v2559 = vpack.c.b16 %v2153, %v2139
        %v2560 = vpack.c.b16 %v2154, %v2140
        %v2561 = vpack.c.b16 %v2155, %v2141
        %v2562 = vpack.c.b16 %v2156, %v2142
        %v2563 = vpack.c.b16 %v2157, %v2143
        %v2564 = vpack.c.b16 %v2158, %v2144
        %v2565 = vpack.c.b16 %v2159, %v2145
        %v2566 = vpack.c.b16 %v2174, %v2160
        %v2567 = vpack.c.b16 %v2175, %v2161
        %v2568 = vpack.c.b16 %v2176, %v2162
        %v2569 = vpack.c.b16 %v2177, %v2163
        %v2570 = vpack.c.b16 %v2178, %v2164
        %v2571 = vpack.c.b16 %v2179, %v2165
        %v2572 = vpack.c.b16 %v2180, %v2166
        %v2573 = vpack.c.b16 %v2181, %v2167
        %v2574 = vpack.c.b16 %v2182, %v2168
        %v2575 = vpack.c.b16 %v2183, %v2169
        %v2576 = vpack.c.b16 %v2184, %v2170
        %v2577 = vpack.c.b16 %v2185, %v2171
        %v2578 = vpack.c.b16 %v2186, %v2172
        %v2579 = vpack.c.b16 %v2187, %v2173
        %v2580 = vpack.c.b16 %v2202, %v2188
        %v2581 = vpack.c.b16 %v2203, %v2189
        %v2582 = vpack.c.b16 %v2204, %v2190
        %v2583 = vpack.c.b16 %v2205, %v2191
        %v2584 = vpack.c.b16 %v2206, %v2192
        %v2585 = vpack.c.b16 %v2207, %v2193
        %v2586 = vpack.c.b16 %v2208, %v2194
        %v2587 = vpack.c.b16 %v2209, %v2195
        %v2588 = vpack.c.b16 %v2210, %v2196
        %v2589 = vpack.c.b16 %v2211, %v2197
        %v2590 = vpack.c.b16 %v2212, %v2198
        %v2591 = vpack.c.b16 %v2213, %v2199
        %v2592 = vpack.c.b16 %v2214, %v2200
        %v2593 = vpack.c.b16 %v2215, %v2201
        %v2594 = vpack.c.b16 %v2230, %v2216
        %v2595 = vpack.c.b16 %v2231, %v2217
        %v2596 = vpack.c.b16 %v2232, %v2218
        %v2597 = vpack.c.b16 %v2233, %v2219
        %v2598 = vpack.c.b16 %v2234, %v2220
        %v2599 = vpack.c.b16 %v2235, %v2221
        %v2600 = vpack.c.b16 %v2236, %v2222
        %v2601 = vpack.c.b16 %v2237, %v2223
        %v2602 = vpack.c.b16 %v2238, %v2224
        %v2603 = vpack.c.b16 %v2239, %v2225
        %v2604 = vpack.c.b16 %v2240, %v2226
        %v2605 = vpack.c.b16 %v2241, %v2227
        %v2606 = vpack.c.b16 %v2242, %v2228
        %v2607 = vpack.c.b16 %v2243, %v2229
        %v2608 = vpack.c.b16 %v2258, %v2244
        %v2609 = vpack.c.b16 %v2259, %v2245
        %v2610 = vpack.c.b16 %v2260, %v2246
        %v2611 = vpack.c.b16 %v2261, %v2247
        %v2612 = vpack.c.b16 %v2262, %v2248
        %v2613 = vpack.c.b16 %v2263, %v2249
        %v2614 = vpack.c.b16 %v2264, %v2250
        %v2615 = vpack.c.b16 %v2265, %v2251
        %v2616 = vpack.c.b16 %v2266, %v2252
        %v2617 = vpack.c.b16 %v2267, %v2253
        %v2618 = vpack.c.b16 %v2268, %v2254
        %v2619 = vpack.c.b16 %v2269, %v2255
        %v2620 = vpack.c.b16 %v2270, %v2256
        %v2621 = vpack.c.b16 %v2271, %v2257
        %v2622 = vpack.c.b16 %v2286, %v2272
        %v2623 = vpack.c.b16 %v2287, %v2273
        %v2624 = vpack.c.b16 %v2288, %v2274
        %v2625 = vpack.c.b16 %v2289, %v2275
        %v2626 = vpack.c.b16 %v2290, %v2276
        %v2627 = vpack.c.b16 %v2291, %v2277
        %v2628 = vpack.c.b16 %v2292, %v2278
        %v2629 = vpack.c.b16 %v2293, %v2279
        %v2630 = vpack.c.b16 %v2294, %v2280
        %v2631 = vpack.c.b16 %v2295, %v2281
        %v2632 = vpack.c.b16 %v2296, %v2282
        %v2633 = vpack.c.b16 %v2297, %v2283
        %v2634 = vpack.c.b16 %v2298, %v2284
        %v2635 = vpack.c.b16 %v2299, %v2285
        %2972 = vmatprep.subr.bf16.mxu0 %v2301
        %2973 = vmatpush1.bf16.msra.mxu0 %v2300
        %2974 = vmatprep.subr.bf16.mxu0 %v2315
        %2975 = vmatpush1.bf16.msra.mxu0 %v2314
        %2976 = vmatprep.subr.bf16.mxu0 %v2329
        %2977 = vmatpush1.bf16.msra.mxu0 %v2328
        %2978 = vmatprep.subr.bf16.mxu0 %v2343
        %2979 = vmatpush1.bf16.msra.mxu0 %v2342
        %2980 = vmatprep.subr.bf16.mxu0 %v2357
        %2981 = vmatpush1.bf16.msra.mxu0 %v2356
        %2982 = vmatprep.subr.bf16.mxu0 %v2371
        %2983 = vmatpush1.bf16.msra.mxu0 %v2370
        %2984 = vmatprep.subr.bf16.mxu0 %v2385
        %2985 = vmatpush1.bf16.msra.mxu0 %v2384
        %2986 = vmatprep.subr.bf16.mxu0 %v2399
        %2987 = vmatpush1.bf16.msra.mxu0 %v2398
        %2988 = vmatprep.subr.bf16.mxu0 %v2413
        %2989 = vmatpush1.bf16.msra.mxu0 %v2412
        %2990 = vmatprep.subr.bf16.mxu0 %v2427
        %2991 = vmatpush1.bf16.msra.mxu0 %v2426
        %2992 = vmatprep.subr.bf16.mxu0 %v2441
        %2993 = vmatpush1.bf16.msra.mxu0 %v2440
        %2994 = vmatprep.subr.bf16.mxu0 %v2455
        %2995 = vmatpush1.bf16.msra.mxu0 %v2454
        %2996 = vmatprep.subr.bf16.mxu0 %v2469
        %2997 = vmatpush1.bf16.msra.mxu0 %v2468
        %2998 = vmatprep.subr.bf16.mxu0 %v2483
        %2999 = vmatpush1.bf16.msra.mxu0 %v2482
        %3000 = vmatprep.subr.bf16.mxu0 %v2497
        %3001 = vmatpush1.bf16.msra.mxu0 %v2496
        %3002 = vmatprep.subr.bf16.mxu0 %v2511
        %3003 = vmatpush1.bf16.msra.mxu0 %v2510
        %3004 = vmatprep.mubr.bf16.mxu0 %v954
        %3005 = vmatmul.mubr.bf16.gmra.mrb[0].mxu0 %v953
        %v3006 = vpop.f32.mrb[0].mxu0
        %v3007 = vadd.f32 0.0, %v3006
        %v3008 = vpop.f32.mrb[0].mxu0
        %v3009 = vadd.f32 0.0, %v3008
        %v3010 = vpop.f32.mrb[0].mxu0
        %v3011 = vadd.f32 0.0, %v3010
        %v3012 = vpop.f32.mrb[0].mxu0
        %v3013 = vadd.f32 0.0, %v3012
        %3014 = vdwg.mxu0
        %3015 = vmatprep.subr.bf16.mxu0 %v2525
        %3016 = vmatpush1.bf16.msra.mxu0 %v2524
        %3017 = vmatprep.subr.bf16.mxu0 %v2539
        %3018 = vmatpush1.bf16.msra.mxu0 %v2538
        %3019 = vmatprep.subr.bf16.mxu0 %v2553
        %3020 = vmatpush1.bf16.msra.mxu0 %v2552
        %3021 = vmatprep.subr.bf16.mxu0 %v2567
        %3022 = vmatpush1.bf16.msra.mxu0 %v2566
        %3023 = vmatprep.subr.bf16.mxu0 %v2581
        %3024 = vmatpush1.bf16.msra.mxu0 %v2580
        %3025 = vmatprep.subr.bf16.mxu0 %v2595
        %3026 = vmatpush1.bf16.msra.mxu0 %v2594
        %3027 = vmatprep.subr.bf16.mxu0 %v2609
        %3028 = vmatpush1.bf16.msra.mxu0 %v2608
        %3029 = vmatprep.subr.bf16.mxu0 %v2623
        %3030 = vmatpush1.bf16.msra.mxu0 %v2622
        %3031 = vmatprep.subr.bf16.mxu0 0
        %3032 = vmatpush1.bf16.msra.mxu0 0
        %3033 = vmatprep.subr.bf16.mxu0 0
        %3034 = vmatpush1.bf16.msra.mxu0 0
        %3035 = vmatprep.subr.bf16.mxu0 0
        %3036 = vmatpush1.bf16.msra.mxu0 0
        %3037 = vmatprep.subr.bf16.mxu0 0
        %3038 = vmatpush1.bf16.msra.mxu0 0
        %3039 = vmatprep.subr.bf16.mxu0 0
        %3040 = vmatpush1.bf16.msra.mxu0 0
        %3041 = vmatprep.subr.bf16.mxu0 0
        %3042 = vmatpush1.bf16.msra.mxu0 0
        %3043 = vmatprep.subr.bf16.mxu0 0
        %3044 = vmatpush1.bf16.msra.mxu0 0
        %3045 = vmatprep.subr.bf16.mxu0 0
        %3046 = vmatpush1.bf16.msra.mxu0 0
        %3047 = vmatprep.mubr.bf16.mxu0 0
        %3048 = vmatmul.mubr.bf16.gmra.mrb[0].mxu0 %v955
        %v3049 = vpop.f32.mrb[0].mxu0
        %v3050 = vadd.f32 %v3007, %v3049
        %v3051 = vpop.f32.mrb[0].mxu0
        %v3052 = vadd.f32 %v3009, %v3051
        %v3053 = vpop.f32.mrb[0].mxu0
        %v3054 = vadd.f32 %v3011, %v3053
        %v3055 = vpop.f32.mrb[0].mxu0
        %v3056 = vadd.f32 %v3013, %v3055
        %3057 = vdwg.mxu0
        %3058 = vmatprep.subr.bf16.mxu0 %v2303
        %3059 = vmatpush1.bf16.msra.mxu0 %v2302
        %3060 = vmatprep.subr.bf16.mxu0 %v2317
        %3061 = vmatpush1.bf16.msra.mxu0 %v2316
        %3062 = vmatprep.subr.bf16.mxu0 %v2331
        %3063 = vmatpush1.bf16.msra.mxu0 %v2330
        %3064 = vmatprep.subr.bf16.mxu0 %v2345
        %3065 = vmatpush1.bf16.msra.mxu0 %v2344
        %3066 = vmatprep.subr.bf16.mxu0 %v2359
        %3067 = vmatpush1.bf16.msra.mxu0 %v2358
        %3068 = vmatprep.subr.bf16.mxu0 %v2373
        %3069 = vmatpush1.bf16.msra.mxu0 %v2372
        %3070 = vmatprep.subr.bf16.mxu0 %v2387
        %3071 = vmatpush1.bf16.msra.mxu0 %v2386
        %3072 = vmatprep.subr.bf16.mxu0 %v2401
        %3073 = vmatpush1.bf16.msra.mxu0 %v2400
        %3074 = vmatprep.subr.bf16.mxu0 %v2415
        %3075 = vmatpush1.bf16.msra.mxu0 %v2414
        %3076 = vmatprep.subr.bf16.mxu0 %v2429
        %3077 = vmatpush1.bf16.msra.mxu0 %v2428
        %3078 = vmatprep.subr.bf16.mxu0 %v2443
        %3079 = vmatpush1.bf16.msra.mxu0 %v2442
        %3080 = vmatprep.subr.bf16.mxu0 %v2457
        %3081 = vmatpush1.bf16.msra.mxu0 %v2456
        %3082 = vmatprep.subr.bf16.mxu0 %v2471
        %3083 = vmatpush1.bf16.msra.mxu0 %v2470
        %3084 = vmatprep.subr.bf16.mxu0 %v2485
        %3085 = vmatpush1.bf16.msra.mxu0 %v2484
        %3086 = vmatprep.subr.bf16.mxu0 %v2499
        %3087 = vmatpush1.bf16.msra.mxu0 %v2498
        %3088 = vmatprep.subr.bf16.mxu0 %v2513
        %3089 = vmatpush1.bf16.msra.mxu0 %v2512
        %3090 = vmatprep.mubr.bf16.mxu0 %v954
        %3091 = vmatmul.mubr.bf16.gmra.mrb[0].mxu0 %v953
        %v3092 = vpop.f32.mrb[0].mxu0
        %v3093 = vadd.f32 0.0, %v3092
        %v3094 = vpop.f32.mrb[0].mxu0
        %v3095 = vadd.f32 0.0, %v3094
        %v3096 = vpop.f32.mrb[0].mxu0
        %v3097 = vadd.f32 0.0, %v3096
        %v3098 = vpop.f32.mrb[0].mxu0
        %v3099 = vadd.f32 0.0, %v3098
        %3100 = vdwg.mxu0
        %3101 = vmatprep.subr.bf16.mxu0 %v2527
        %3102 = vmatpush1.bf16.msra.mxu0 %v2526
        %3103 = vmatprep.subr.bf16.mxu0 %v2541
        %3104 = vmatpush1.bf16.msra.mxu0 %v2540
        %3105 = vmatprep.subr.bf16.mxu0 %v2555
        %3106 = vmatpush1.bf16.msra.mxu0 %v2554
        %3107 = vmatprep.subr.bf16.mxu0 %v2569
        %3108 = vmatpush1.bf16.msra.mxu0 %v2568
        %3109 = vmatprep.subr.bf16.mxu0 %v2583
        %3110 = vmatpush1.bf16.msra.mxu0 %v2582
        %3111 = vmatprep.subr.bf16.mxu0 %v2597
        %3112 = vmatpush1.bf16.msra.mxu0 %v2596
        %3113 = vmatprep.subr.bf16.mxu0 %v2611
        %3114 = vmatpush1.bf16.msra.mxu0 %v2610
        %3115 = vmatprep.subr.bf16.mxu0 %v2625
        %3116 = vmatpush1.bf16.msra.mxu0 %v2624
        %3117 = vmatprep.subr.bf16.mxu0 0
        %3118 = vmatpush1.bf16.msra.mxu0 0
        %3119 = vmatprep.subr.bf16.mxu0 0
        %3120 = vmatpush1.bf16.msra.mxu0 0
        %3121 = vmatprep.subr.bf16.mxu0 0
        %3122 = vmatpush1.bf16.msra.mxu0 0
        %3123 = vmatprep.subr.bf16.mxu0 0
        %3124 = vmatpush1.bf16.msra.mxu0 0
        %3125 = vmatprep.subr.bf16.mxu0 0
        %3126 = vmatpush1.bf16.msra.mxu0 0
        %3127 = vmatprep.subr.bf16.mxu0 0
        %3128 = vmatpush1.bf16.msra.mxu0 0
        %3129 = vmatprep.subr.bf16.mxu0 0
        %3130 = vmatpush1.bf16.msra.mxu0 0
        %3131 = vmatprep.subr.bf16.mxu0 0
        %3132 = vmatpush1.bf16.msra.mxu0 0
        %3133 = vmatprep.mubr.bf16.mxu0 0
        %3134 = vmatmul.mubr.bf16.gmra.mrb[0].mxu0 %v955
        %v3135 = vpop.f32.mrb[0].mxu0
        %v3136 = vadd.f32 %v3093, %v3135
        %v3137 = vpop.f32.mrb[0].mxu0
        %v3138 = vadd.f32 %v3095, %v3137
        %v3139 = vpop.f32.mrb[0].mxu0
        %v3140 = vadd.f32 %v3097, %v3139
        %v3141 = vpop.f32.mrb[0].mxu0
        %v3142 = vadd.f32 %v3099, %v3141
        %3143 = vdwg.mxu0
        %3144 = vmatprep.subr.bf16.mxu0 %v2305
        %3145 = vmatpush1.bf16.msra.mxu0 %v2304
        %3146 = vmatprep.subr.bf16.mxu0 %v2319
        %3147 = vmatpush1.bf16.msra.mxu0 %v2318
        %3148 = vmatprep.subr.bf16.mxu0 %v2333
        %3149 = vmatpush1.bf16.msra.mxu0 %v2332
        %3150 = vmatprep.subr.bf16.mxu0 %v2347
        %3151 = vmatpush1.bf16.msra.mxu0 %v2346
        %3152 = vmatprep.subr.bf16.mxu0 %v2361
        %3153 = vmatpush1.bf16.msra.mxu0 %v2360
        %3154 = vmatprep.subr.bf16.mxu0 %v2375
        %3155 = vmatpush1.bf16.msra.mxu0 %v2374
        %3156 = vmatprep.subr.bf16.mxu0 %v2389
        %3157 = vmatpush1.bf16.msra.mxu0 %v2388
        %3158 = vmatprep.subr.bf16.mxu0 %v2403
        %3159 = vmatpush1.bf16.msra.mxu0 %v2402
        %3160 = vmatprep.subr.bf16.mxu0 %v2417
        %3161 = vmatpush1.bf16.msra.mxu0 %v2416
        %3162 = vmatprep.subr.bf16.mxu0 %v2431
        %3163 = vmatpush1.bf16.msra.mxu0 %v2430
        %3164 = vmatprep.subr.bf16.mxu0 %v2445
        %3165 = vmatpush1.bf16.msra.mxu0 %v2444
        %3166 = vmatprep.subr.bf16.mxu0 %v2459
        %3167 = vmatpush1.bf16.msra.mxu0 %v2458
        %3168 = vmatprep.subr.bf16.mxu0 %v2473
        %3169 = vmatpush1.bf16.msra.mxu0 %v2472
        %3170 = vmatprep.subr.bf16.mxu0 %v2487
        %3171 = vmatpush1.bf16.msra.mxu0 %v2486
        %3172 = vmatprep.subr.bf16.mxu0 %v2501
        %3173 = vmatpush1.bf16.msra.mxu0 %v2500
        %3174 = vmatprep.subr.bf16.mxu0 %v2515
        %3175 = vmatpush1.bf16.msra.mxu0 %v2514
        %3176 = vmatprep.mubr.bf16.mxu0 %v954
        %3177 = vmatmul.mubr.bf16.gmra.mrb[0].mxu0 %v953
        %v3178 = vpop.f32.mrb[0].mxu0
        %v3179 = vadd.f32 0.0, %v3178
        %v3180 = vpop.f32.mrb[0].mxu0
        %v3181 = vadd.f32 0.0, %v3180
        %v3182 = vpop.f32.mrb[0].mxu0
        %v3183 = vadd.f32 0.0, %v3182
        %v3184 = vpop.f32.mrb[0].mxu0
        %v3185 = vadd.f32 0.0, %v3184
        %3186 = vdwg.mxu0
        %3187 = vmatprep.subr.bf16.mxu0 %v2529
        %3188 = vmatpush1.bf16.msra.mxu0 %v2528
        %3189 = vmatprep.subr.bf16.mxu0 %v2543
        %3190 = vmatpush1.bf16.msra.mxu0 %v2542
        %3191 = vmatprep.subr.bf16.mxu0 %v2557
        %3192 = vmatpush1.bf16.msra.mxu0 %v2556
        %3193 = vmatprep.subr.bf16.mxu0 %v2571
        %3194 = vmatpush1.bf16.msra.mxu0 %v2570
        %3195 = vmatprep.subr.bf16.mxu0 %v2585
        %3196 = vmatpush1.bf16.msra.mxu0 %v2584
        %3197 = vmatprep.subr.bf16.mxu0 %v2599
        %3198 = vmatpush1.bf16.msra.mxu0 %v2598
        %3199 = vmatprep.subr.bf16.mxu0 %v2613
        %3200 = vmatpush1.bf16.msra.mxu0 %v2612
        %3201 = vmatprep.subr.bf16.mxu0 %v2627
        %3202 = vmatpush1.bf16.msra.mxu0 %v2626
        %3203 = vmatprep.subr.bf16.mxu0 0
        %3204 = vmatpush1.bf16.msra.mxu0 0
        %3205 = vmatprep.subr.bf16.mxu0 0
        %3206 = vmatpush1.bf16.msra.mxu0 0
        %3207 = vmatprep.subr.bf16.mxu0 0
        %3208 = vmatpush1.bf16.msra.mxu0 0
        %3209 = vmatprep.subr.bf16.mxu0 0
        %3210 = vmatpush1.bf16.msra.mxu0 0
        %3211 = vmatprep.subr.bf16.mxu0 0
        %3212 = vmatpush1.bf16.msra.mxu0 0
        %3213 = vmatprep.subr.bf16.mxu0 0
        %3214 = vmatpush1.bf16.msra.mxu0 0
        %3215 = vmatprep.subr.bf16.mxu0 0
        %3216 = vmatpush1.bf16.msra.mxu0 0
        %3217 = vmatprep.subr.bf16.mxu0 0
        %3218 = vmatpush1.bf16.msra.mxu0 0
        %3219 = vmatprep.mubr.bf16.mxu0 0
        %3220 = vmatmul.mubr.bf16.gmra.mrb[0].mxu0 %v955
        %v3221 = vpop.f32.mrb[0].mxu0
        %v3222 = vadd.f32 %v3179, %v3221
        %v3223 = vpop.f32.mrb[0].mxu0
        %v3224 = vadd.f32 %v3181, %v3223
        %v3225 = vpop.f32.mrb[0].mxu0
        %v3226 = vadd.f32 %v3183, %v3225
        %v3227 = vpop.f32.mrb[0].mxu0
        %v3228 = vadd.f32 %v3185, %v3227
        %3229 = vdwg.mxu0
        %3230 = vmatprep.subr.bf16.mxu0 %v2307
        %3231 = vmatpush1.bf16.msra.mxu0 %v2306
        %3232 = vmatprep.subr.bf16.mxu0 %v2321
        %3233 = vmatpush1.bf16.msra.mxu0 %v2320
        %3234 = vmatprep.subr.bf16.mxu0 %v2335
        %3235 = vmatpush1.bf16.msra.mxu0 %v2334
        %3236 = vmatprep.subr.bf16.mxu0 %v2349
        %3237 = vmatpush1.bf16.msra.mxu0 %v2348
        %3238 = vmatprep.subr.bf16.mxu0 %v2363
        %3239 = vmatpush1.bf16.msra.mxu0 %v2362
        %3240 = vmatprep.subr.bf16.mxu0 %v2377
        %3241 = vmatpush1.bf16.msra.mxu0 %v2376
        %3242 = vmatprep.subr.bf16.mxu0 %v2391
        %3243 = vmatpush1.bf16.msra.mxu0 %v2390
        %3244 = vmatprep.subr.bf16.mxu0 %v2405
        %3245 = vmatpush1.bf16.msra.mxu0 %v2404
        %3246 = vmatprep.subr.bf16.mxu0 %v2419
        %3247 = vmatpush1.bf16.msra.mxu0 %v2418
        %3248 = vmatprep.subr.bf16.mxu0 %v2433
        %3249 = vmatpush1.bf16.msra.mxu0 %v2432
        %3250 = vmatprep.subr.bf16.mxu0 %v2447
        %3251 = vmatpush1.bf16.msra.mxu0 %v2446
        %3252 = vmatprep.subr.bf16.mxu0 %v2461
        %3253 = vmatpush1.bf16.msra.mxu0 %v2460
        %3254 = vmatprep.subr.bf16.mxu0 %v2475
        %3255 = vmatpush1.bf16.msra.mxu0 %v2474
        %3256 = vmatprep.subr.bf16.mxu0 %v2489
        %3257 = vmatpush1.bf16.msra.mxu0 %v2488
        %3258 = vmatprep.subr.bf16.mxu0 %v2503
        %3259 = vmatpush1.bf16.msra.mxu0 %v2502
        %3260 = vmatprep.subr.bf16.mxu0 %v2517
        %3261 = vmatpush1.bf16.msra.mxu0 %v2516
        %3262 = vmatprep.mubr.bf16.mxu0 %v954
        %3263 = vmatmul.mubr.bf16.gmra.mrb[0].mxu0 %v953
        %v3264 = vpop.f32.mrb[0].mxu0
        %v3265 = vadd.f32 0.0, %v3264
        %v3266 = vpop.f32.mrb[0].mxu0
        %v3267 = vadd.f32 0.0, %v3266
        %v3268 = vpop.f32.mrb[0].mxu0
        %v3269 = vadd.f32 0.0, %v3268
        %v3270 = vpop.f32.mrb[0].mxu0
        %v3271 = vadd.f32 0.0, %v3270
        %3272 = vdwg.mxu0
        %3273 = vmatprep.subr.bf16.mxu0 %v2531
        %3274 = vmatpush1.bf16.msra.mxu0 %v2530
        %3275 = vmatprep.subr.bf16.mxu0 %v2545
        %3276 = vmatpush1.bf16.msra.mxu0 %v2544
        %3277 = vmatprep.subr.bf16.mxu0 %v2559
        %3278 = vmatpush1.bf16.msra.mxu0 %v2558
        %3279 = vmatprep.subr.bf16.mxu0 %v2573
        %3280 = vmatpush1.bf16.msra.mxu0 %v2572
        %3281 = vmatprep.subr.bf16.mxu0 %v2587
        %3282 = vmatpush1.bf16.msra.mxu0 %v2586
        %3283 = vmatprep.subr.bf16.mxu0 %v2601
        %3284 = vmatpush1.bf16.msra.mxu0 %v2600
        %3285 = vmatprep.subr.bf16.mxu0 %v2615
        %3286 = vmatpush1.bf16.msra.mxu0 %v2614
        %3287 = vmatprep.subr.bf16.mxu0 %v2629
        %3288 = vmatpush1.bf16.msra.mxu0 %v2628
        %3289 = vmatprep.subr.bf16.mxu0 0
        %3290 = vmatpush1.bf16.msra.mxu0 0
        %3291 = vmatprep.subr.bf16.mxu0 0
        %3292 = vmatpush1.bf16.msra.mxu0 0
        %3293 = vmatprep.subr.bf16.mxu0 0
        %3294 = vmatpush1.bf16.msra.mxu0 0
        %3295 = vmatprep.subr.bf16.mxu0 0
        %3296 = vmatpush1.bf16.msra.mxu0 0
        %3297 = vmatprep.subr.bf16.mxu0 0
        %3298 = vmatpush1.bf16.msra.mxu0 0
        %3299 = vmatprep.subr.bf16.mxu0 0
        %3300 = vmatpush1.bf16.msra.mxu0 0
        %3301 = vmatprep.subr.bf16.mxu0 0
        %3302 = vmatpush1.bf16.msra.mxu0 0
        %3303 = vmatprep.subr.bf16.mxu0 0
        %3304 = vmatpush1.bf16.msra.mxu0 0
        %3305 = vmatprep.mubr.bf16.mxu0 0
        %3306 = vmatmul.mubr.bf16.gmra.mrb[0].mxu0 %v955
        %v3307 = vpop.f32.mrb[0].mxu0
        %v3308 = vadd.f32 %v3265, %v3307
        %v3309 = vpop.f32.mrb[0].mxu0
        %v3310 = vadd.f32 %v3267, %v3309
        %v3311 = vpop.f32.mrb[0].mxu0
        %v3312 = vadd.f32 %v3269, %v3311
        %v3313 = vpop.f32.mrb[0].mxu0
        %v3314 = vadd.f32 %v3271, %v3313
        %3315 = vdwg.mxu0
        %3316 = vmatprep.subr.bf16.mxu0 %v2309
        %3317 = vmatpush1.bf16.msra.mxu0 %v2308
        %3318 = vmatprep.subr.bf16.mxu0 %v2323
        %3319 = vmatpush1.bf16.msra.mxu0 %v2322
        %3320 = vmatprep.subr.bf16.mxu0 %v2337
        %3321 = vmatpush1.bf16.msra.mxu0 %v2336
        %3322 = vmatprep.subr.bf16.mxu0 %v2351
        %3323 = vmatpush1.bf16.msra.mxu0 %v2350
        %3324 = vmatprep.subr.bf16.mxu0 %v2365
        %3325 = vmatpush1.bf16.msra.mxu0 %v2364
        %3326 = vmatprep.subr.bf16.mxu0 %v2379
        %3327 = vmatpush1.bf16.msra.mxu0 %v2378
        %3328 = vmatprep.subr.bf16.mxu0 %v2393
        %3329 = vmatpush1.bf16.msra.mxu0 %v2392
        %3330 = vmatprep.subr.bf16.mxu0 %v2407
        %3331 = vmatpush1.bf16.msra.mxu0 %v2406
        %3332 = vmatprep.subr.bf16.mxu0 %v2421
        %3333 = vmatpush1.bf16.msra.mxu0 %v2420
        %3334 = vmatprep.subr.bf16.mxu0 %v2435
        %3335 = vmatpush1.bf16.msra.mxu0 %v2434
        %3336 = vmatprep.subr.bf16.mxu0 %v2449
        %3337 = vmatpush1.bf16.msra.mxu0 %v2448
        %3338 = vmatprep.subr.bf16.mxu0 %v2463
        %3339 = vmatpush1.bf16.msra.mxu0 %v2462
        %3340 = vmatprep.subr.bf16.mxu0 %v2477
        %3341 = vmatpush1.bf16.msra.mxu0 %v2476
        %3342 = vmatprep.subr.bf16.mxu0 %v2491
        %3343 = vmatpush1.bf16.msra.mxu0 %v2490
        %3344 = vmatprep.subr.bf16.mxu0 %v2505
        %3345 = vmatpush1.bf16.msra.mxu0 %v2504
        %3346 = vmatprep.subr.bf16.mxu0 %v2519
        %3347 = vmatpush1.bf16.msra.mxu0 %v2518
        %3348 = vmatprep.mubr.bf16.mxu0 %v954
        %3349 = vmatmul.mubr.bf16.gmra.mrb[0].mxu0 %v953
        %v3350 = vpop.f32.mrb[0].mxu0
        %v3351 = vadd.f32 0.0, %v3350
        %v3352 = vpop.f32.mrb[0].mxu0
        %v3353 = vadd.f32 0.0, %v3352
        %v3354 = vpop.f32.mrb[0].mxu0
        %v3355 = vadd.f32 0.0, %v3354
        %v3356 = vpop.f32.mrb[0].mxu0
        %v3357 = vadd.f32 0.0, %v3356
        %3358 = vdwg.mxu0
        %3359 = vmatprep.subr.bf16.mxu0 %v2533
        %3360 = vmatpush1.bf16.msra.mxu0 %v2532
        %3361 = vmatprep.subr.bf16.mxu0 %v2547
        %3362 = vmatpush1.bf16.msra.mxu0 %v2546
        %3363 = vmatprep.subr.bf16.mxu0 %v2561
        %3364 = vmatpush1.bf16.msra.mxu0 %v2560
        %3365 = vmatprep.subr.bf16.mxu0 %v2575
        %3366 = vmatpush1.bf16.msra.mxu0 %v2574
        %3367 = vmatprep.subr.bf16.mxu0 %v2589
        %3368 = vmatpush1.bf16.msra.mxu0 %v2588
        %3369 = vmatprep.subr.bf16.mxu0 %v2603
        %3370 = vmatpush1.bf16.msra.mxu0 %v2602
        %3371 = vmatprep.subr.bf16.mxu0 %v2617
        %3372 = vmatpush1.bf16.msra.mxu0 %v2616
        %3373 = vmatprep.subr.bf16.mxu0 %v2631
        %3374 = vmatpush1.bf16.msra.mxu0 %v2630
        %3375 = vmatprep.subr.bf16.mxu0 0
        %3376 = vmatpush1.bf16.msra.mxu0 0
        %3377 = vmatprep.subr.bf16.mxu0 0
        %3378 = vmatpush1.bf16.msra.mxu0 0
        %3379 = vmatprep.subr.bf16.mxu0 0
        %3380 = vmatpush1.bf16.msra.mxu0 0
        %3381 = vmatprep.subr.bf16.mxu0 0
        %3382 = vmatpush1.bf16.msra.mxu0 0
        %3383 = vmatprep.subr.bf16.mxu0 0
        %3384 = vmatpush1.bf16.msra.mxu0 0
        %3385 = vmatprep.subr.bf16.mxu0 0
        %3386 = vmatpush1.bf16.msra.mxu0 0
        %3387 = vmatprep.subr.bf16.mxu0 0
        %3388 = vmatpush1.bf16.msra.mxu0 0
        %3389 = vmatprep.subr.bf16.mxu0 0
        %3390 = vmatpush1.bf16.msra.mxu0 0
        %3391 = vmatprep.mubr.bf16.mxu0 0
        %3392 = vmatmul.mubr.bf16.gmra.mrb[0].mxu0 %v955
        %v3393 = vpop.f32.mrb[0].mxu0
        %v3394 = vadd.f32 %v3351, %v3393
        %v3395 = vpop.f32.mrb[0].mxu0
        %v3396 = vadd.f32 %v3353, %v3395
        %v3397 = vpop.f32.mrb[0].mxu0
        %v3398 = vadd.f32 %v3355, %v3397
        %v3399 = vpop.f32.mrb[0].mxu0
        %v3400 = vadd.f32 %v3357, %v3399
        %3401 = vdwg.mxu0
        %3402 = vmatprep.subr.bf16.mxu0 %v2311
        %3403 = vmatpush1.bf16.msra.mxu0 %v2310
        %3404 = vmatprep.subr.bf16.mxu0 %v2325
        %3405 = vmatpush1.bf16.msra.mxu0 %v2324
        %3406 = vmatprep.subr.bf16.mxu0 %v2339
        %3407 = vmatpush1.bf16.msra.mxu0 %v2338
        %3408 = vmatprep.subr.bf16.mxu0 %v2353
        %3409 = vmatpush1.bf16.msra.mxu0 %v2352
        %3410 = vmatprep.subr.bf16.mxu0 %v2367
        %3411 = vmatpush1.bf16.msra.mxu0 %v2366
        %3412 = vmatprep.subr.bf16.mxu0 %v2381
        %3413 = vmatpush1.bf16.msra.mxu0 %v2380
        %3414 = vmatprep.subr.bf16.mxu0 %v2395
        %3415 = vmatpush1.bf16.msra.mxu0 %v2394
        %3416 = vmatprep.subr.bf16.mxu0 %v2409
        %3417 = vmatpush1.bf16.msra.mxu0 %v2408
        %3418 = vmatprep.subr.bf16.mxu0 %v2423
        %3419 = vmatpush1.bf16.msra.mxu0 %v2422
        %3420 = vmatprep.subr.bf16.mxu0 %v2437
        %3421 = vmatpush1.bf16.msra.mxu0 %v2436
        %3422 = vmatprep.subr.bf16.mxu0 %v2451
        %3423 = vmatpush1.bf16.msra.mxu0 %v2450
        %3424 = vmatprep.subr.bf16.mxu0 %v2465
        %3425 = vmatpush1.bf16.msra.mxu0 %v2464
        %3426 = vmatprep.subr.bf16.mxu0 %v2479
        %3427 = vmatpush1.bf16.msra.mxu0 %v2478
        %3428 = vmatprep.subr.bf16.mxu0 %v2493
        %3429 = vmatpush1.bf16.msra.mxu0 %v2492
        %3430 = vmatprep.subr.bf16.mxu0 %v2507
        %3431 = vmatpush1.bf16.msra.mxu0 %v2506
        %3432 = vmatprep.subr.bf16.mxu0 %v2521
        %3433 = vmatpush1.bf16.msra.mxu0 %v2520
        %3434 = vmatprep.mubr.bf16.mxu0 %v954
        %3435 = vmatmul.mubr.bf16.gmra.mrb[0].mxu0 %v953
        %v3436 = vpop.f32.mrb[0].mxu0
        %v3437 = vadd.f32 0.0, %v3436
        %v3438 = vpop.f32.mrb[0].mxu0
        %v3439 = vadd.f32 0.0, %v3438
        %v3440 = vpop.f32.mrb[0].mxu0
        %v3441 = vadd.f32 0.0, %v3440
        %v3442 = vpop.f32.mrb[0].mxu0
        %v3443 = vadd.f32 0.0, %v3442
        %3444 = vdwg.mxu0
        %3445 = vmatprep.subr.bf16.mxu0 %v2535
        %3446 = vmatpush1.bf16.msra.mxu0 %v2534
        %3447 = vmatprep.subr.bf16.mxu0 %v2549
        %3448 = vmatpush1.bf16.msra.mxu0 %v2548
        %3449 = vmatprep.subr.bf16.mxu0 %v2563
        %3450 = vmatpush1.bf16.msra.mxu0 %v2562
        %3451 = vmatprep.subr.bf16.mxu0 %v2577
        %3452 = vmatpush1.bf16.msra.mxu0 %v2576
        %3453 = vmatprep.subr.bf16.mxu0 %v2591
        %3454 = vmatpush1.bf16.msra.mxu0 %v2590
        %3455 = vmatprep.subr.bf16.mxu0 %v2605
        %3456 = vmatpush1.bf16.msra.mxu0 %v2604
        %3457 = vmatprep.subr.bf16.mxu0 %v2619
        %3458 = vmatpush1.bf16.msra.mxu0 %v2618
        %3459 = vmatprep.subr.bf16.mxu0 %v2633
        %3460 = vmatpush1.bf16.msra.mxu0 %v2632
        %3461 = vmatprep.subr.bf16.mxu0 0
        %3462 = vmatpush1.bf16.msra.mxu0 0
        %3463 = vmatprep.subr.bf16.mxu0 0
        %3464 = vmatpush1.bf16.msra.mxu0 0
        %3465 = vmatprep.subr.bf16.mxu0 0
        %3466 = vmatpush1.bf16.msra.mxu0 0
        %3467 = vmatprep.subr.bf16.mxu0 0
        %3468 = vmatpush1.bf16.msra.mxu0 0
        %3469 = vmatprep.subr.bf16.mxu0 0
        %3470 = vmatpush1.bf16.msra.mxu0 0
        %3471 = vmatprep.subr.bf16.mxu0 0
        %3472 = vmatpush1.bf16.msra.mxu0 0
        %3473 = vmatprep.subr.bf16.mxu0 0
        %3474 = vmatpush1.bf16.msra.mxu0 0
        %3475 = vmatprep.subr.bf16.mxu0 0
        %3476 = vmatpush1.bf16.msra.mxu0 0
        %3477 = vmatprep.mubr.bf16.mxu0 0
        %3478 = vmatmul.mubr.bf16.gmra.mrb[0].mxu0 %v955
        %v3479 = vpop.f32.mrb[0].mxu0
        %v3480 = vadd.f32 %v3437, %v3479
        %v3481 = vpop.f32.mrb[0].mxu0
        %v3482 = vadd.f32 %v3439, %v3481
        %v3483 = vpop.f32.mrb[0].mxu0
        %v3484 = vadd.f32 %v3441, %v3483
        %v3485 = vpop.f32.mrb[0].mxu0
        %v3486 = vadd.f32 %v3443, %v3485
        %3487 = vdwg.mxu0
        %3488 = vmatprep.subr.bf16.mxu0 %v2313
        %3489 = vmatpush1.bf16.msra.mxu0 %v2312
        %3490 = vmatprep.subr.bf16.mxu0 %v2327
        %3491 = vmatpush1.bf16.msra.mxu0 %v2326
        %3492 = vmatprep.subr.bf16.mxu0 %v2341
        %3493 = vmatpush1.bf16.msra.mxu0 %v2340
        %3494 = vmatprep.subr.bf16.mxu0 %v2355
        %3495 = vmatpush1.bf16.msra.mxu0 %v2354
        %3496 = vmatprep.subr.bf16.mxu0 %v2369
        %3497 = vmatpush1.bf16.msra.mxu0 %v2368
        %3498 = vmatprep.subr.bf16.mxu0 %v2383
        %3499 = vmatpush1.bf16.msra.mxu0 %v2382
        %3500 = vmatprep.subr.bf16.mxu0 %v2397
        %3501 = vmatpush1.bf16.msra.mxu0 %v2396
        %3502 = vmatprep.subr.bf16.mxu0 %v2411
        %3503 = vmatpush1.bf16.msra.mxu0 %v2410
        %3504 = vmatprep.subr.bf16.mxu0 %v2425
        %3505 = vmatpush1.bf16.msra.mxu0 %v2424
        %3506 = vmatprep.subr.bf16.mxu0 %v2439
        %3507 = vmatpush1.bf16.msra.mxu0 %v2438
        %3508 = vmatprep.subr.bf16.mxu0 %v2453
        %3509 = vmatpush1.bf16.msra.mxu0 %v2452
        %3510 = vmatprep.subr.bf16.mxu0 %v2467
        %3511 = vmatpush1.bf16.msra.mxu0 %v2466
        %3512 = vmatprep.subr.bf16.mxu0 %v2481
        %3513 = vmatpush1.bf16.msra.mxu0 %v2480
        %3514 = vmatprep.subr.bf16.mxu0 %v2495
        %3515 = vmatpush1.bf16.msra.mxu0 %v2494
        %3516 = vmatprep.subr.bf16.mxu0 %v2509
        %3517 = vmatpush1.bf16.msra.mxu0 %v2508
        %3518 = vmatprep.subr.bf16.mxu0 %v2523
        %3519 = vmatpush1.bf16.msra.mxu0 %v2522
        %3520 = vmatprep.mubr.bf16.mxu0 %v954
        %3521 = vmatmul.mubr.bf16.gmra.mrb[0].mxu0 %v953
        %v3522 = vpop.f32.mrb[0].mxu0
        %v3523 = vadd.f32 0.0, %v3522
        %v3524 = vpop.f32.mrb[0].mxu0
        %v3525 = vadd.f32 0.0, %v3524
        %v3526 = vpop.f32.mrb[0].mxu0
        %v3527 = vadd.f32 0.0, %v3526
        %v3528 = vpop.f32.mrb[0].mxu0
        %v3529 = vadd.f32 0.0, %v3528
        %3530 = vdwg.mxu0
        %3531 = vmatprep.subr.bf16.mxu0 %v2537
        %3532 = vmatpush1.bf16.msra.mxu0 %v2536
        %3533 = vmatprep.subr.bf16.mxu0 %v2551
        %3534 = vmatpush1.bf16.msra.mxu0 %v2550
        %3535 = vmatprep.subr.bf16.mxu0 %v2565
        %3536 = vmatpush1.bf16.msra.mxu0 %v2564
        %3537 = vmatprep.subr.bf16.mxu0 %v2579
        %3538 = vmatpush1.bf16.msra.mxu0 %v2578
        %3539 = vmatprep.subr.bf16.mxu0 %v2593
        %3540 = vmatpush1.bf16.msra.mxu0 %v2592
        %3541 = vmatprep.subr.bf16.mxu0 %v2607
        %3542 = vmatpush1.bf16.msra.mxu0 %v2606
        %3543 = vmatprep.subr.bf16.mxu0 %v2621
        %3544 = vmatpush1.bf16.msra.mxu0 %v2620
        %3545 = vmatprep.subr.bf16.mxu0 %v2635
        %3546 = vmatpush1.bf16.msra.mxu0 %v2634
        %3547 = vmatprep.subr.bf16.mxu0 0
        %3548 = vmatpush1.bf16.msra.mxu0 0
        %3549 = vmatprep.subr.bf16.mxu0 0
        %3550 = vmatpush1.bf16.msra.mxu0 0
        %3551 = vmatprep.subr.bf16.mxu0 0
        %3552 = vmatpush1.bf16.msra.mxu0 0
        %3553 = vmatprep.subr.bf16.mxu0 0
        %3554 = vmatpush1.bf16.msra.mxu0 0
        %3555 = vmatprep.subr.bf16.mxu0 0
        %3556 = vmatpush1.bf16.msra.mxu0 0
        %3557 = vmatprep.subr.bf16.mxu0 0
        %3558 = vmatpush1.bf16.msra.mxu0 0
        %3559 = vmatprep.subr.bf16.mxu0 0
        %3560 = vmatpush1.bf16.msra.mxu0 0
        %3561 = vmatprep.subr.bf16.mxu0 0
        %3562 = vmatpush1.bf16.msra.mxu0 0
        %3563 = vmatprep.mubr.bf16.mxu0 0
        %3564 = vmatmul.mubr.bf16.gmra.mrb[0].mxu0 %v955
        %v3565 = vpop.f32.mrb[0].mxu0
        %v3566 = vadd.f32 %v3523, %v3565
        %v3567 = vpop.f32.mrb[0].mxu0
        %v3568 = vadd.f32 %v3525, %v3567
        %v3569 = vpop.f32.mrb[0].mxu0
        %v3570 = vadd.f32 %v3527, %v3569
        %v3571 = vpop.f32.mrb[0].mxu0
        %v3572 = vadd.f32 %v3529, %v3571
        %3573 = vdwg.mxu0
        %v3574 = vmul.f32 %v3308, 0.5
        %v3575 = vmul.f32 %v3310, 0.5
        %v3576 = vmul.f32 %v3394, 0.5
        %v3577 = vmul.f32 %v3396, 0.5
        %v3578 = vmul.f32 %v3480, 0.5
        %v3579 = vmul.f32 %v3482, 0.5
        %v3580 = vmul.f32 %v3312, 0.5
        %v3581 = vmul.f32 %v3314, 0.5
        %v3582 = vmul.f32 %v3398, 0.5
        %v3583 = vmul.f32 %v3400, 0.5
        %v3584 = vmul.f32 %v3484, 0.5
        %v3585 = vmul.f32 %v3486, 0.5
        %v3586 = vmul.f32 %v3308, 0.70710677
        %v3587 = vmul.f32 %v3310, 0.70710677
        %v3588 = vmul.f32 %v3394, 0.70710677
        %v3589 = vmul.f32 %v3396, 0.70710677
        %v3590 = vmul.f32 %v3480, 0.70710677
        %v3591 = vmul.f32 %v3482, 0.70710677
        %v3592 = vmul.f32 %v3312, 0.70710677
        %v3593 = vmul.f32 %v3314, 0.70710677
        %v3594 = vmul.f32 %v3398, 0.70710677
        %v3595 = vmul.f32 %v3400, 0.70710677
        %v3596 = vmul.f32 %v3484, 0.70710677
        %v3597 = vmul.f32 %v3486, 0.70710677
        %vm3598 = vcmp.lt.f32.partialorder %v3586, 0.0
        %vm3599 = vcmp.lt.f32.partialorder %v3587, 0.0
        %vm3600 = vcmp.lt.f32.partialorder %v3588, 0.0
        %vm3601 = vcmp.lt.f32.partialorder %v3589, 0.0
        %vm3602 = vcmp.lt.f32.partialorder %v3590, 0.0
        %vm3603 = vcmp.lt.f32.partialorder %v3591, 0.0
        %vm3604 = vcmp.lt.f32.partialorder %v3592, 0.0
        %vm3605 = vcmp.lt.f32.partialorder %v3593, 0.0
        %vm3606 = vcmp.lt.f32.partialorder %v3594, 0.0
        %vm3607 = vcmp.lt.f32.partialorder %v3595, 0.0
        %vm3608 = vcmp.lt.f32.partialorder %v3596, 0.0
        %vm3609 = vcmp.lt.f32.partialorder %v3597, 0.0
        %v3610 = vsel %vm3598, -1.0, 1.0
        %v3611 = vsel %vm3599, -1.0, 1.0
        %v3612 = vsel %vm3600, -1.0, 1.0
        %v3613 = vsel %vm3601, -1.0, 1.0
        %v3614 = vsel %vm3602, -1.0, 1.0
        %v3615 = vsel %vm3603, -1.0, 1.0
        %v3616 = vsel %vm3604, -1.0, 1.0
        %v3617 = vsel %vm3605, -1.0, 1.0
        %v3618 = vsel %vm3606, -1.0, 1.0
        %v3619 = vsel %vm3607, -1.0, 1.0
        %v3620 = vsel %vm3608, -1.0, 1.0
        %v3621 = vsel %vm3609, -1.0, 1.0
        %v3622 = vand.u32 2147483647, %v3586
        %v3623 = vand.u32 2147483647, %v3587
        %v3624 = vand.u32 2147483647, %v3588
        %v3625 = vand.u32 2147483647, %v3589
        %v3626 = vand.u32 2147483647, %v3590
        %v3627 = vand.u32 2147483647, %v3591
        %v3628 = vand.u32 2147483647, %v3592
        %v3629 = vand.u32 2147483647, %v3593
        %v3630 = vand.u32 2147483647, %v3594
        %v3631 = vand.u32 2147483647, %v3595
        %v3632 = vand.u32 2147483647, %v3596
        %v3633 = vand.u32 2147483647, %v3597
        %v3634 = vmul.f32 %v3622, 0.3275911
        %v3635 = vmul.f32 %v3623, 0.3275911
        %v3636 = vmul.f32 %v3624, 0.3275911
        %v3637 = vmul.f32 %v3625, 0.3275911
        %v3638 = vmul.f32 %v3626, 0.3275911
        %v3639 = vmul.f32 %v3627, 0.3275911
        %v3640 = vmul.f32 %v3628, 0.3275911
        %v3641 = vmul.f32 %v3629, 0.3275911
        %v3642 = vmul.f32 %v3630, 0.3275911
        %v3643 = vmul.f32 %v3631, 0.3275911
        %v3644 = vmul.f32 %v3632, 0.3275911
        %v3645 = vmul.f32 %v3633, 0.3275911
        %v3646 = vadd.f32 %v3634, 1.0
        %v3647 = vadd.f32 %v3635, 1.0
        %v3648 = vadd.f32 %v3636, 1.0
        %v3649 = vadd.f32 %v3637, 1.0
        %v3650 = vadd.f32 %v3638, 1.0
        %v3651 = vadd.f32 %v3639, 1.0
        %v3652 = vadd.f32 %v3640, 1.0
        %v3653 = vadd.f32 %v3641, 1.0
        %v3654 = vadd.f32 %v3642, 1.0
        %v3655 = vadd.f32 %v3643, 1.0
        %v3656 = vadd.f32 %v3644, 1.0
        %v3657 = vadd.f32 %v3645, 1.0
        %v3658 = vrcp.pop %v3646
        %v3659 = vmul.f32 1.0, %v3658
        %v3660 = vrcp.pop %v3647
        %v3661 = vmul.f32 1.0, %v3660
        %v3662 = vrcp.pop %v3648
        %v3663 = vmul.f32 1.0, %v3662
        %v3664 = vrcp.pop %v3649
        %v3665 = vmul.f32 1.0, %v3664
        %v3666 = vrcp.pop %v3650
        %v3667 = vmul.f32 1.0, %v3666
        %v3668 = vrcp.pop %v3651
        %v3669 = vmul.f32 1.0, %v3668
        %v3670 = vrcp.pop %v3652
        %v3671 = vmul.f32 1.0, %v3670
        %v3672 = vrcp.pop %v3653
        %v3673 = vmul.f32 1.0, %v3672
        %v3674 = vrcp.pop %v3654
        %v3675 = vmul.f32 1.0, %v3674
        %v3676 = vrcp.pop %v3655
        %v3677 = vmul.f32 1.0, %v3676
        %v3678 = vrcp.pop %v3656
        %v3679 = vmul.f32 1.0, %v3678
        %v3680 = vrcp.pop %v3657
        %v3681 = vmul.f32 1.0, %v3680
        %v3682 = vmul.f32 %v3659, 1.0614054
        %v3683 = vmul.f32 %v3661, 1.0614054
        %v3684 = vmul.f32 %v3663, 1.0614054
        %v3685 = vmul.f32 %v3665, 1.0614054
        %v3686 = vmul.f32 %v3667, 1.0614054
        %v3687 = vmul.f32 %v3669, 1.0614054
        %v3688 = vmul.f32 %v3671, 1.0614054
        %v3689 = vmul.f32 %v3673, 1.0614054
        %v3690 = vmul.f32 %v3675, 1.0614054
        %v3691 = vmul.f32 %v3677, 1.0614054
        %v3692 = vmul.f32 %v3679, 1.0614054
        %v3693 = vmul.f32 %v3681, 1.0614054
        %v3694 = vadd.f32 %v3682, -1.4531521
        %v3695 = vadd.f32 %v3683, -1.4531521
        %v3696 = vadd.f32 %v3684, -1.4531521
        %v3697 = vadd.f32 %v3685, -1.4531521
        %v3698 = vadd.f32 %v3686, -1.4531521
        %v3699 = vadd.f32 %v3687, -1.4531521
        %v3700 = vadd.f32 %v3688, -1.4531521
        %v3701 = vadd.f32 %v3689, -1.4531521
        %v3702 = vadd.f32 %v3690, -1.4531521
        %v3703 = vadd.f32 %v3691, -1.4531521
        %v3704 = vadd.f32 %v3692, -1.4531521
        %v3705 = vadd.f32 %v3693, -1.4531521
        %v3706 = vmul.f32 %v3694, %v3659
        %v3707 = vmul.f32 %v3695, %v3661
        %v3708 = vmul.f32 %v3696, %v3663
        %v3709 = vmul.f32 %v3697, %v3665
        %v3710 = vmul.f32 %v3698, %v3667
        %v3711 = vmul.f32 %v3699, %v3669
        %v3712 = vmul.f32 %v3700, %v3671
        %v3713 = vmul.f32 %v3701, %v3673
        %v3714 = vmul.f32 %v3702, %v3675
        %v3715 = vmul.f32 %v3703, %v3677
        %v3716 = vmul.f32 %v3704, %v3679
        %v3717 = vmul.f32 %v3705, %v3681
        %v3718 = vadd.f32 %v3706, 1.4214138
        %v3719 = vadd.f32 %v3707, 1.4214138
        %v3720 = vadd.f32 %v3708, 1.4214138
        %v3721 = vadd.f32 %v3709, 1.4214138
        %v3722 = vadd.f32 %v3710, 1.4214138
        %v3723 = vadd.f32 %v3711, 1.4214138
        %v3724 = vadd.f32 %v3712, 1.4214138
        %v3725 = vadd.f32 %v3713, 1.4214138
        %v3726 = vadd.f32 %v3714, 1.4214138
        %v3727 = vadd.f32 %v3715, 1.4214138
        %v3728 = vadd.f32 %v3716, 1.4214138
        %v3729 = vadd.f32 %v3717, 1.4214138
        %v3730 = vmul.f32 %v3718, %v3659
        %v3731 = vmul.f32 %v3719, %v3661
        %v3732 = vmul.f32 %v3720, %v3663
        %v3733 = vmul.f32 %v3721, %v3665
        %v3734 = vmul.f32 %v3722, %v3667
        %v3735 = vmul.f32 %v3723, %v3669
        %v3736 = vmul.f32 %v3724, %v3671
        %v3737 = vmul.f32 %v3725, %v3673
        %v3738 = vmul.f32 %v3726, %v3675
        %v3739 = vmul.f32 %v3727, %v3677
        %v3740 = vmul.f32 %v3728, %v3679
        %v3741 = vmul.f32 %v3729, %v3681
        %v3742 = vadd.f32 %v3730, -0.28449672
        %v3743 = vadd.f32 %v3731, -0.28449672
        %v3744 = vadd.f32 %v3732, -0.28449672
        %v3745 = vadd.f32 %v3733, -0.28449672
        %v3746 = vadd.f32 %v3734, -0.28449672
        %v3747 = vadd.f32 %v3735, -0.28449672
        %v3748 = vadd.f32 %v3736, -0.28449672
        %v3749 = vadd.f32 %v3737, -0.28449672
        %v3750 = vadd.f32 %v3738, -0.28449672
        %v3751 = vadd.f32 %v3739, -0.28449672
        %v3752 = vadd.f32 %v3740, -0.28449672
        %v3753 = vadd.f32 %v3741, -0.28449672
        %v3754 = vmul.f32 %v3742, %v3659
        %v3755 = vmul.f32 %v3743, %v3661
        %v3756 = vmul.f32 %v3744, %v3663
        %v3757 = vmul.f32 %v3745, %v3665
        %v3758 = vmul.f32 %v3746, %v3667
        %v3759 = vmul.f32 %v3747, %v3669
        %v3760 = vmul.f32 %v3748, %v3671
        %v3761 = vmul.f32 %v3749, %v3673
        %v3762 = vmul.f32 %v3750, %v3675
        %v3763 = vmul.f32 %v3751, %v3677
        %v3764 = vmul.f32 %v3752, %v3679
        %v3765 = vmul.f32 %v3753, %v3681
        %v3766 = vadd.f32 %v3754, 0.2548296
        %v3767 = vadd.f32 %v3755, 0.2548296
        %v3768 = vadd.f32 %v3756, 0.2548296
        %v3769 = vadd.f32 %v3757, 0.2548296
        %v3770 = vadd.f32 %v3758, 0.2548296
        %v3771 = vadd.f32 %v3759, 0.2548296
        %v3772 = vadd.f32 %v3760, 0.2548296
        %v3773 = vadd.f32 %v3761, 0.2548296
        %v3774 = vadd.f32 %v3762, 0.2548296
        %v3775 = vadd.f32 %v3763, 0.2548296
        %v3776 = vadd.f32 %v3764, 0.2548296
        %v3777 = vadd.f32 %v3765, 0.2548296
        %v3778 = vmul.f32 %v3766, %v3659
        %v3779 = vmul.f32 %v3767, %v3661
        %v3780 = vmul.f32 %v3768, %v3663
        %v3781 = vmul.f32 %v3769, %v3665
        %v3782 = vmul.f32 %v3770, %v3667
        %v3783 = vmul.f32 %v3771, %v3669
        %v3784 = vmul.f32 %v3772, %v3671
        %v3785 = vmul.f32 %v3773, %v3673
        %v3786 = vmul.f32 %v3774, %v3675
        %v3787 = vmul.f32 %v3775, %v3677
        %v3788 = vmul.f32 %v3776, %v3679
        %v3789 = vmul.f32 %v3777, %v3681
        %v3790 = vsub.f32 0.0, %v3622
        %v3791 = vsub.f32 0.0, %v3623
        %v3792 = vsub.f32 0.0, %v3624
        %v3793 = vsub.f32 0.0, %v3625
        %v3794 = vsub.f32 0.0, %v3626
        %v3795 = vsub.f32 0.0, %v3627
        %v3796 = vsub.f32 0.0, %v3628
        %v3797 = vsub.f32 0.0, %v3629
        %v3798 = vsub.f32 0.0, %v3630
        %v3799 = vsub.f32 0.0, %v3631
        %v3800 = vsub.f32 0.0, %v3632
        %v3801 = vsub.f32 0.0, %v3633
        %v3802 = vmul.f32 %v3790, %v3622
        %v3803 = vmul.f32 %v3791, %v3623
        %v3804 = vmul.f32 %v3792, %v3624
        %v3805 = vmul.f32 %v3793, %v3625
        %v3806 = vmul.f32 %v3794, %v3626
        %v3807 = vmul.f32 %v3795, %v3627
        %v3808 = vmul.f32 %v3796, %v3628
        %v3809 = vmul.f32 %v3797, %v3629
        %v3810 = vmul.f32 %v3798, %v3630
        %v3811 = vmul.f32 %v3799, %v3631
        %v3812 = vmul.f32 %v3800, %v3632
        %v3813 = vmul.f32 %v3801, %v3633
        %v3814 = vmul.f32 %v3802, 1.442695
        %v3815 = vpow.pop %v3814
        %v3816 = vmul.f32 %v3803, 1.442695
        %v3817 = vpow.pop %v3816
        %v3818 = vmul.f32 %v3804, 1.442695
        %v3819 = vpow.pop %v3818
        %v3820 = vmul.f32 %v3805, 1.442695
        %v3821 = vpow.pop %v3820
        %v3822 = vmul.f32 %v3806, 1.442695
        %v3823 = vpow.pop %v3822
        %v3824 = vmul.f32 %v3807, 1.442695
        %v3825 = vpow.pop %v3824
        %v3826 = vmul.f32 %v3808, 1.442695
        %v3827 = vpow.pop %v3826
        %v3828 = vmul.f32 %v3809, 1.442695
        %v3829 = vpow.pop %v3828
        %v3830 = vmul.f32 %v3810, 1.442695
        %v3831 = vpow.pop %v3830
        %v3832 = vmul.f32 %v3811, 1.442695
        %v3833 = vpow.pop %v3832
        %v3834 = vmul.f32 %v3812, 1.442695
        %v3835 = vpow.pop %v3834
        %v3836 = vmul.f32 %v3813, 1.442695
        %v3837 = vpow.pop %v3836
        %v3838 = vmul.f32 %v3778, %v3815
        %v3839 = vmul.f32 %v3779, %v3817
        %v3840 = vmul.f32 %v3780, %v3819
        %v3841 = vmul.f32 %v3781, %v3821
        %v3842 = vmul.f32 %v3782, %v3823
        %v3843 = vmul.f32 %v3783, %v3825
        %v3844 = vmul.f32 %v3784, %v3827
        %v3845 = vmul.f32 %v3785, %v3829
        %v3846 = vmul.f32 %v3786, %v3831
        %v3847 = vmul.f32 %v3787, %v3833
        %v3848 = vmul.f32 %v3788, %v3835
        %v3849 = vmul.f32 %v3789, %v3837
        %v3850 = vsub.f32 1.0, %v3838
        %v3851 = vsub.f32 1.0, %v3839
        %v3852 = vsub.f32 1.0, %v3840
        %v3853 = vsub.f32 1.0, %v3841
        %v3854 = vsub.f32 1.0, %v3842
        %v3855 = vsub.f32 1.0, %v3843
        %v3856 = vsub.f32 1.0, %v3844
        %v3857 = vsub.f32 1.0, %v3845
        %v3858 = vsub.f32 1.0, %v3846
        %v3859 = vsub.f32 1.0, %v3847
        %v3860 = vsub.f32 1.0, %v3848
        %v3861 = vsub.f32 1.0, %v3849
        %v3862 = vmul.f32 %v3610, %v3850
        %v3863 = vmul.f32 %v3611, %v3851
        %v3864 = vmul.f32 %v3612, %v3852
        %v3865 = vmul.f32 %v3613, %v3853
        %v3866 = vmul.f32 %v3614, %v3854
        %v3867 = vmul.f32 %v3615, %v3855
        %v3868 = vmul.f32 %v3616, %v3856
        %v3869 = vmul.f32 %v3617, %v3857
        %v3870 = vmul.f32 %v3618, %v3858
        %v3871 = vmul.f32 %v3619, %v3859
        %v3872 = vmul.f32 %v3620, %v3860
        %v3873 = vmul.f32 %v3621, %v3861
        %v3874 = vadd.f32 %v3862, 1.0
        %v3875 = vadd.f32 %v3863, 1.0
        %v3876 = vadd.f32 %v3864, 1.0
        %v3877 = vadd.f32 %v3865, 1.0
        %v3878 = vadd.f32 %v3866, 1.0
        %v3879 = vadd.f32 %v3867, 1.0
        %v3880 = vadd.f32 %v3868, 1.0
        %v3881 = vadd.f32 %v3869, 1.0
        %v3882 = vadd.f32 %v3870, 1.0
        %v3883 = vadd.f32 %v3871, 1.0
        %v3884 = vadd.f32 %v3872, 1.0
        %v3885 = vadd.f32 %v3873, 1.0
        %v3886 = vmul.f32 %v3574, %v3874
        %v3887 = vmul.f32 %v3575, %v3875
        %v3888 = vmul.f32 %v3576, %v3876
        %v3889 = vmul.f32 %v3577, %v3877
        %v3890 = vmul.f32 %v3578, %v3878
        %v3891 = vmul.f32 %v3579, %v3879
        %v3892 = vmul.f32 %v3580, %v3880
        %v3893 = vmul.f32 %v3581, %v3881
        %v3894 = vmul.f32 %v3582, %v3882
        %v3895 = vmul.f32 %v3583, %v3883
        %v3896 = vmul.f32 %v3584, %v3884
        %v3897 = vmul.f32 %v3585, %v3885
        %v3898 = vmul.f32 %v3050, %v3886
        %v3899 = vmul.f32 %v3052, %v3887
        %v3900 = vmul.f32 %v3136, %v3888
        %v3901 = vmul.f32 %v3138, %v3889
        %v3902 = vmul.f32 %v3222, %v3890
        %v3903 = vmul.f32 %v3224, %v3891
        %v3904 = vmul.f32 %v3054, %v3892
        %v3905 = vmul.f32 %v3056, %v3893
        %v3906 = vmul.f32 %v3140, %v3894
        %v3907 = vmul.f32 %v3142, %v3895
        %v3908 = vmul.f32 %v3226, %v3896
        %v3909 = vmul.f32 %v3228, %v3897
        %v3910 = vpack.c.bf16 %v3904, %v3898
        %v3911 = vpack.c.bf16 %v3905, %v3899
        %v3912 = vpack.c.bf16 %v3906, %v3900
        %s3913 = sld [smem:[#allocation3 + %s31]]
        %v3914 = vld [vmem:[%s5] sm:$0xff]
        %v3915 = vld [vmem:[%s5 + $0x8] sm:$0xff]
        %v3916 = vstv %s3913
        %v3917 = vmul.f32 %v3916, %v3914
        %v3918 = vmul.f32 %v3916, %v3915
        %v3919 = vld [vmem:[%s6] sm:$0xff]
        %v3920 = vld [vmem:[%s6 + $0x8] sm:$0xff]
        %v3921 = vadd.f32 %v3917, %v3919
        %v3922 = vadd.f32 %v3918, %v3920
        %3923 = vmatprep.subr.mxu0 0.0
        %3924 = vmatpush1.xpose.msra.mxu0 %v3568
        %3925 = vmatprep.subr.mxu0 0.0
        %3926 = vmatpush1.xpose.msra.mxu0 %v3572
        %3927 = vmatprep.subr.mxu0 0.0
        %3928 = vmatpush1.xpose.msra.mxu0 0.0
        %3929 = vmatprep.subr.mxu0 0.0
        %3930 = vmatpush1.xpose.msra.mxu0 0.0
        %3931 = vmatprep.subr.mxu0 0.0
        %3932 = vmatpush1.xpose.msra.mxu0 0.0
        %3933 = vmatprep.subr.mxu0 0.0
        %3934 = vmatpush1.xpose.msra.mxu0 0.0
        %3935 = vmatprep.subr.mxu0 0.0
        %3936 = vmatpush1.xpose.msra.mxu0 0.0
        %3937 = vmatprep.subr.mxu0 0.0
        %3938 = vmatpush1.xpose.msra.mxu0 0.0
        %3939 = vmatprep.subr.mxu0 0.0
        %3940 = vmatpush1.xpose.msra.mxu0 0.0
        %3941 = vmatprep.subr.mxu0 0.0
        %3942 = vmatpush1.xpose.msra.mxu0 0.0
        %3943 = vmatprep.subr.mxu0 0.0
        %3944 = vmatpush1.xpose.msra.mxu0 0.0
        %3945 = vmatprep.subr.mxu0 0.0
        %3946 = vmatpush1.xpose.msra.mxu0 0.0
        %3947 = vmatprep.subr.mxu0 0.0
        %3948 = vmatpush1.xpose.msra.mxu0 0.0
        %3949 = vmatprep.subr.mxu0 0.0
        %3950 = vmatpush1.xpose.msra.mxu0 0.0
        %3951 = vmatprep.subr.mxu0 0.0
        %3952 = vmatpush1.xpose.msra.mxu0 0.0
        %3953 = vmatprep.subr.mxu0 0.0
        %3954 = vmatpush1.xpose.msra.mxu0 0.0
        %3955 = vmatprep.subr.mxu0 0.0
        %3956 = vmatpush1.xpose.msra.mxu0 0.0
        %3957 = vmatprep.subr.mxu0 0.0
        %3958 = vmatpush1.xpose.msra.mxu0 0.0
        %3959 = vmatprep.subr.mxu0 0.0
        %3960 = vmatpush1.xpose.msra.mxu0 0.0
        %3961 = vmatprep.subr.mxu0 0.0
        %3962 = vmatpush1.xpose.msra.mxu0 0.0
        %3963 = vmatprep.subr.mxu0 0.0
        %3964 = vmatpush1.xpose.msra.mxu0 0.0
        %3965 = vmatprep.subr.mxu0 0.0
        %3966 = vmatpush1.xpose.msra.mxu0 0.0
        %3967 = vmatprep.subr.mxu0 0.0
        %3968 = vmatpush1.xpose.msra.mxu0 0.0
        %3969 = vmatprep.subr.mxu0 0.0
        %3970 = vmatpush1.xpose.msra.mxu0 0.0
        %3971 = vmatprep.subr.mxu0 0.0
        %3972 = vmatpush1.xpose.msra.mxu0 0.0
        %3973 = vmatprep.subr.mxu0 0.0
        %3974 = vmatpush1.xpose.msra.mxu0 0.0
        %3975 = vmatprep.subr.mxu0 0.0
        %3976 = vmatpush1.xpose.msra.mxu0 0.0
        %3977 = vmatprep.subr.mxu0 0.0
        %3978 = vmatpush1.xpose.msra.mxu0 0.0
        %3979 = vmatprep.subr.mxu0 0.0
        %3980 = vmatpush1.xpose.msra.mxu0 0.0
        %3981 = vmatprep.subr.mxu0 0.0
        %3982 = vmatpush1.xpose.msra.mxu0 0.0
        %3983 = vmatprep.subr.mxu0 0.0
        %3984 = vmatpush1.xpose.msra.mxu0 0.0
        %3985 = vmatprep.subr.mxu0 0.0
        %3986 = vmatpush1.xpose.msra.mxu0 0.0
        %3987 = vmatprep.mubr.f32.mxu0 0.0
        %3988 = vmatmul.mubr.f32.gmra.mrb[0].mxu0 %v3566
        %v3989 = vpop.f32.mrb[0].mxu0
        %v3990 = vadd.f32 0.0, %v3989
        %v3991 = vpop.f32.mrb[0].mxu0
        %3992 = vmatprep.mubr.f32.mxu0 0.0
        %3993 = vmatmul.mubr.f32.gmra.mrb[0].mxu0 %v3570
        %v3994 = vpop.f32.mrb[0].mxu0
        %v3995 = vadd.f32 0.0, %v3994
        %v3996 = vpop.f32.mrb[0].mxu0
        %3997 = vdwg.mxu0
        %v3998 = vmul.f32 %v3990, 0.14433756
        %v3999 = vmul.f32 %v3995, 0.14433756
        %v4000 = vadd.f32 %v3998, %v3921
        %v4001 = vadd.f32 %v3999, %v3922
        %vm4002 = vcmask 130048
        %v4003 = vsel %vm4002, %v4000, -inf
        %4004 = vmax.xlane.f32.xlu0 %v4003
        %v4005 = vpop.xlane.xlu0 %4004
        %v4006 = vsel %vm4002, %v4001, -inf
        %4007 = vmax.xlane.f32.xlu0 %v4006
        %v4008 = vpop.xlane.xlu0 %4007
        %v4009 = vsub.f32 %v4000, %v4005
        %v4010 = vsub.f32 %v4001, %v4008
        %v4011 = vmul.f32 %v4009, 1.442695
        %v4012 = vpow.pop %v4011
        %v4013 = vmul.f32 %v4010, 1.442695
        %v4014 = vpow.pop %v4013
        %v4015 = vsel %vm4002, %v4012, 0.0
        %4016 = vadd.xlane.f32.xlu0 %v4015
        %v4017 = vpop.xlane.xlu0 %4016
        %v4018 = vsel %vm4002, %v4014, 0.0
        %4019 = vadd.xlane.f32.xlu0 %v4018
        %v4020 = vpop.xlane.xlu0 %4019
        %v4021 = vrcp.pop %v4017
        %v4022 = vrcp.pop %v4020
        %v4023 = vmul.f32 %v4012, %v4021
        %v4024 = vmul.f32 %v4014, %v4022
        %v4026 = vsel %vm4002, %v4023, 0
        %v4029 = vsel %vm4002, %v4024, 0
        %4031 = vmatprep.subr.mxu0 %v3902
        %4032 = vmatpush1.msra.mxu0 %v3901
        %4033 = vmatprep.subr.mxu0 %v3908
        %4034 = vmatpush1.msra.mxu0 %v3907
        %4035 = vmatprep.subr.mxu0 0.0
        %4036 = vmatpush1.msra.mxu0 0.0
        %4037 = vmatprep.subr.mxu0 0.0
        %4038 = vmatpush1.msra.mxu0 0.0
        %4039 = vmatprep.subr.mxu0 0.0
        %4040 = vmatpush1.msra.mxu0 0.0
        %4041 = vmatprep.subr.mxu0 0.0
        %4042 = vmatpush1.msra.mxu0 0.0
        %4043 = vmatprep.subr.mxu0 0.0
        %4044 = vmatpush1.msra.mxu0 0.0
        %4045 = vmatprep.subr.mxu0 0.0
        %4046 = vmatpush1.msra.mxu0 0.0
        %4047 = vmatprep.subr.mxu0 0.0
        %4048 = vmatpush1.msra.mxu0 0.0
        %4049 = vmatprep.subr.mxu0 0.0
        %4050 = vmatpush1.msra.mxu0 0.0
        %4051 = vmatprep.subr.mxu0 0.0
        %4052 = vmatpush1.msra.mxu0 0.0
        %4053 = vmatprep.subr.mxu0 0.0
        %4054 = vmatpush1.msra.mxu0 0.0
        %4055 = vmatprep.subr.mxu0 0.0
        %4056 = vmatpush1.msra.mxu0 0.0
        %4057 = vmatprep.subr.mxu0 0.0
        %4058 = vmatpush1.msra.mxu0 0.0
        %4059 = vmatprep.subr.mxu0 0.0
        %4060 = vmatpush1.msra.mxu0 0.0
        %4061 = vmatprep.subr.mxu0 0.0
        %4062 = vmatpush1.msra.mxu0 0.0
        %4063 = vmatprep.subr.mxu0 0.0
        %4064 = vmatpush1.msra.mxu0 0.0
        %4065 = vmatprep.subr.mxu0 0.0
        %4066 = vmatpush1.msra.mxu0 0.0
        %4067 = vmatprep.subr.mxu0 0.0
        %4068 = vmatpush1.msra.mxu0 0.0
        %4069 = vmatprep.subr.mxu0 0.0
        %4070 = vmatpush1.msra.mxu0 0.0
        %4071 = vmatprep.subr.mxu0 0.0
        %4072 = vmatpush1.msra.mxu0 0.0
        %4073 = vmatprep.subr.mxu0 0.0
        %4074 = vmatpush1.msra.mxu0 0.0
        %4075 = vmatprep.subr.mxu0 0.0
        %4076 = vmatpush1.msra.mxu0 0.0
        %4077 = vmatprep.subr.mxu0 0.0
        %4078 = vmatpush1.msra.mxu0 0.0
        %4079 = vmatprep.subr.mxu0 0.0
        %4080 = vmatpush1.msra.mxu0 0.0
        %4081 = vmatprep.subr.mxu0 0.0
        %4082 = vmatpush1.msra.mxu0 0.0
        %4083 = vmatprep.subr.mxu0 0.0
        %4084 = vmatpush1.msra.mxu0 0.0
        %4085 = vmatprep.subr.mxu0 0.0
        %4086 = vmatpush1.msra.mxu0 0.0
        %4087 = vmatprep.subr.mxu0 0.0
        %4088 = vmatpush1.msra.mxu0 0.0
        %4089 = vmatprep.subr.mxu0 0.0
        %4090 = vmatpush1.msra.mxu0 0.0
        %4091 = vmatprep.subr.mxu0 0.0
        %4092 = vmatpush1.msra.mxu0 0.0
        %4093 = vmatprep.subr.mxu0 0.0
        %4094 = vmatpush1.msra.mxu0 0.0
        %4095 = vmatprep.mubr.f32.mxu0 0.0
        %4096 = vmatmul.mubr.f32.gmra.mrb[0].mxu0 %v4026
        %v4097 = vpop.f32.mrb[0].mxu0
        %v4098 = vadd.f32 0.0, %v4097
        %v4099 = vpop.f32.mrb[0].mxu0
        %v4100 = vadd.f32 0.0, %v4099
        %4101 = vmatprep.mubr.f32.mxu0 0.0
        %4102 = vmatmul.mubr.f32.gmra.mrb[0].mxu0 %v4029
        %v4103 = vpop.f32.mrb[0].mxu0
        %v4104 = vadd.f32 0.0, %v4103
        %v4105 = vpop.f32.mrb[0].mxu0
        %v4106 = vadd.f32 0.0, %v4105
        %4107 = vdwg.mxu0
        %4108 = vmatprep.subr.mxu0 0.0
        %4109 = vmatpush1.msra.mxu0 %v3903
        %4110 = vmatprep.subr.mxu0 0.0
        %4111 = vmatpush1.msra.mxu0 %v3909
        %4112 = vmatprep.subr.mxu0 0.0
        %4113 = vmatpush1.msra.mxu0 0.0
        %4114 = vmatprep.subr.mxu0 0.0
        %4115 = vmatpush1.msra.mxu0 0.0
        %4116 = vmatprep.subr.mxu0 0.0
        %4117 = vmatpush1.msra.mxu0 0.0
        %4118 = vmatprep.subr.mxu0 0.0
        %4119 = vmatpush1.msra.mxu0 0.0
        %4120 = vmatprep.subr.mxu0 0.0
        %4121 = vmatpush1.msra.mxu0 0.0
        %4122 = vmatprep.subr.mxu0 0.0
        %4123 = vmatpush1.msra.mxu0 0.0
        %4124 = vmatprep.subr.mxu0 0.0
        %4125 = vmatpush1.msra.mxu0 0.0
        %4126 = vmatprep.subr.mxu0 0.0
        %4127 = vmatpush1.msra.mxu0 0.0
        %4128 = vmatprep.subr.mxu0 0.0
        %4129 = vmatpush1.msra.mxu0 0.0
        %4130 = vmatprep.subr.mxu0 0.0
        %4131 = vmatpush1.msra.mxu0 0.0
        %4132 = vmatprep.subr.mxu0 0.0
        %4133 = vmatpush1.msra.mxu0 0.0
        %4134 = vmatprep.subr.mxu0 0.0
        %4135 = vmatpush1.msra.mxu0 0.0
        %4136 = vmatprep.subr.mxu0 0.0
        %4137 = vmatpush1.msra.mxu0 0.0
        %4138 = vmatprep.subr.mxu0 0.0
        %4139 = vmatpush1.msra.mxu0 0.0
        %4140 = vmatprep.subr.mxu0 0.0
        %4141 = vmatpush1.msra.mxu0 0.0
        %4142 = vmatprep.subr.mxu0 0.0
        %4143 = vmatpush1.msra.mxu0 0.0
        %4144 = vmatprep.subr.mxu0 0.0
        %4145 = vmatpush1.msra.mxu0 0.0
        %4146 = vmatprep.subr.mxu0 0.0
        %4147 = vmatpush1.msra.mxu0 0.0
        %4148 = vmatprep.subr.mxu0 0.0
        %4149 = vmatpush1.msra.mxu0 0.0
        %4150 = vmatprep.subr.mxu0 0.0
        %4151 = vmatpush1.msra.mxu0 0.0
        %4152 = vmatprep.subr.mxu0 0.0
        %4153 = vmatpush1.msra.mxu0 0.0
        %4154 = vmatprep.subr.mxu0 0.0
        %4155 = vmatpush1.msra.mxu0 0.0
        %4156 = vmatprep.subr.mxu0 0.0
        %4157 = vmatpush1.msra.mxu0 0.0
        %4158 = vmatprep.subr.mxu0 0.0
        %4159 = vmatpush1.msra.mxu0 0.0
        %4160 = vmatprep.subr.mxu0 0.0
        %4161 = vmatpush1.msra.mxu0 0.0
        %4162 = vmatprep.subr.mxu0 0.0
        %4163 = vmatpush1.msra.mxu0 0.0
        %4164 = vmatprep.subr.mxu0 0.0
        %4165 = vmatpush1.msra.mxu0 0.0
        %4166 = vmatprep.subr.mxu0 0.0
        %4167 = vmatpush1.msra.mxu0 0.0
        %4168 = vmatprep.subr.mxu0 0.0
        %4169 = vmatpush1.msra.mxu0 0.0
        %4170 = vmatprep.subr.mxu0 0.0
        %4171 = vmatpush1.msra.mxu0 0.0
        %4172 = vmatprep.mubr.f32.mxu0 0.0
        %4173 = vmatmul.mubr.f32.gmra.mrb[0].mxu0 %v4026
        %v4174 = vpop.f32.mrb[0].mxu0
        %v4175 = vadd.f32 0.0, %v4174
        %v4176 = vpop.f32.mrb[0].mxu0
        %4177 = vmatprep.mubr.f32.mxu0 0.0
        %4178 = vmatmul.mubr.f32.gmra.mrb[0].mxu0 %v4029
        %v4179 = vpop.f32.mrb[0].mxu0
        %v4180 = vadd.f32 0.0, %v4179
        %v4181 = vpop.f32.mrb[0].mxu0
        %4182 = vdwg.mxu0
        %v4183 = vpack.c.bf16 %v4104, %v4098
        %v4184 = vpack.c.bf16 %v4106, %v4100
        %v4185 = vpack.c.bf16 %v4180, %v4175
        %v4186 = vld [vmem:[%s479] sm:$0xff]
        %v4187 = vld [vmem:[%s479 + $0x8] sm:$0xf]
        %v4188 = vld [vmem:[%s479 + $0xc] sm:$0xff]
        %v4189 = vld [vmem:[%s479 + $0x14] sm:$0xf]
        %v4190 = vld [vmem:[%s479 + $0x18] sm:$0xff]
        %v4191 = vld [vmem:[%s479 + $0x20] sm:$0xf]
        %v4192 = vld [vmem:[%s479 + $0x24] sm:$0xff]
        %v4193 = vld [vmem:[%s479 + $0x2c] sm:$0xf]
        %v4194 = vld [vmem:[%s479 + $0x30] sm:$0xff]
        %v4195 = vld [vmem:[%s479 + $0x38] sm:$0xf]
        %v4196 = vld [vmem:[%s479 + $0x3c] sm:$0xff]
        %v4197 = vld [vmem:[%s479 + $0x44] sm:$0xf]
        %v4198 = vld [vmem:[%s479 + $0x48] sm:$0xff]
        %v4199 = vld [vmem:[%s479 + $0x50] sm:$0xf]
        %v4200 = vld [vmem:[%s479 + $0x54] sm:$0xff]
        %v4201 = vld [vmem:[%s479 + $0x5c] sm:$0xf]
        %v4202 = vld [vmem:[%s479 + $0x60] sm:$0xff]
        %v4203 = vld [vmem:[%s479 + $0x68] sm:$0xf]
        %v4204 = vld [vmem:[%s479 + $0x6c] sm:$0xff]
        %v4205 = vld [vmem:[%s479 + $0x74] sm:$0xf]
        %v4206 = vld [vmem:[%s479 + $0x78] sm:$0xff]
        %v4207 = vld [vmem:[%s479 + $0x80] sm:$0xf]
        %v4208 = vld [vmem:[%s479 + $0x84] sm:$0xff]
        %v4209 = vld [vmem:[%s479 + $0x8c] sm:$0xf]
        %v4210 = vld [vmem:[%s479 + $0x90] sm:$0xff]
        %v4211 = vld [vmem:[%s479 + $0x98] sm:$0xf]
        %v4212 = vld [vmem:[%s479 + $0x9c] sm:$0xff]
        %v4213 = vld [vmem:[%s479 + $0xa4] sm:$0xf]
        %v4214 = vld [vmem:[%s479 + $0xa8] sm:$0xff]
        %v4215 = vld [vmem:[%s479 + $0xb0] sm:$0xf]
        %v4216 = vld [vmem:[%s479 + $0xb4] sm:$0xff]
        %v4217 = vld [vmem:[%s479 + $0xbc] sm:$0xf]
        %v4218 = vld [vmem:[%s479 + $0xc0] sm:$0xff]
        %v4219 = vld [vmem:[%s479 + $0xc8] sm:$0xf]
        %v4220 = vld [vmem:[%s479 + $0xcc] sm:$0xff]
        %v4221 = vld [vmem:[%s479 + $0xd4] sm:$0xf]
        %v4222 = vld [vmem:[%s479 + $0xd8] sm:$0xff]
        %v4223 = vld [vmem:[%s479 + $0xe0] sm:$0xf]
        %v4224 = vld [vmem:[%s479 + $0xe4] sm:$0xff]
        %v4225 = vld [vmem:[%s479 + $0xec] sm:$0xf]
        %v4226 = vld [vmem:[%s479 + $0xf0] sm:$0xff]
        %v4227 = vld [vmem:[%s479 + $0xf8] sm:$0xf]
        %v4228 = vld [vmem:[%s479 + $0xfc] sm:$0xff]
        %v4229 = vld [vmem:[%s479 + $0x104] sm:$0xf]
        %v4230 = vld [vmem:[%s479 + $0x108] sm:$0xff]
        %v4231 = vld [vmem:[%s479 + $0x110] sm:$0xf]
        %v4232 = vld [vmem:[%s479 + $0x114] sm:$0xff]
        %v4233 = vld [vmem:[%s479 + $0x11c] sm:$0xf]
        %v4234 = vld [vmem:[%s479 + $0x120] sm:$0xff]
        %v4235 = vld [vmem:[%s479 + $0x128] sm:$0xf]
        %v4236 = vld [vmem:[%s479 + $0x12c] sm:$0xff]
        %v4237 = vld [vmem:[%s479 + $0x134] sm:$0xf]
        %v4238 = vld [vmem:[%s479 + $0x138] sm:$0xff]
        %v4239 = vld [vmem:[%s479 + $0x140] sm:$0xf]
        %v4240 = vld [vmem:[%s479 + $0x144] sm:$0xff]
        %v4241 = vld [vmem:[%s479 + $0x14c] sm:$0xf]
        %v4242 = vld [vmem:[%s479 + $0x150] sm:$0xff]
        %v4243 = vld [vmem:[%s479 + $0x158] sm:$0xf]
        %v4244 = vld [vmem:[%s479 + $0x15c] sm:$0xff]
        %v4245 = vld [vmem:[%s479 + $0x164] sm:$0xf]
        %v4246 = vld [vmem:[%s479 + $0x168] sm:$0xff]
        %v4247 = vld [vmem:[%s479 + $0x170] sm:$0xf]
        %v4248 = vld [vmem:[%s479 + $0x174] sm:$0xff]
        %v4249 = vld [vmem:[%s479 + $0x17c] sm:$0xf]
        %v4250 = vld [vmem:[%s479 + $0x180] sm:$0xff]
        %v4251 = vld [vmem:[%s479 + $0x188] sm:$0xf]
        %v4252 = vld [vmem:[%s479 + $0x18c] sm:$0xff]
        %v4253 = vld [vmem:[%s479 + $0x194] sm:$0xf]
        %v4254 = vld [vmem:[%s479 + $0x198] sm:$0xff]
        %v4255 = vld [vmem:[%s479 + $0x1a0] sm:$0xf]
        %v4256 = vld [vmem:[%s479 + $0x1a4] sm:$0xff]
        %v4257 = vld [vmem:[%s479 + $0x1ac] sm:$0xf]
        %v4258 = vld [vmem:[%s479 + $0x1b0] sm:$0xff]
        %v4259 = vld [vmem:[%s479 + $0x1b8] sm:$0xf]
        %v4260 = vld [vmem:[%s479 + $0x1bc] sm:$0xff]
        %v4261 = vld [vmem:[%s479 + $0x1c4] sm:$0xf]
        %v4262 = vld [vmem:[%s479 + $0x1c8] sm:$0xff]
        %v4263 = vld [vmem:[%s479 + $0x1d0] sm:$0xf]
        %v4264 = vld [vmem:[%s479 + $0x1d4] sm:$0xff]
        %v4265 = vld [vmem:[%s479 + $0x1dc] sm:$0xf]
        %v4266 = vld [vmem:[%s479 + $0x1e0] sm:$0xff]
        %v4267 = vld [vmem:[%s479 + $0x1e8] sm:$0xf]
        %v4268 = vld [vmem:[%s479 + $0x1ec] sm:$0xff]
        %v4269 = vld [vmem:[%s479 + $0x1f4] sm:$0xf]
        %v4270 = vld [vmem:[%s479 + $0x1f8] sm:$0xff]
        %v4271 = vld [vmem:[%s479 + $0x200] sm:$0xf]
        %v4272 = vld [vmem:[%s479 + $0x204] sm:$0xff]
        %v4273 = vld [vmem:[%s479 + $0x20c] sm:$0xf]
        %v4274 = vld [vmem:[%s479 + $0x210] sm:$0xff]
        %v4275 = vld [vmem:[%s479 + $0x218] sm:$0xf]
        %v4276 = vld [vmem:[%s479 + $0x21c] sm:$0xff]
        %v4277 = vld [vmem:[%s479 + $0x224] sm:$0xf]
        %v4278 = vld [vmem:[%s479 + $0x228] sm:$0xff]
        %v4279 = vld [vmem:[%s479 + $0x230] sm:$0xf]
        %v4280 = vld [vmem:[%s479 + $0x234] sm:$0xff]
        %v4281 = vld [vmem:[%s479 + $0x23c] sm:$0xf]
        %v4282 = vld [vmem:[%s488] sm:$0xff]
        %v4283 = vld [vmem:[%s488 + $0x8] sm:$0xf]
        %v4284 = vld [vmem:[%s488 + $0xc] sm:$0xff]
        %v4285 = vld [vmem:[%s488 + $0x14] sm:$0xf]
        %v4286 = vld [vmem:[%s488 + $0x18] sm:$0xff]
        %v4287 = vld [vmem:[%s488 + $0x20] sm:$0xf]
        %v4288 = vld [vmem:[%s488 + $0x24] sm:$0xff]
        %v4289 = vld [vmem:[%s488 + $0x2c] sm:$0xf]
        %v4290 = vld [vmem:[%s488 + $0x30] sm:$0xff]
        %v4291 = vld [vmem:[%s488 + $0x38] sm:$0xf]
        %v4292 = vld [vmem:[%s488 + $0x3c] sm:$0xff]
        %v4293 = vld [vmem:[%s488 + $0x44] sm:$0xf]
        %v4294 = vld [vmem:[%s488 + $0x48] sm:$0xff]
        %v4295 = vld [vmem:[%s488 + $0x50] sm:$0xf]
        %v4296 = vld [vmem:[%s488 + $0x54] sm:$0xff]
        %v4297 = vld [vmem:[%s488 + $0x5c] sm:$0xf]
        %v4298 = vld [vmem:[%s488 + $0x60] sm:$0xff]
        %v4299 = vld [vmem:[%s488 + $0x68] sm:$0xf]
        %v4300 = vld [vmem:[%s488 + $0x6c] sm:$0xff]
        %v4301 = vld [vmem:[%s488 + $0x74] sm:$0xf]
        %v4302 = vld [vmem:[%s488 + $0x78] sm:$0xff]
        %v4303 = vld [vmem:[%s488 + $0x80] sm:$0xf]
        %v4304 = vld [vmem:[%s488 + $0x84] sm:$0xff]
        %v4305 = vld [vmem:[%s488 + $0x8c] sm:$0xf]
        %v4306 = vld [vmem:[%s488 + $0x90] sm:$0xff]
        %v4307 = vld [vmem:[%s488 + $0x98] sm:$0xf]
        %v4308 = vld [vmem:[%s488 + $0x9c] sm:$0xff]
        %v4309 = vld [vmem:[%s488 + $0xa4] sm:$0xf]
        %v4310 = vld [vmem:[%s488 + $0xa8] sm:$0xff]
        %v4311 = vld [vmem:[%s488 + $0xb0] sm:$0xf]
        %v4312 = vld [vmem:[%s488 + $0xb4] sm:$0xff]
        %v4313 = vld [vmem:[%s488 + $0xbc] sm:$0xf]
        %v4314 = vld [vmem:[%s488 + $0xc0] sm:$0xff]
        %v4315 = vld [vmem:[%s488 + $0xc8] sm:$0xf]
        %v4316 = vld [vmem:[%s488 + $0xcc] sm:$0xff]
        %v4317 = vld [vmem:[%s488 + $0xd4] sm:$0xf]
        %v4318 = vld [vmem:[%s488 + $0xd8] sm:$0xff]
        %v4319 = vld [vmem:[%s488 + $0xe0] sm:$0xf]
        %v4320 = vld [vmem:[%s488 + $0xe4] sm:$0xff]
        %v4321 = vld [vmem:[%s488 + $0xec] sm:$0xf]
        %v4322 = vld [vmem:[%s488 + $0xf0] sm:$0xff]
        %v4323 = vld [vmem:[%s488 + $0xf8] sm:$0xf]
        %v4324 = vld [vmem:[%s488 + $0xfc] sm:$0xff]
        %v4325 = vld [vmem:[%s488 + $0x104] sm:$0xf]
        %v4326 = vld [vmem:[%s488 + $0x108] sm:$0xff]
        %v4327 = vld [vmem:[%s488 + $0x110] sm:$0xf]
        %v4328 = vld [vmem:[%s488 + $0x114] sm:$0xff]
        %v4329 = vld [vmem:[%s488 + $0x11c] sm:$0xf]
        %v4330 = vld [vmem:[%s488 + $0x120] sm:$0xff]
        %v4331 = vld [vmem:[%s488 + $0x128] sm:$0xf]
        %v4332 = vld [vmem:[%s488 + $0x12c] sm:$0xff]
        %v4333 = vld [vmem:[%s488 + $0x134] sm:$0xf]
        %v4334 = vld [vmem:[%s488 + $0x138] sm:$0xff]
        %v4335 = vld [vmem:[%s488 + $0x140] sm:$0xf]
        %v4336 = vld [vmem:[%s488 + $0x144] sm:$0xff]
        %v4337 = vld [vmem:[%s488 + $0x14c] sm:$0xf]
        %v4338 = vld [vmem:[%s488 + $0x150] sm:$0xff]
        %v4339 = vld [vmem:[%s488 + $0x158] sm:$0xf]
        %v4340 = vld [vmem:[%s488 + $0x15c] sm:$0xff]
        %v4341 = vld [vmem:[%s488 + $0x164] sm:$0xf]
        %v4342 = vld [vmem:[%s488 + $0x168] sm:$0xff]
        %v4343 = vld [vmem:[%s488 + $0x170] sm:$0xf]
        %v4344 = vld [vmem:[%s488 + $0x174] sm:$0xff]
        %v4345 = vld [vmem:[%s488 + $0x17c] sm:$0xf]
        %v4346 = vld [vmem:[%s488 + $0x180] sm:$0xff]
        %v4347 = vld [vmem:[%s488 + $0x188] sm:$0xf]
        %v4348 = vld [vmem:[%s488 + $0x18c] sm:$0xff]
        %v4349 = vld [vmem:[%s488 + $0x194] sm:$0xf]
        %v4350 = vld [vmem:[%s488 + $0x198] sm:$0xff]
        %v4351 = vld [vmem:[%s488 + $0x1a0] sm:$0xf]
        %v4352 = vld [vmem:[%s488 + $0x1a4] sm:$0xff]
        %v4353 = vld [vmem:[%s488 + $0x1ac] sm:$0xf]
        %v4354 = vld [vmem:[%s488 + $0x1b0] sm:$0xff]
        %v4355 = vld [vmem:[%s488 + $0x1b8] sm:$0xf]
        %v4356 = vld [vmem:[%s488 + $0x1bc] sm:$0xff]
        %v4357 = vld [vmem:[%s488 + $0x1c4] sm:$0xf]
        %v4358 = vld [vmem:[%s488 + $0x1c8] sm:$0xff]
        %v4359 = vld [vmem:[%s488 + $0x1d0] sm:$0xf]
        %v4360 = vld [vmem:[%s488 + $0x1d4] sm:$0xff]
        %v4361 = vld [vmem:[%s488 + $0x1dc] sm:$0xf]
        %v4362 = vld [vmem:[%s488 + $0x1e0] sm:$0xff]
        %v4363 = vld [vmem:[%s488 + $0x1e8] sm:$0xf]
        %v4364 = vld [vmem:[%s488 + $0x1ec] sm:$0xff]
        %v4365 = vld [vmem:[%s488 + $0x1f4] sm:$0xf]
        %v4366 = vld [vmem:[%s488 + $0x1f8] sm:$0xff]
        %v4367 = vld [vmem:[%s488 + $0x200] sm:$0xf]
        %v4368 = vld [vmem:[%s488 + $0x204] sm:$0xff]
        %v4369 = vld [vmem:[%s488 + $0x20c] sm:$0xf]
        %v4370 = vld [vmem:[%s488 + $0x210] sm:$0xff]
        %v4371 = vld [vmem:[%s488 + $0x218] sm:$0xf]
        %v4372 = vld [vmem:[%s488 + $0x21c] sm:$0xff]
        %v4373 = vld [vmem:[%s488 + $0x224] sm:$0xf]
        %v4374 = vld [vmem:[%s488 + $0x228] sm:$0xff]
        %v4375 = vld [vmem:[%s488 + $0x230] sm:$0xf]
        %v4376 = vld [vmem:[%s488 + $0x234] sm:$0xff]
        %v4377 = vld [vmem:[%s488 + $0x23c] sm:$0xf]
        %v4474 = vunpack.c.l.b16 %v4282
        %v4475 = vunpack.c.h.b16 %v4282
        %v4476 = vunpack.c.l.b16 %v4283
        %v4477 = vunpack.c.l.b16 %v4284
        %v4478 = vunpack.c.h.b16 %v4284
        %v4479 = vunpack.c.l.b16 %v4285
        %v4480 = vunpack.c.l.b16 %v4286
        %v4481 = vunpack.c.h.b16 %v4286
        %v4482 = vunpack.c.l.b16 %v4287
        %v4483 = vunpack.c.l.b16 %v4288
        %v4484 = vunpack.c.h.b16 %v4288
        %v4485 = vunpack.c.l.b16 %v4289
        %v4486 = vunpack.c.l.b16 %v4290
        %v4487 = vunpack.c.h.b16 %v4290
        %v4488 = vunpack.c.l.b16 %v4291
        %v4489 = vunpack.c.l.b16 %v4292
        %v4490 = vunpack.c.h.b16 %v4292
        %v4491 = vunpack.c.l.b16 %v4293
        %v4492 = vunpack.c.l.b16 %v4294
        %v4493 = vunpack.c.h.b16 %v4294
        %v4494 = vunpack.c.l.b16 %v4295
        %v4495 = vunpack.c.l.b16 %v4296
        %v4496 = vunpack.c.h.b16 %v4296
        %v4497 = vunpack.c.l.b16 %v4297
        %v4498 = vunpack.c.l.b16 %v4298
        %v4499 = vunpack.c.h.b16 %v4298
        %v4500 = vunpack.c.l.b16 %v4299
        %v4501 = vunpack.c.l.b16 %v4300
        %v4502 = vunpack.c.h.b16 %v4300
        %v4503 = vunpack.c.l.b16 %v4301
        %v4504 = vunpack.c.l.b16 %v4302
        %v4505 = vunpack.c.h.b16 %v4302
        %v4506 = vunpack.c.l.b16 %v4303
        %v4507 = vunpack.c.l.b16 %v4304
        %v4508 = vunpack.c.h.b16 %v4304
        %v4509 = vunpack.c.l.b16 %v4305
        %v4510 = vunpack.c.l.b16 %v4306
        %v4511 = vunpack.c.h.b16 %v4306
        %v4512 = vunpack.c.l.b16 %v4307
        %v4513 = vunpack.c.l.b16 %v4308
        %v4514 = vunpack.c.h.b16 %v4308
        %v4515 = vunpack.c.l.b16 %v4309
        %v4516 = vunpack.c.l.b16 %v4310
        %v4517 = vunpack.c.h.b16 %v4310
        %v4518 = vunpack.c.l.b16 %v4311
        %v4519 = vunpack.c.l.b16 %v4312
        %v4520 = vunpack.c.h.b16 %v4312
        %v4521 = vunpack.c.l.b16 %v4313
        %v4522 = vunpack.c.l.b16 %v4314
        %v4523 = vunpack.c.h.b16 %v4314
        %v4524 = vunpack.c.l.b16 %v4315
        %v4525 = vunpack.c.l.b16 %v4316
        %v4526 = vunpack.c.h.b16 %v4316
        %v4527 = vunpack.c.l.b16 %v4317
        %v4528 = vunpack.c.l.b16 %v4318
        %v4529 = vunpack.c.h.b16 %v4318
        %v4530 = vunpack.c.l.b16 %v4319
        %v4531 = vunpack.c.l.b16 %v4320
        %v4532 = vunpack.c.h.b16 %v4320
        %v4533 = vunpack.c.l.b16 %v4321
        %v4534 = vunpack.c.l.b16 %v4322
        %v4535 = vunpack.c.h.b16 %v4322
        %v4536 = vunpack.c.l.b16 %v4323
        %v4537 = vunpack.c.l.b16 %v4324
        %v4538 = vunpack.c.h.b16 %v4324
        %v4539 = vunpack.c.l.b16 %v4325
        %v4540 = vunpack.c.l.b16 %v4326
        %v4541 = vunpack.c.h.b16 %v4326
        %v4542 = vunpack.c.l.b16 %v4327
        %v4543 = vunpack.c.l.b16 %v4328
        %v4544 = vunpack.c.h.b16 %v4328
        %v4545 = vunpack.c.l.b16 %v4329
        %v4546 = vunpack.c.l.b16 %v4330
        %v4547 = vunpack.c.h.b16 %v4330
        %v4548 = vunpack.c.l.b16 %v4331
        %v4549 = vunpack.c.l.b16 %v4332
        %v4550 = vunpack.c.h.b16 %v4332
        %v4551 = vunpack.c.l.b16 %v4333
        %v4552 = vunpack.c.l.b16 %v4334
        %v4553 = vunpack.c.h.b16 %v4334
        %v4554 = vunpack.c.l.b16 %v4335
        %v4555 = vunpack.c.l.b16 %v4336
        %v4556 = vunpack.c.h.b16 %v4336
        %v4557 = vunpack.c.l.b16 %v4337
        %v4558 = vunpack.c.l.b16 %v4338
        %v4559 = vunpack.c.h.b16 %v4338
        %v4560 = vunpack.c.l.b16 %v4339
        %v4561 = vunpack.c.l.b16 %v4340
        %v4562 = vunpack.c.h.b16 %v4340
        %v4563 = vunpack.c.l.b16 %v4341
        %v4564 = vunpack.c.l.b16 %v4342
        %v4565 = vunpack.c.h.b16 %v4342
        %v4566 = vunpack.c.l.b16 %v4343
        %v4567 = vunpack.c.l.b16 %v4344
        %v4568 = vunpack.c.h.b16 %v4344
        %v4569 = vunpack.c.l.b16 %v4345
        %v4570 = vunpack.c.l.b16 %v4346
        %v4571 = vunpack.c.h.b16 %v4346
        %v4572 = vunpack.c.l.b16 %v4347
        %v4573 = vunpack.c.l.b16 %v4348
        %v4574 = vunpack.c.h.b16 %v4348
        %v4575 = vunpack.c.l.b16 %v4349
        %v4576 = vunpack.c.l.b16 %v4350
        %v4577 = vunpack.c.h.b16 %v4350
        %v4578 = vunpack.c.l.b16 %v4351
        %v4579 = vunpack.c.l.b16 %v4352
        %v4580 = vunpack.c.h.b16 %v4352
        %v4581 = vunpack.c.l.b16 %v4353
        %v4582 = vunpack.c.l.b16 %v4354
        %v4583 = vunpack.c.h.b16 %v4354
        %v4584 = vunpack.c.l.b16 %v4355
        %v4585 = vunpack.c.l.b16 %v4356
        %v4586 = vunpack.c.h.b16 %v4356
        %v4587 = vunpack.c.l.b16 %v4357
        %v4588 = vunpack.c.l.b16 %v4358
        %v4589 = vunpack.c.h.b16 %v4358
        %v4590 = vunpack.c.l.b16 %v4359
        %v4591 = vunpack.c.l.b16 %v4360
        %v4592 = vunpack.c.h.b16 %v4360
        %v4593 = vunpack.c.l.b16 %v4361
        %v4594 = vunpack.c.l.b16 %v4362
        %v4595 = vunpack.c.h.b16 %v4362
        %v4596 = vunpack.c.l.b16 %v4363
        %v4597 = vunpack.c.l.b16 %v4364
        %v4598 = vunpack.c.h.b16 %v4364
        %v4599 = vunpack.c.l.b16 %v4365
        %v4600 = vunpack.c.l.b16 %v4366
        %v4601 = vunpack.c.h.b16 %v4366
        %v4602 = vunpack.c.l.b16 %v4367
        %v4603 = vunpack.c.l.b16 %v4368
        %v4604 = vunpack.c.h.b16 %v4368
        %v4605 = vunpack.c.l.b16 %v4369
        %v4606 = vunpack.c.l.b16 %v4370
        %v4607 = vunpack.c.h.b16 %v4370
        %v4608 = vunpack.c.l.b16 %v4371
        %v4609 = vunpack.c.l.b16 %v4372
        %v4610 = vunpack.c.h.b16 %v4372
        %v4611 = vunpack.c.l.b16 %v4373
        %v4612 = vunpack.c.l.b16 %v4374
        %v4613 = vunpack.c.h.b16 %v4374
        %v4614 = vunpack.c.l.b16 %v4375
        %v4615 = vunpack.c.l.b16 %v4376
        %v4616 = vunpack.c.h.b16 %v4376
        %v4617 = vunpack.c.l.b16 %v4377
        %v4618 = vpack.c.b16 %v4477, %v4474
        %v4619 = vpack.c.b16 %v4478, %v4475
        %v4620 = vpack.c.b16 %v4479, %v4476
        %v4621 = vpack.c.b16 %v4483, %v4480
        %v4622 = vpack.c.b16 %v4484, %v4481
        %v4623 = vpack.c.b16 %v4485, %v4482
        %v4624 = vpack.c.b16 %v4489, %v4486
        %v4625 = vpack.c.b16 %v4490, %v4487
        %v4626 = vpack.c.b16 %v4491, %v4488
        %v4627 = vpack.c.b16 %v4495, %v4492
        %v4628 = vpack.c.b16 %v4496, %v4493
        %v4629 = vpack.c.b16 %v4497, %v4494
        %v4630 = vpack.c.b16 %v4501, %v4498
        %v4631 = vpack.c.b16 %v4502, %v4499
        %v4632 = vpack.c.b16 %v4503, %v4500
        %v4633 = vpack.c.b16 %v4507, %v4504
        %v4634 = vpack.c.b16 %v4508, %v4505
        %v4635 = vpack.c.b16 %v4509, %v4506
        %v4636 = vpack.c.b16 %v4513, %v4510
        %v4637 = vpack.c.b16 %v4514, %v4511
        %v4638 = vpack.c.b16 %v4515, %v4512
        %v4639 = vpack.c.b16 %v4519, %v4516
        %v4640 = vpack.c.b16 %v4520, %v4517
        %v4641 = vpack.c.b16 %v4521, %v4518
        %v4642 = vpack.c.b16 %v4525, %v4522
        %v4643 = vpack.c.b16 %v4526, %v4523
        %v4644 = vpack.c.b16 %v4527, %v4524
        %v4645 = vpack.c.b16 %v4531, %v4528
        %v4646 = vpack.c.b16 %v4532, %v4529
        %v4647 = vpack.c.b16 %v4533, %v4530
        %v4648 = vpack.c.b16 %v4537, %v4534
        %v4649 = vpack.c.b16 %v4538, %v4535
        %v4650 = vpack.c.b16 %v4539, %v4536
        %v4651 = vpack.c.b16 %v4543, %v4540
        %v4652 = vpack.c.b16 %v4544, %v4541
        %v4653 = vpack.c.b16 %v4545, %v4542
        %v4654 = vpack.c.b16 %v4549, %v4546
        %v4655 = vpack.c.b16 %v4550, %v4547
        %v4656 = vpack.c.b16 %v4551, %v4548
        %v4657 = vpack.c.b16 %v4555, %v4552
        %v4658 = vpack.c.b16 %v4556, %v4553
        %v4659 = vpack.c.b16 %v4557, %v4554
        %v4660 = vpack.c.b16 %v4561, %v4558
        %v4661 = vpack.c.b16 %v4562, %v4559
        %v4662 = vpack.c.b16 %v4563, %v4560
        %v4663 = vpack.c.b16 %v4567, %v4564
        %v4664 = vpack.c.b16 %v4568, %v4565
        %v4665 = vpack.c.b16 %v4569, %v4566
        %v4666 = vpack.c.b16 %v4573, %v4570
        %v4667 = vpack.c.b16 %v4574, %v4571
        %v4668 = vpack.c.b16 %v4575, %v4572
        %v4669 = vpack.c.b16 %v4579, %v4576
        %v4670 = vpack.c.b16 %v4580, %v4577
        %v4671 = vpack.c.b16 %v4581, %v4578
        %v4672 = vpack.c.b16 %v4585, %v4582
        %v4673 = vpack.c.b16 %v4586, %v4583
        %v4674 = vpack.c.b16 %v4587, %v4584
        %v4675 = vpack.c.b16 %v4591, %v4588
        %v4676 = vpack.c.b16 %v4592, %v4589
        %v4677 = vpack.c.b16 %v4593, %v4590
        %v4678 = vpack.c.b16 %v4597, %v4594
        %v4679 = vpack.c.b16 %v4598, %v4595
        %v4680 = vpack.c.b16 %v4599, %v4596
        %v4681 = vpack.c.b16 %v4603, %v4600
        %v4682 = vpack.c.b16 %v4604, %v4601
        %v4683 = vpack.c.b16 %v4605, %v4602
        %v4684 = vpack.c.b16 %v4609, %v4606
        %v4685 = vpack.c.b16 %v4610, %v4607
        %v4686 = vpack.c.b16 %v4611, %v4608
        %v4687 = vpack.c.b16 %v4615, %v4612
        %v4688 = vpack.c.b16 %v4616, %v4613
        %v4689 = vpack.c.b16 %v4617, %v4614
        %4762 = vmatprep.subr.bf16.mxu0 %v4619
        %4763 = vmatpush1.bf16.msra.mxu0 %v4618
        %4764 = vmatprep.subr.bf16.mxu0 %v4622
        %4765 = vmatpush1.bf16.msra.mxu0 %v4621
        %4766 = vmatprep.subr.bf16.mxu0 %v4625
        %4767 = vmatpush1.bf16.msra.mxu0 %v4624
        %4768 = vmatprep.subr.bf16.mxu0 %v4628
        %4769 = vmatpush1.bf16.msra.mxu0 %v4627
        %4770 = vmatprep.subr.bf16.mxu0 %v4631
        %4771 = vmatpush1.bf16.msra.mxu0 %v4630
        %4772 = vmatprep.subr.bf16.mxu0 %v4634
        %4773 = vmatpush1.bf16.msra.mxu0 %v4633
        %4774 = vmatprep.subr.bf16.mxu0 %v4637
        %4775 = vmatpush1.bf16.msra.mxu0 %v4636
        %4776 = vmatprep.subr.bf16.mxu0 %v4640
        %4777 = vmatpush1.bf16.msra.mxu0 %v4639
        %4778 = vmatprep.subr.bf16.mxu0 %v4643
        %4779 = vmatpush1.bf16.msra.mxu0 %v4642
        %4780 = vmatprep.subr.bf16.mxu0 %v4646
        %4781 = vmatpush1.bf16.msra.mxu0 %v4645
        %4782 = vmatprep.subr.bf16.mxu0 %v4649
        %4783 = vmatpush1.bf16.msra.mxu0 %v4648
        %4784 = vmatprep.subr.bf16.mxu0 %v4652
        %4785 = vmatpush1.bf16.msra.mxu0 %v4651
        %4786 = vmatprep.subr.bf16.mxu0 %v4655
        %4787 = vmatpush1.bf16.msra.mxu0 %v4654
        %4788 = vmatprep.subr.bf16.mxu0 %v4658
        %4789 = vmatpush1.bf16.msra.mxu0 %v4657
        %4790 = vmatprep.subr.bf16.mxu0 %v4661
        %4791 = vmatpush1.bf16.msra.mxu0 %v4660
        %4792 = vmatprep.subr.bf16.mxu0 %v4664
        %4793 = vmatpush1.bf16.msra.mxu0 %v4663
        %4794 = vmatprep.mubr.bf16.mxu0 %v4184
        %4795 = vmatmul.mubr.bf16.gmra.mrb[0].mxu0 %v4183
        %v4796 = vpop.f32.mrb[0].mxu0
        %v4797 = vadd.f32 0.0, %v4796
        %v4798 = vpop.f32.mrb[0].mxu0
        %v4799 = vadd.f32 0.0, %v4798
        %v4800 = vpop.f32.mrb[0].mxu0
        %v4801 = vadd.f32 0.0, %v4800
        %v4802 = vpop.f32.mrb[0].mxu0
        %v4803 = vadd.f32 0.0, %v4802
        %4804 = vdwg.mxu0
        %4805 = vmatprep.subr.bf16.mxu0 %v4667
        %4806 = vmatpush1.bf16.msra.mxu0 %v4666
        %4807 = vmatprep.subr.bf16.mxu0 %v4670
        %4808 = vmatpush1.bf16.msra.mxu0 %v4669
        %4809 = vmatprep.subr.bf16.mxu0 %v4673
        %4810 = vmatpush1.bf16.msra.mxu0 %v4672
        %4811 = vmatprep.subr.bf16.mxu0 %v4676
        %4812 = vmatpush1.bf16.msra.mxu0 %v4675
        %4813 = vmatprep.subr.bf16.mxu0 %v4679
        %4814 = vmatpush1.bf16.msra.mxu0 %v4678
        %4815 = vmatprep.subr.bf16.mxu0 %v4682
        %4816 = vmatpush1.bf16.msra.mxu0 %v4681
        %4817 = vmatprep.subr.bf16.mxu0 %v4685
        %4818 = vmatpush1.bf16.msra.mxu0 %v4684
        %4819 = vmatprep.subr.bf16.mxu0 %v4688
        %4820 = vmatpush1.bf16.msra.mxu0 %v4687
        %4821 = vmatprep.subr.bf16.mxu0 0
        %4822 = vmatpush1.bf16.msra.mxu0 0
        %4823 = vmatprep.subr.bf16.mxu0 0
        %4824 = vmatpush1.bf16.msra.mxu0 0
        %4825 = vmatprep.subr.bf16.mxu0 0
        %4826 = vmatpush1.bf16.msra.mxu0 0
        %4827 = vmatprep.subr.bf16.mxu0 0
        %4828 = vmatpush1.bf16.msra.mxu0 0
        %4829 = vmatprep.subr.bf16.mxu0 0
        %4830 = vmatpush1.bf16.msra.mxu0 0
        %4831 = vmatprep.subr.bf16.mxu0 0
        %4832 = vmatpush1.bf16.msra.mxu0 0
        %4833 = vmatprep.subr.bf16.mxu0 0
        %4834 = vmatpush1.bf16.msra.mxu0 0
        %4835 = vmatprep.subr.bf16.mxu0 0
        %4836 = vmatpush1.bf16.msra.mxu0 0
        %4837 = vmatprep.mubr.bf16.mxu0 0
        %4838 = vmatmul.mubr.bf16.gmra.mrb[0].mxu0 %v4185
        %v4839 = vpop.f32.mrb[0].mxu0
        %v4840 = vadd.f32 %v4797, %v4839
        %v4841 = vpop.f32.mrb[0].mxu0
        %v4842 = vadd.f32 %v4799, %v4841
        %v4843 = vpop.f32.mrb[0].mxu0
        %v4844 = vadd.f32 %v4801, %v4843
        %v4845 = vpop.f32.mrb[0].mxu0
        %v4846 = vadd.f32 %v4803, %v4845
        %4847 = vdwg.mxu0
        %4848 = vmatprep.subr.bf16.mxu0 0
        %4849 = vmatpush1.bf16.msra.mxu0 %v4620
        %4850 = vmatprep.subr.bf16.mxu0 0
        %4851 = vmatpush1.bf16.msra.mxu0 %v4623
        %4852 = vmatprep.subr.bf16.mxu0 0
        %4853 = vmatpush1.bf16.msra.mxu0 %v4626
        %4854 = vmatprep.subr.bf16.mxu0 0
        %4855 = vmatpush1.bf16.msra.mxu0 %v4629
        %4856 = vmatprep.subr.bf16.mxu0 0
        %4857 = vmatpush1.bf16.msra.mxu0 %v4632
        %4858 = vmatprep.subr.bf16.mxu0 0
        %4859 = vmatpush1.bf16.msra.mxu0 %v4635
        %4860 = vmatprep.subr.bf16.mxu0 0
        %4861 = vmatpush1.bf16.msra.mxu0 %v4638
        %4862 = vmatprep.subr.bf16.mxu0 0
        %4863 = vmatpush1.bf16.msra.mxu0 %v4641
        %4864 = vmatprep.subr.bf16.mxu0 0
        %4865 = vmatpush1.bf16.msra.mxu0 %v4644
        %4866 = vmatprep.subr.bf16.mxu0 0
        %4867 = vmatpush1.bf16.msra.mxu0 %v4647
        %4868 = vmatprep.subr.bf16.mxu0 0
        %4869 = vmatpush1.bf16.msra.mxu0 %v4650
        %4870 = vmatprep.subr.bf16.mxu0 0
        %4871 = vmatpush1.bf16.msra.mxu0 %v4653
        %4872 = vmatprep.subr.bf16.mxu0 0
        %4873 = vmatpush1.bf16.msra.mxu0 %v4656
        %4874 = vmatprep.subr.bf16.mxu0 0
        %4875 = vmatpush1.bf16.msra.mxu0 %v4659
        %4876 = vmatprep.subr.bf16.mxu0 0
        %4877 = vmatpush1.bf16.msra.mxu0 %v4662
        %4878 = vmatprep.subr.bf16.mxu0 0
        %4879 = vmatpush1.bf16.msra.mxu0 %v4665
        %4880 = vmatprep.mubr.bf16.mxu0 %v4184
        %4881 = vmatmul.mubr.bf16.gmra.mrb[0].mxu0 %v4183
        %v4882 = vpop.f32.mrb[0].mxu0
        %v4883 = vadd.f32 0.0, %v4882
        %v4884 = vpop.f32.mrb[0].mxu0
        %v4885 = vpop.f32.mrb[0].mxu0
        %v4886 = vadd.f32 0.0, %v4885
        %v4887 = vpop.f32.mrb[0].mxu0
        %4888 = vdwg.mxu0
        %4889 = vmatprep.subr.bf16.mxu0 0
        %4890 = vmatpush1.bf16.msra.mxu0 %v4668
        %4891 = vmatprep.subr.bf16.mxu0 0
        %4892 = vmatpush1.bf16.msra.mxu0 %v4671
        %4893 = vmatprep.subr.bf16.mxu0 0
        %4894 = vmatpush1.bf16.msra.mxu0 %v4674
        %4895 = vmatprep.subr.bf16.mxu0 0
        %4896 = vmatpush1.bf16.msra.mxu0 %v4677
        %4897 = vmatprep.subr.bf16.mxu0 0
        %4898 = vmatpush1.bf16.msra.mxu0 %v4680
        %4899 = vmatprep.subr.bf16.mxu0 0
        %4900 = vmatpush1.bf16.msra.mxu0 %v4683
        %4901 = vmatprep.subr.bf16.mxu0 0
        %4902 = vmatpush1.bf16.msra.mxu0 %v4686
        %4903 = vmatprep.subr.bf16.mxu0 0
        %4904 = vmatpush1.bf16.msra.mxu0 %v4689
        %4905 = vmatprep.subr.bf16.mxu0 0
        %4906 = vmatpush1.bf16.msra.mxu0 0
        %4907 = vmatprep.subr.bf16.mxu0 0
        %4908 = vmatpush1.bf16.msra.mxu0 0
        %4909 = vmatprep.subr.bf16.mxu0 0
        %4910 = vmatpush1.bf16.msra.mxu0 0
        %4911 = vmatprep.subr.bf16.mxu0 0
        %4912 = vmatpush1.bf16.msra.mxu0 0
        %4913 = vmatprep.subr.bf16.mxu0 0
        %4914 = vmatpush1.bf16.msra.mxu0 0
        %4915 = vmatprep.subr.bf16.mxu0 0
        %4916 = vmatpush1.bf16.msra.mxu0 0
        %4917 = vmatprep.subr.bf16.mxu0 0
        %4918 = vmatpush1.bf16.msra.mxu0 0
        %4919 = vmatprep.subr.bf16.mxu0 0
        %4920 = vmatpush1.bf16.msra.mxu0 0
        %4921 = vmatprep.mubr.bf16.mxu0 0
        %4922 = vmatmul.mubr.bf16.gmra.mrb[0].mxu0 %v4185
        %v4923 = vpop.f32.mrb[0].mxu0
        %v4924 = vadd.f32 %v4883, %v4923
        %v4925 = vpop.f32.mrb[0].mxu0
        %v4926 = vpop.f32.mrb[0].mxu0
        %v4927 = vadd.f32 %v4886, %v4926
        %v4928 = vpop.f32.mrb[0].mxu0
        %4929 = vdwg.mxu0
        %v5026 = vunpack.c.l.b16 %v4186
        %v5027 = vunpack.c.h.b16 %v4186
        %v5028 = vunpack.c.l.b16 %v4187
        %v5029 = vunpack.c.l.b16 %v4188
        %v5030 = vunpack.c.h.b16 %v4188
        %v5031 = vunpack.c.l.b16 %v4189
        %v5032 = vunpack.c.l.b16 %v4190
        %v5033 = vunpack.c.h.b16 %v4190
        %v5034 = vunpack.c.l.b16 %v4191
        %v5035 = vunpack.c.l.b16 %v4192
        %v5036 = vunpack.c.h.b16 %v4192
        %v5037 = vunpack.c.l.b16 %v4193
        %v5038 = vunpack.c.l.b16 %v4194
        %v5039 = vunpack.c.h.b16 %v4194
        %v5040 = vunpack.c.l.b16 %v4195
        %v5041 = vunpack.c.l.b16 %v4196
        %v5042 = vunpack.c.h.b16 %v4196
        %v5043 = vunpack.c.l.b16 %v4197
        %v5044 = vunpack.c.l.b16 %v4198
        %v5045 = vunpack.c.h.b16 %v4198
        %v5046 = vunpack.c.l.b16 %v4199
        %v5047 = vunpack.c.l.b16 %v4200
        %v5048 = vunpack.c.h.b16 %v4200
        %v5049 = vunpack.c.l.b16 %v4201
        %v5050 = vunpack.c.l.b16 %v4202
        %v5051 = vunpack.c.h.b16 %v4202
        %v5052 = vunpack.c.l.b16 %v4203
        %v5053 = vunpack.c.l.b16 %v4204
        %v5054 = vunpack.c.h.b16 %v4204
        %v5055 = vunpack.c.l.b16 %v4205
        %v5056 = vunpack.c.l.b16 %v4206
        %v5057 = vunpack.c.h.b16 %v4206
        %v5058 = vunpack.c.l.b16 %v4207
        %v5059 = vunpack.c.l.b16 %v4208
        %v5060 = vunpack.c.h.b16 %v4208
        %v5061 = vunpack.c.l.b16 %v4209
        %v5062 = vunpack.c.l.b16 %v4210
        %v5063 = vunpack.c.h.b16 %v4210
        %v5064 = vunpack.c.l.b16 %v4211
        %v5065 = vunpack.c.l.b16 %v4212
        %v5066 = vunpack.c.h.b16 %v4212
        %v5067 = vunpack.c.l.b16 %v4213
        %v5068 = vunpack.c.l.b16 %v4214
        %v5069 = vunpack.c.h.b16 %v4214
        %v5070 = vunpack.c.l.b16 %v4215
        %v5071 = vunpack.c.l.b16 %v4216
        %v5072 = vunpack.c.h.b16 %v4216
        %v5073 = vunpack.c.l.b16 %v4217
        %v5074 = vunpack.c.l.b16 %v4218
        %v5075 = vunpack.c.h.b16 %v4218
        %v5076 = vunpack.c.l.b16 %v4219
        %v5077 = vunpack.c.l.b16 %v4220
        %v5078 = vunpack.c.h.b16 %v4220
        %v5079 = vunpack.c.l.b16 %v4221
        %v5080 = vunpack.c.l.b16 %v4222
        %v5081 = vunpack.c.h.b16 %v4222
        %v5082 = vunpack.c.l.b16 %v4223
        %v5083 = vunpack.c.l.b16 %v4224
        %v5084 = vunpack.c.h.b16 %v4224
        %v5085 = vunpack.c.l.b16 %v4225
        %v5086 = vunpack.c.l.b16 %v4226
        %v5087 = vunpack.c.h.b16 %v4226
        %v5088 = vunpack.c.l.b16 %v4227
        %v5089 = vunpack.c.l.b16 %v4228
        %v5090 = vunpack.c.h.b16 %v4228
        %v5091 = vunpack.c.l.b16 %v4229
        %v5092 = vunpack.c.l.b16 %v4230
        %v5093 = vunpack.c.h.b16 %v4230
        %v5094 = vunpack.c.l.b16 %v4231
        %v5095 = vunpack.c.l.b16 %v4232
        %v5096 = vunpack.c.h.b16 %v4232
        %v5097 = vunpack.c.l.b16 %v4233
        %v5098 = vunpack.c.l.b16 %v4234
        %v5099 = vunpack.c.h.b16 %v4234
        %v5100 = vunpack.c.l.b16 %v4235
        %v5101 = vunpack.c.l.b16 %v4236
        %v5102 = vunpack.c.h.b16 %v4236
        %v5103 = vunpack.c.l.b16 %v4237
        %v5104 = vunpack.c.l.b16 %v4238
        %v5105 = vunpack.c.h.b16 %v4238
        %v5106 = vunpack.c.l.b16 %v4239
        %v5107 = vunpack.c.l.b16 %v4240
        %v5108 = vunpack.c.h.b16 %v4240
        %v5109 = vunpack.c.l.b16 %v4241
        %v5110 = vunpack.c.l.b16 %v4242
        %v5111 = vunpack.c.h.b16 %v4242
        %v5112 = vunpack.c.l.b16 %v4243
        %v5113 = vunpack.c.l.b16 %v4244
        %v5114 = vunpack.c.h.b16 %v4244
        %v5115 = vunpack.c.l.b16 %v4245
        %v5116 = vunpack.c.l.b16 %v4246
        %v5117 = vunpack.c.h.b16 %v4246
        %v5118 = vunpack.c.l.b16 %v4247
        %v5119 = vunpack.c.l.b16 %v4248
        %v5120 = vunpack.c.h.b16 %v4248
        %v5121 = vunpack.c.l.b16 %v4249
        %v5122 = vunpack.c.l.b16 %v4250
        %v5123 = vunpack.c.h.b16 %v4250
        %v5124 = vunpack.c.l.b16 %v4251
        %v5125 = vunpack.c.l.b16 %v4252
        %v5126 = vunpack.c.h.b16 %v4252
        %v5127 = vunpack.c.l.b16 %v4253
        %v5128 = vunpack.c.l.b16 %v4254
        %v5129 = vunpack.c.h.b16 %v4254
        %v5130 = vunpack.c.l.b16 %v4255
        %v5131 = vunpack.c.l.b16 %v4256
        %v5132 = vunpack.c.h.b16 %v4256
        %v5133 = vunpack.c.l.b16 %v4257
        %v5134 = vunpack.c.l.b16 %v4258
        %v5135 = vunpack.c.h.b16 %v4258
        %v5136 = vunpack.c.l.b16 %v4259
        %v5137 = vunpack.c.l.b16 %v4260
        %v5138 = vunpack.c.h.b16 %v4260
        %v5139 = vunpack.c.l.b16 %v4261
        %v5140 = vunpack.c.l.b16 %v4262
        %v5141 = vunpack.c.h.b16 %v4262
        %v5142 = vunpack.c.l.b16 %v4263
        %v5143 = vunpack.c.l.b16 %v4264
        %v5144 = vunpack.c.h.b16 %v4264
        %v5145 = vunpack.c.l.b16 %v4265
        %v5146 = vunpack.c.l.b16 %v4266
        %v5147 = vunpack.c.h.b16 %v4266
        %v5148 = vunpack.c.l.b16 %v4267
        %v5149 = vunpack.c.l.b16 %v4268
        %v5150 = vunpack.c.h.b16 %v4268
        %v5151 = vunpack.c.l.b16 %v4269
        %v5152 = vunpack.c.l.b16 %v4270
        %v5153 = vunpack.c.h.b16 %v4270
        %v5154 = vunpack.c.l.b16 %v4271
        %v5155 = vunpack.c.l.b16 %v4272
        %v5156 = vunpack.c.h.b16 %v4272
        %v5157 = vunpack.c.l.b16 %v4273
        %v5158 = vunpack.c.l.b16 %v4274
        %v5159 = vunpack.c.h.b16 %v4274
        %v5160 = vunpack.c.l.b16 %v4275
        %v5161 = vunpack.c.l.b16 %v4276
        %v5162 = vunpack.c.h.b16 %v4276
        %v5163 = vunpack.c.l.b16 %v4277
        %v5164 = vunpack.c.l.b16 %v4278
        %v5165 = vunpack.c.h.b16 %v4278
        %v5166 = vunpack.c.l.b16 %v4279
        %v5167 = vunpack.c.l.b16 %v4280
        %v5168 = vunpack.c.h.b16 %v4280
        %v5169 = vunpack.c.l.b16 %v4281
        %v5170 = vpack.c.b16 %v5029, %v5026
        %v5171 = vpack.c.b16 %v5030, %v5027
        %v5172 = vpack.c.b16 %v5031, %v5028
        %v5173 = vpack.c.b16 %v5035, %v5032
        %v5174 = vpack.c.b16 %v5036, %v5033
        %v5175 = vpack.c.b16 %v5037, %v5034
        %v5176 = vpack.c.b16 %v5041, %v5038
        %v5177 = vpack.c.b16 %v5042, %v5039
        %v5178 = vpack.c.b16 %v5043, %v5040
        %v5179 = vpack.c.b16 %v5047, %v5044
        %v5180 = vpack.c.b16 %v5048, %v5045
        %v5181 = vpack.c.b16 %v5049, %v5046
        %v5182 = vpack.c.b16 %v5053, %v5050
        %v5183 = vpack.c.b16 %v5054, %v5051
        %v5184 = vpack.c.b16 %v5055, %v5052
        %v5185 = vpack.c.b16 %v5059, %v5056
        %v5186 = vpack.c.b16 %v5060, %v5057
        %v5187 = vpack.c.b16 %v5061, %v5058
        %v5188 = vpack.c.b16 %v5065, %v5062
        %v5189 = vpack.c.b16 %v5066, %v5063
        %v5190 = vpack.c.b16 %v5067, %v5064
        %v5191 = vpack.c.b16 %v5071, %v5068
        %v5192 = vpack.c.b16 %v5072, %v5069
        %v5193 = vpack.c.b16 %v5073, %v5070
        %v5194 = vpack.c.b16 %v5077, %v5074
        %v5195 = vpack.c.b16 %v5078, %v5075
        %v5196 = vpack.c.b16 %v5079, %v5076
        %v5197 = vpack.c.b16 %v5083, %v5080
        %v5198 = vpack.c.b16 %v5084, %v5081
        %v5199 = vpack.c.b16 %v5085, %v5082
        %v5200 = vpack.c.b16 %v5089, %v5086
        %v5201 = vpack.c.b16 %v5090, %v5087
        %v5202 = vpack.c.b16 %v5091, %v5088
        %v5203 = vpack.c.b16 %v5095, %v5092
        %v5204 = vpack.c.b16 %v5096, %v5093
        %v5205 = vpack.c.b16 %v5097, %v5094
        %v5206 = vpack.c.b16 %v5101, %v5098
        %v5207 = vpack.c.b16 %v5102, %v5099
        %v5208 = vpack.c.b16 %v5103, %v5100
        %v5209 = vpack.c.b16 %v5107, %v5104
        %v5210 = vpack.c.b16 %v5108, %v5105
        %v5211 = vpack.c.b16 %v5109, %v5106
        %v5212 = vpack.c.b16 %v5113, %v5110
        %v5213 = vpack.c.b16 %v5114, %v5111
        %v5214 = vpack.c.b16 %v5115, %v5112
        %v5215 = vpack.c.b16 %v5119, %v5116
        %v5216 = vpack.c.b16 %v5120, %v5117
        %v5217 = vpack.c.b16 %v5121, %v5118
        %v5218 = vpack.c.b16 %v5125, %v5122
        %v5219 = vpack.c.b16 %v5126, %v5123
        %v5220 = vpack.c.b16 %v5127, %v5124
        %v5221 = vpack.c.b16 %v5131, %v5128
        %v5222 = vpack.c.b16 %v5132, %v5129
        %v5223 = vpack.c.b16 %v5133, %v5130
        %v5224 = vpack.c.b16 %v5137, %v5134
        %v5225 = vpack.c.b16 %v5138, %v5135
        %v5226 = vpack.c.b16 %v5139, %v5136
        %v5227 = vpack.c.b16 %v5143, %v5140
        %v5228 = vpack.c.b16 %v5144, %v5141
        %v5229 = vpack.c.b16 %v5145, %v5142
        %v5230 = vpack.c.b16 %v5149, %v5146
        %v5231 = vpack.c.b16 %v5150, %v5147
        %v5232 = vpack.c.b16 %v5151, %v5148
        %v5233 = vpack.c.b16 %v5155, %v5152
        %v5234 = vpack.c.b16 %v5156, %v5153
        %v5235 = vpack.c.b16 %v5157, %v5154
        %v5236 = vpack.c.b16 %v5161, %v5158
        %v5237 = vpack.c.b16 %v5162, %v5159
        %v5238 = vpack.c.b16 %v5163, %v5160
        %v5239 = vpack.c.b16 %v5167, %v5164
        %v5240 = vpack.c.b16 %v5168, %v5165
        %v5241 = vpack.c.b16 %v5169, %v5166
        %5314 = vmatprep.subr.bf16.mxu0 %v5171
        %5315 = vmatpush1.bf16.msra.mxu0 %v5170
        %5316 = vmatprep.subr.bf16.mxu0 %v5174
        %5317 = vmatpush1.bf16.msra.mxu0 %v5173
        %5318 = vmatprep.subr.bf16.mxu0 %v5177
        %5319 = vmatpush1.bf16.msra.mxu0 %v5176
        %5320 = vmatprep.subr.bf16.mxu0 %v5180
        %5321 = vmatpush1.bf16.msra.mxu0 %v5179
        %5322 = vmatprep.subr.bf16.mxu0 %v5183
        %5323 = vmatpush1.bf16.msra.mxu0 %v5182
        %5324 = vmatprep.subr.bf16.mxu0 %v5186
        %5325 = vmatpush1.bf16.msra.mxu0 %v5185
        %5326 = vmatprep.subr.bf16.mxu0 %v5189
        %5327 = vmatpush1.bf16.msra.mxu0 %v5188
        %5328 = vmatprep.subr.bf16.mxu0 %v5192
        %5329 = vmatpush1.bf16.msra.mxu0 %v5191
        %5330 = vmatprep.subr.bf16.mxu0 %v5195
        %5331 = vmatpush1.bf16.msra.mxu0 %v5194
        %5332 = vmatprep.subr.bf16.mxu0 %v5198
        %5333 = vmatpush1.bf16.msra.mxu0 %v5197
        %5334 = vmatprep.subr.bf16.mxu0 %v5201
        %5335 = vmatpush1.bf16.msra.mxu0 %v5200
        %5336 = vmatprep.subr.bf16.mxu0 %v5204
        %5337 = vmatpush1.bf16.msra.mxu0 %v5203
        %5338 = vmatprep.subr.bf16.mxu0 %v5207
        %5339 = vmatpush1.bf16.msra.mxu0 %v5206
        %5340 = vmatprep.subr.bf16.mxu0 %v5210
        %5341 = vmatpush1.bf16.msra.mxu0 %v5209
        %5342 = vmatprep.subr.bf16.mxu0 %v5213
        %5343 = vmatpush1.bf16.msra.mxu0 %v5212
        %5344 = vmatprep.subr.bf16.mxu0 %v5216
        %5345 = vmatpush1.bf16.msra.mxu0 %v5215
        %5346 = vmatprep.mubr.bf16.mxu0 %v3911
        %5347 = vmatmul.mubr.bf16.gmra.mrb[0].mxu0 %v3910
        %v5348 = vpop.f32.mrb[0].mxu0
        %v5349 = vadd.f32 %v4840, %v5348
        %v5350 = vpop.f32.mrb[0].mxu0
        %v5351 = vadd.f32 %v4842, %v5350
        %v5352 = vpop.f32.mrb[0].mxu0
        %v5353 = vadd.f32 %v4844, %v5352
        %v5354 = vpop.f32.mrb[0].mxu0
        %v5355 = vadd.f32 %v4846, %v5354
        %5356 = vdwg.mxu0
        %5357 = vmatprep.subr.bf16.mxu0 %v5219
        %5358 = vmatpush1.bf16.msra.mxu0 %v5218
        %5359 = vmatprep.subr.bf16.mxu0 %v5222
        %5360 = vmatpush1.bf16.msra.mxu0 %v5221
        %5361 = vmatprep.subr.bf16.mxu0 %v5225
        %5362 = vmatpush1.bf16.msra.mxu0 %v5224
        %5363 = vmatprep.subr.bf16.mxu0 %v5228
        %5364 = vmatpush1.bf16.msra.mxu0 %v5227
        %5365 = vmatprep.subr.bf16.mxu0 %v5231
        %5366 = vmatpush1.bf16.msra.mxu0 %v5230
        %5367 = vmatprep.subr.bf16.mxu0 %v5234
        %5368 = vmatpush1.bf16.msra.mxu0 %v5233
        %5369 = vmatprep.subr.bf16.mxu0 %v5237
        %5370 = vmatpush1.bf16.msra.mxu0 %v5236
        %5371 = vmatprep.subr.bf16.mxu0 %v5240
        %5372 = vmatpush1.bf16.msra.mxu0 %v5239
        %5373 = vmatprep.subr.bf16.mxu0 0
        %5374 = vmatpush1.bf16.msra.mxu0 0
        %5375 = vmatprep.subr.bf16.mxu0 0
        %5376 = vmatpush1.bf16.msra.mxu0 0
        %5377 = vmatprep.subr.bf16.mxu0 0
        %5378 = vmatpush1.bf16.msra.mxu0 0
        %5379 = vmatprep.subr.bf16.mxu0 0
        %5380 = vmatpush1.bf16.msra.mxu0 0
        %5381 = vmatprep.subr.bf16.mxu0 0
        %5382 = vmatpush1.bf16.msra.mxu0 0
        %5383 = vmatprep.subr.bf16.mxu0 0
        %5384 = vmatpush1.bf16.msra.mxu0 0
        %5385 = vmatprep.subr.bf16.mxu0 0
        %5386 = vmatpush1.bf16.msra.mxu0 0
        %5387 = vmatprep.subr.bf16.mxu0 0
        %5388 = vmatpush1.bf16.msra.mxu0 0
        %5389 = vmatprep.mubr.bf16.mxu0 0
        %5390 = vmatmul.mubr.bf16.gmra.mrb[0].mxu0 %v3912
        %v5391 = vpop.f32.mrb[0].mxu0
        %v5392 = vadd.f32 %v5349, %v5391
        %v5393 = vpop.f32.mrb[0].mxu0
        %v5394 = vadd.f32 %v5351, %v5393
        %v5395 = vpop.f32.mrb[0].mxu0
        %v5396 = vadd.f32 %v5353, %v5395
        %v5397 = vpop.f32.mrb[0].mxu0
        %v5398 = vadd.f32 %v5355, %v5397
        %5399 = vdwg.mxu0
        %5400 = vmatprep.subr.bf16.mxu0 0
        %5401 = vmatpush1.bf16.msra.mxu0 %v5172
        %5402 = vmatprep.subr.bf16.mxu0 0
        %5403 = vmatpush1.bf16.msra.mxu0 %v5175
        %5404 = vmatprep.subr.bf16.mxu0 0
        %5405 = vmatpush1.bf16.msra.mxu0 %v5178
        %5406 = vmatprep.subr.bf16.mxu0 0
        %5407 = vmatpush1.bf16.msra.mxu0 %v5181
        %5408 = vmatprep.subr.bf16.mxu0 0
        %5409 = vmatpush1.bf16.msra.mxu0 %v5184
        %5410 = vmatprep.subr.bf16.mxu0 0
        %5411 = vmatpush1.bf16.msra.mxu0 %v5187
        %5412 = vmatprep.subr.bf16.mxu0 0
        %5413 = vmatpush1.bf16.msra.mxu0 %v5190
        %5414 = vmatprep.subr.bf16.mxu0 0
        %5415 = vmatpush1.bf16.msra.mxu0 %v5193
        %5416 = vmatprep.subr.bf16.mxu0 0
        %5417 = vmatpush1.bf16.msra.mxu0 %v5196
        %5418 = vmatprep.subr.bf16.mxu0 0
        %5419 = vmatpush1.bf16.msra.mxu0 %v5199
        %5420 = vmatprep.subr.bf16.mxu0 0
        %5421 = vmatpush1.bf16.msra.mxu0 %v5202
        %5422 = vmatprep.subr.bf16.mxu0 0
        %5423 = vmatpush1.bf16.msra.mxu0 %v5205
        %5424 = vmatprep.subr.bf16.mxu0 0
        %5425 = vmatpush1.bf16.msra.mxu0 %v5208
        %5426 = vmatprep.subr.bf16.mxu0 0
        %5427 = vmatpush1.bf16.msra.mxu0 %v5211
        %5428 = vmatprep.subr.bf16.mxu0 0
        %5429 = vmatpush1.bf16.msra.mxu0 %v5214
        %5430 = vmatprep.subr.bf16.mxu0 0
        %5431 = vmatpush1.bf16.msra.mxu0 %v5217
        %5432 = vmatprep.mubr.bf16.mxu0 %v3911
        %5433 = vmatmul.mubr.bf16.gmra.mrb[0].mxu0 %v3910
        %v5434 = vpop.f32.mrb[0].mxu0
        %v5435 = vadd.f32 %v4924, %v5434
        %v5436 = vpop.f32.mrb[0].mxu0
        %v5437 = vpop.f32.mrb[0].mxu0
        %v5438 = vadd.f32 %v4927, %v5437
        %v5439 = vpop.f32.mrb[0].mxu0
        %5440 = vdwg.mxu0
        %5441 = vmatprep.subr.bf16.mxu0 0
        %5442 = vmatpush1.bf16.msra.mxu0 %v5220
        %5443 = vmatprep.subr.bf16.mxu0 0
        %5444 = vmatpush1.bf16.msra.mxu0 %v5223
        %5445 = vmatprep.subr.bf16.mxu0 0
        %5446 = vmatpush1.bf16.msra.mxu0 %v5226
        %5447 = vmatprep.subr.bf16.mxu0 0
        %5448 = vmatpush1.bf16.msra.mxu0 %v5229
        %5449 = vmatprep.subr.bf16.mxu0 0
        %5450 = vmatpush1.bf16.msra.mxu0 %v5232
        %5451 = vmatprep.subr.bf16.mxu0 0
        %5452 = vmatpush1.bf16.msra.mxu0 %v5235
        %5453 = vmatprep.subr.bf16.mxu0 0
        %5454 = vmatpush1.bf16.msra.mxu0 %v5238
        %5455 = vmatprep.subr.bf16.mxu0 0
        %5456 = vmatpush1.bf16.msra.mxu0 %v5241
        %5457 = vmatprep.subr.bf16.mxu0 0
        %5458 = vmatpush1.bf16.msra.mxu0 0
        %5459 = vmatprep.subr.bf16.mxu0 0
        %5460 = vmatpush1.bf16.msra.mxu0 0
        %5461 = vmatprep.subr.bf16.mxu0 0
        %5462 = vmatpush1.bf16.msra.mxu0 0
        %5463 = vmatprep.subr.bf16.mxu0 0
        %5464 = vmatpush1.bf16.msra.mxu0 0
        %5465 = vmatprep.subr.bf16.mxu0 0
        %5466 = vmatpush1.bf16.msra.mxu0 0
        %5467 = vmatprep.subr.bf16.mxu0 0
        %5468 = vmatpush1.bf16.msra.mxu0 0
        %5469 = vmatprep.subr.bf16.mxu0 0
        %5470 = vmatpush1.bf16.msra.mxu0 0
        %5471 = vmatprep.subr.bf16.mxu0 0
        %5472 = vmatpush1.bf16.msra.mxu0 0
        %5473 = vmatprep.mubr.bf16.mxu0 0
        %5474 = vmatmul.mubr.bf16.gmra.mrb[0].mxu0 %v3912
        %v5475 = vpop.f32.mrb[0].mxu0
        %v5476 = vadd.f32 %v5435, %v5475
        %v5477 = vpop.f32.mrb[0].mxu0
        %v5478 = vpop.f32.mrb[0].mxu0
        %v5479 = vadd.f32 %v5438, %v5478
        %v5480 = vpop.f32.mrb[0].mxu0
        %5481 = vdwg.mxu0
        %v5482 = vadd.f32 %v873, %v5392
        %v5483 = vadd.f32 %v874, %v5394
        %v5484 = vadd.f32 %v875, %v5476
        %v5485 = vadd.f32 %v876, %v5396
        %v5486 = vadd.f32 %v877, %v5398
        %v5487 = vadd.f32 %v878, %v5479
        %5488 = vst [vmem:[#allocation2] sm:$0xff] %v5482
        %5489 = vst [vmem:[#allocation2 + $0x8] sm:$0xff] %v5483
        %5490 = vst [vmem:[#allocation2 + $0x10] sm:$0xff] %v5484
        %5491 = vst [vmem:[#allocation2 + $0x18] sm:$0xff] %v5485
        %5492 = vst [vmem:[#allocation2 + $0x20] sm:$0xff] %v5486
        %5493 = vst [vmem:[#allocation2 + $0x28] sm:$0xff] %v5487
        %p5494 = scmp.eq.s32.totalorder %s31, 7
        // Predicated region
        $region101: #{model_forward.1} parent=63 // pred_check
          %p5495 = pneg %p5494
        $region102: #{model_forward.1} parent=63 // pred_check_branch
          %5497 = sbr.rel (%p5495) target = $region104
        $region103: #{model_forward.1} parent=63 // pred_region
          %v5498 = vld [vmem:[#allocation7] sm:$0x7]
          %v5499 = vadd.f32 %v5482, %v5483
          %v5500 = vadd.f32 %v5499, %v5484
          %5501 = vadd.xlane.f32.xlu0 %v5500
          %v5502 = vpop.xlane.xlu0 %5501
          %v5503 = vadd.f32 %v5485, %v5486
          %v5504 = vadd.f32 %v5503, %v5487
          %5505 = vadd.xlane.f32.xlu0 %v5504
          %v5506 = vpop.xlane.xlu0 %5505
          %v5507 = vmul.f32 %v5502, %v896
          %v5508 = vmul.f32 %v5506, %v896
          %v5509 = vsub.f32 %v5482, %v5507
          %v5510 = vsub.f32 %v5483, %v5507
          %v5511 = vsub.f32 %v5484, %v5507
          %v5512 = vsub.f32 %v5485, %v5508
          %v5513 = vsub.f32 %v5486, %v5508
          %v5514 = vsub.f32 %v5487, %v5508
          %v5515 = vmul.f32 %v5509, %v5509
          %v5516 = vmul.f32 %v5510, %v5510
          %v5517 = vmul.f32 %v5511, %v5511
          %v5518 = vmul.f32 %v5512, %v5512
          %v5519 = vmul.f32 %v5513, %v5513
          %v5520 = vmul.f32 %v5514, %v5514
          %v5521 = vadd.f32 %v5515, %v5516
          %v5522 = vadd.f32 %v5521, %v5517
          %5523 = vadd.xlane.f32.xlu0 %v5522
          %v5524 = vpop.xlane.xlu0 %5523
          %v5525 = vadd.f32 %v5518, %v5519
          %v5526 = vadd.f32 %v5525, %v5520
          %5527 = vadd.xlane.f32.xlu0 %v5526
          %v5528 = vpop.xlane.xlu0 %5527
          %v5529 = vmul.f32 %v5524, %v896
          %v5530 = vmul.f32 %v5528, %v896
          %v5531 = vadd.f32 %v5529, 1e-05
          %v5532 = vadd.f32 %v5530, 1e-05
          %v5533 = vrsqrt.pop %v5531
          %v5534 = vrsqrt.pop %v5532
          %v5535 = vmul.f32 %v5509, %v5533
          %v5536 = vmul.f32 %v5510, %v5533
          %v5537 = vmul.f32 %v5511, %v5533
          %v5538 = vmul.f32 %v5512, %v5534
          %v5539 = vmul.f32 %v5513, %v5534
          %v5540 = vmul.f32 %v5514, %v5534
          %v5542 = vlaneseq
          %v5543 = vshrl.u32 %v5542, 7
          %v5544 = vsub.s32 0, %v5543
          %v5545 = vrot.slane %v5498, %v5544
          %v5546 = vlaneseq
          %v5547 = vshrl.u32 %v5546, 7
          %v5548 = vsub.s32 1, %v5547
          %v5549 = vrot.slane %v5498, %v5548
          %v5550 = vlaneseq
          %v5551 = vshrl.u32 %v5550, 7
          %v5552 = vsub.s32 2, %v5551
          %v5553 = vrot.slane %v5498, %v5552
          %v5557 = vmul.f32 %v5535, %v5545
          %v5558 = vmul.f32 %v5536, %v5549
          %v5559 = vmul.f32 %v5537, %v5553
          %v5560 = vmul.f32 %v5538, %v5545
          %v5561 = vmul.f32 %v5539, %v5549
          %v5562 = vmul.f32 %v5540, %v5553
          %v5563 = vpack.c.bf16 %v5560, %v5557
          %v5564 = vpack.c.bf16 %v5561, %v5558
          %v5565 = vpack.c.bf16 %v5562, %v5559
          %v5566 = vld [vmem:[#allocation15] sm:$0xf]
          %v5567 = vld [vmem:[#allocation15 + $0x4] sm:$0xf]
          %v5568 = vld [vmem:[#allocation15 + $0x8] sm:$0xf]
          %v5569 = vld [vmem:[#allocation15 + $0xc] sm:$0xf]
          %v5570 = vld [vmem:[#allocation15 + $0x10] sm:$0xf]
          %v5571 = vld [vmem:[#allocation15 + $0x14] sm:$0xf]
          %v5572 = vld [vmem:[#allocation15 + $0x18] sm:$0xf]
          %v5573 = vld [vmem:[#allocation15 + $0x1c] sm:$0xf]
          %v5574 = vld [vmem:[#allocation15 + $0x20] sm:$0xf]
          %v5575 = vld [vmem:[#allocation15 + $0x24] sm:$0xf]
          %v5576 = vld [vmem:[#allocation15 + $0x28] sm:$0xf]
          %v5577 = vld [vmem:[#allocation15 + $0x2c] sm:$0xf]
          %v5578 = vld [vmem:[#allocation15 + $0x30] sm:$0xf]
          %v5579 = vld [vmem:[#allocation15 + $0x34] sm:$0xf]
          %v5580 = vld [vmem:[#allocation15 + $0x38] sm:$0xf]
          %v5581 = vld [vmem:[#allocation15 + $0x3c] sm:$0xf]
          %v5582 = vld [vmem:[#allocation15 + $0x40] sm:$0xf]
          %v5583 = vld [vmem:[#allocation15 + $0x44] sm:$0xf]
          %v5584 = vld [vmem:[#allocation15 + $0x48] sm:$0xf]
          %v5585 = vld [vmem:[#allocation15 + $0x4c] sm:$0xf]
          %v5586 = vld [vmem:[#allocation15 + $0x50] sm:$0xf]
          %v5587 = vld [vmem:[#allocation15 + $0x54] sm:$0xf]
          %v5588 = vld [vmem:[#allocation15 + $0x58] sm:$0xf]
          %v5589 = vld [vmem:[#allocation15 + $0x5c] sm:$0xf]
          %v5590 = vld [vmem:[#allocation15 + $0x60] sm:$0xf]
          %v5591 = vld [vmem:[#allocation15 + $0x64] sm:$0xf]
          %v5592 = vld [vmem:[#allocation15 + $0x68] sm:$0xf]
          %v5593 = vld [vmem:[#allocation15 + $0x6c] sm:$0xf]
          %v5594 = vld [vmem:[#allocation15 + $0x70] sm:$0xf]
          %v5595 = vld [vmem:[#allocation15 + $0x74] sm:$0xf]
          %v5596 = vld [vmem:[#allocation15 + $0x78] sm:$0xf]
          %v5597 = vld [vmem:[#allocation15 + $0x7c] sm:$0xf]
          %v5598 = vld [vmem:[#allocation15 + $0x80] sm:$0xf]
          %v5599 = vld [vmem:[#allocation15 + $0x84] sm:$0xf]
          %v5600 = vld [vmem:[#allocation15 + $0x88] sm:$0xf]
          %v5601 = vld [vmem:[#allocation15 + $0x8c] sm:$0xf]
          %v5602 = vld [vmem:[#allocation15 + $0x90] sm:$0xf]
          %v5603 = vld [vmem:[#allocation15 + $0x94] sm:$0xf]
          %v5604 = vld [vmem:[#allocation15 + $0x98] sm:$0xf]
          %v5605 = vld [vmem:[#allocation15 + $0x9c] sm:$0xf]
          %v5606 = vld [vmem:[#allocation15 + $0xa0] sm:$0xf]
          %v5607 = vld [vmem:[#allocation15 + $0xa4] sm:$0xf]
          %v5608 = vld [vmem:[#allocation15 + $0xa8] sm:$0xf]
          %v5609 = vld [vmem:[#allocation15 + $0xac] sm:$0xf]
          %v5610 = vld [vmem:[#allocation15 + $0xb0] sm:$0xf]
          %v5611 = vld [vmem:[#allocation15 + $0xb4] sm:$0xf]
          %v5612 = vld [vmem:[#allocation15 + $0xb8] sm:$0xf]
          %v5613 = vld [vmem:[#allocation15 + $0xbc] sm:$0xf]
          %v5662 = vunpack.c.l.b16 %v5566
          %v5663 = vunpack.c.l.b16 %v5567
          %v5664 = vunpack.c.l.b16 %v5568
          %v5665 = vunpack.c.l.b16 %v5569
          %v5666 = vunpack.c.l.b16 %v5570
          %v5667 = vunpack.c.l.b16 %v5571
          %v5668 = vunpack.c.l.b16 %v5572
          %v5669 = vunpack.c.l.b16 %v5573
          %v5670 = vunpack.c.l.b16 %v5574
          %v5671 = vunpack.c.l.b16 %v5575
          %v5672 = vunpack.c.l.b16 %v5576
          %v5673 = vunpack.c.l.b16 %v5577
          %v5674 = vunpack.c.l.b16 %v5578
          %v5675 = vunpack.c.l.b16 %v5579
          %v5676 = vunpack.c.l.b16 %v5580
          %v5677 = vunpack.c.l.b16 %v5581
          %v5678 = vunpack.c.l.b16 %v5582
          %v5679 = vunpack.c.l.b16 %v5583
          %v5680 = vunpack.c.l.b16 %v5584
          %v5681 = vunpack.c.l.b16 %v5585
          %v5682 = vunpack.c.l.b16 %v5586
          %v5683 = vunpack.c.l.b16 %v5587
          %v5684 = vunpack.c.l.b16 %v5588
          %v5685 = vunpack.c.l.b16 %v5589
          %v5686 = vunpack.c.l.b16 %v5590
          %v5687 = vunpack.c.l.b16 %v5591
          %v5688 = vunpack.c.l.b16 %v5592
          %v5689 = vunpack.c.l.b16 %v5593
          %v5690 = vunpack.c.l.b16 %v5594
          %v5691 = vunpack.c.l.b16 %v5595
          %v5692 = vunpack.c.l.b16 %v5596
          %v5693 = vunpack.c.l.b16 %v5597
          %v5694 = vunpack.c.l.b16 %v5598
          %v5695 = vunpack.c.l.b16 %v5599
          %v5696 = vunpack.c.l.b16 %v5600
          %v5697 = vunpack.c.l.b16 %v5601
          %v5698 = vunpack.c.l.b16 %v5602
          %v5699 = vunpack.c.l.b16 %v5603
          %v5700 = vunpack.c.l.b16 %v5604
          %v5701 = vunpack.c.l.b16 %v5605
          %v5702 = vunpack.c.l.b16 %v5606
          %v5703 = vunpack.c.l.b16 %v5607
          %v5704 = vunpack.c.l.b16 %v5608
          %v5705 = vunpack.c.l.b16 %v5609
          %v5706 = vunpack.c.l.b16 %v5610
          %v5707 = vunpack.c.l.b16 %v5611
          %v5708 = vunpack.c.l.b16 %v5612
          %v5709 = vunpack.c.l.b16 %v5613
          %v5710 = vpack.c.b16 %v5663, %v5662
          %v5711 = vpack.c.b16 %v5665, %v5664
          %v5712 = vpack.c.b16 %v5667, %v5666
          %v5713 = vpack.c.b16 %v5669, %v5668
          %v5714 = vpack.c.b16 %v5671, %v5670
          %v5715 = vpack.c.b16 %v5673, %v5672
          %v5716 = vpack.c.b16 %v5675, %v5674
          %v5717 = vpack.c.b16 %v5677, %v5676
          %v5718 = vpack.c.b16 %v5679, %v5678
          %v5719 = vpack.c.b16 %v5681, %v5680
          %v5720 = vpack.c.b16 %v5683, %v5682
          %v5721 = vpack.c.b16 %v5685, %v5684
          %v5722 = vpack.c.b16 %v5687, %v5686
          %v5723 = vpack.c.b16 %v5689, %v5688
          %v5724 = vpack.c.b16 %v5691, %v5690
          %v5725 = vpack.c.b16 %v5693, %v5692
          %v5726 = vpack.c.b16 %v5695, %v5694
          %v5727 = vpack.c.b16 %v5697, %v5696
          %v5728 = vpack.c.b16 %v5699, %v5698
          %v5729 = vpack.c.b16 %v5701, %v5700
          %v5730 = vpack.c.b16 %v5703, %v5702
          %v5731 = vpack.c.b16 %v5705, %v5704
          %v5732 = vpack.c.b16 %v5707, %v5706
          %v5733 = vpack.c.b16 %v5709, %v5708
          %5758 = vmatprep.subr.bf16.mxu0 0
          %5759 = vmatpush1.bf16.msra.mxu0 %v5710
          %5760 = vmatprep.subr.bf16.mxu0 0
          %5761 = vmatpush1.bf16.msra.mxu0 %v5711
          %5762 = vmatprep.subr.bf16.mxu0 0
          %5763 = vmatpush1.bf16.msra.mxu0 %v5712
          %5764 = vmatprep.subr.bf16.mxu0 0
          %5765 = vmatpush1.bf16.msra.mxu0 %v5713
          %5766 = vmatprep.subr.bf16.mxu0 0
          %5767 = vmatpush1.bf16.msra.mxu0 %v5714
          %5768 = vmatprep.subr.bf16.mxu0 0
          %5769 = vmatpush1.bf16.msra.mxu0 %v5715
          %5770 = vmatprep.subr.bf16.mxu0 0
          %5771 = vmatpush1.bf16.msra.mxu0 %v5716
          %5772 = vmatprep.subr.bf16.mxu0 0
          %5773 = vmatpush1.bf16.msra.mxu0 %v5717
          %5774 = vmatprep.subr.bf16.mxu0 0
          %5775 = vmatpush1.bf16.msra.mxu0 %v5718
          %5776 = vmatprep.subr.bf16.mxu0 0
          %5777 = vmatpush1.bf16.msra.mxu0 %v5719
          %5778 = vmatprep.subr.bf16.mxu0 0
          %5779 = vmatpush1.bf16.msra.mxu0 %v5720
          %5780 = vmatprep.subr.bf16.mxu0 0
          %5781 = vmatpush1.bf16.msra.mxu0 %v5721
          %5782 = vmatprep.subr.bf16.mxu0 0
          %5783 = vmatpush1.bf16.msra.mxu0 %v5722
          %5784 = vmatprep.subr.bf16.mxu0 0
          %5785 = vmatpush1.bf16.msra.mxu0 %v5723
          %5786 = vmatprep.subr.bf16.mxu0 0
          %5787 = vmatpush1.bf16.msra.mxu0 %v5724
          %5788 = vmatprep.subr.bf16.mxu0 0
          %5789 = vmatpush1.bf16.msra.mxu0 %v5725
          %5790 = vmatprep.mubr.bf16.mxu0 %v5564
          %5791 = vmatmul.mubr.bf16.gmra.mrb[0].mxu0 %v5563
          %v5792 = vpop.f32.mrb[0].mxu0
          %v5793 = vadd.f32 0.0, %v5792
          %v5794 = vpop.f32.mrb[0].mxu0
          %v5795 = vpop.f32.mrb[0].mxu0
          %v5796 = vadd.f32 0.0, %v5795
          %v5797 = vpop.f32.mrb[0].mxu0
          %5798 = vdwg.mxu0
          %5799 = vmatprep.subr.bf16.mxu0 0
          %5800 = vmatpush1.bf16.msra.mxu0 %v5726
          %5801 = vmatprep.subr.bf16.mxu0 0
          %5802 = vmatpush1.bf16.msra.mxu0 %v5727
          %5803 = vmatprep.subr.bf16.mxu0 0
          %5804 = vmatpush1.bf16.msra.mxu0 %v5728
          %5805 = vmatprep.subr.bf16.mxu0 0
          %5806 = vmatpush1.bf16.msra.mxu0 %v5729
          %5807 = vmatprep.subr.bf16.mxu0 0
          %5808 = vmatpush1.bf16.msra.mxu0 %v5730
          %5809 = vmatprep.subr.bf16.mxu0 0
          %5810 = vmatpush1.bf16.msra.mxu0 %v5731
          %5811 = vmatprep.subr.bf16.mxu0 0
          %5812 = vmatpush1.bf16.msra.mxu0 %v5732
          %5813 = vmatprep.subr.bf16.mxu0 0
          %5814 = vmatpush1.bf16.msra.mxu0 %v5733
          %5815 = vmatprep.subr.bf16.mxu0 0
          %5816 = vmatpush1.bf16.msra.mxu0 0
          %5817 = vmatprep.subr.bf16.mxu0 0
          %5818 = vmatpush1.bf16.msra.mxu0 0
          %5819 = vmatprep.subr.bf16.mxu0 0
          %5820 = vmatpush1.bf16.msra.mxu0 0
          %5821 = vmatprep.subr.bf16.mxu0 0
          %5822 = vmatpush1.bf16.msra.mxu0 0
          %5823 = vmatprep.subr.bf16.mxu0 0
          %5824 = vmatpush1.bf16.msra.mxu0 0
          %5825 = vmatprep.subr.bf16.mxu0 0
          %5826 = vmatpush1.bf16.msra.mxu0 0
          %5827 = vmatprep.subr.bf16.mxu0 0
          %5828 = vmatpush1.bf16.msra.mxu0 0
          %5829 = vmatprep.subr.bf16.mxu0 0
          %5830 = vmatpush1.bf16.msra.mxu0 0
          %5831 = vmatprep.mubr.bf16.mxu0 0
          %5832 = vmatmul.mubr.bf16.gmra.mrb[0].mxu0 %v5565
          %v5833 = vpop.f32.mrb[0].mxu0
          %v5834 = vadd.f32 %v5793, %v5833
          %v5835 = vpop.f32.mrb[0].mxu0
          %v5836 = vpop.f32.mrb[0].mxu0
          %v5837 = vadd.f32 %v5796, %v5836
          %v5838 = vpop.f32.mrb[0].mxu0
          %5839 = vdwg.mxu0
          %5840 = vst [vmem:[%s11] sm:$0xff] %v5834
          %5841 = vst [vmem:[%s11 + $0x8] sm:$0xff] %v5837
        $region104: #{model_forward.1} parent=63 // pred_fallthru
          _
        // Predicated region
        $region105: #{model_forward.1} parent=63 // pred_check
          %p5842 = pneg %p290
        $region106: #{model_forward.1} parent=63 // pred_check_branch
          %5844 = sbr.rel (%p5842) target = $region108
        $region107: #{model_forward.1} parent=63 // pred_region
          _
        $region108: #{model_forward.1} parent=63 // pred_fallthru
          _
        // Predicated region
        $region109: #{model_forward.1} parent=63 // pred_check
          %p5845 = pneg %p290
        $region110: #{model_forward.1} parent=63 // pred_check_branch
          %5847 = sbr.rel (%p5845) target = $region112
        $region111: #{model_forward.1} parent=63 // pred_region
          _
        $region112: #{model_forward.1} parent=63 // pred_fallthru
          _
      $region64: #{model_forward.1} parent=5 // pred_fallthru
        _
      %p5848 = scmp.le.s32.totalorder 2, %s26
      // Predicated region
      $region113: #{model_forward.1} parent=5 // pred_check
        %p5849 = pneg %p5848
      $region114: #{model_forward.1} parent=5 // pred_check_branch
        %5851 = sbr.rel (%p5849) target = $region116
      $region115: #{model_forward.1} parent=5 // pred_region
        %s5852 = ssub.s32 %s26, 2
      $region116: #{model_forward.1} parent=5 // pred_fallthru
        _
    $region6: #{model_forward.1} parent=1 // loop_footer
      %s30 = sadd.s32 1, %s26
    $region7: #{model_forward.1} parent=1 // loop_footer_branch
      %25 = sbr.rel target = $region3
    $region8: #{model_forward.1} parent=1 // loop_exit
      _
    %5853 = vsyncpa [#allocation4], 1
    %s5854 = scalar_lea.sflag [#allocation4], 1
    %5855 = vsyncpa %s5854, 1
    %5856 = vsyncpa [#allocation8], 1
    %5857 = vsyncpa [#allocation11], 1
    %s5858 = scalar_lea.sflag [#allocation11], 1
    %5859 = vsyncpa %s5858, 1
    %5860 = vsyncpa [#allocation14], 1
    %s5861 = scalar_lea.sflag [#allocation14], 1
    %5862 = vsyncpa %s5861, 1
    %5863 = vsyncpa [#allocation5], 1
    %s5864 = scalar_lea.sflag [#allocation5], 1
    %5865 = vsyncpa %s5864, 1

</llo_original>
